<compile_context>
chip_gen: v5e
topology: v5e:2x2
jax: 0.10.0
libtpu: 0.0.40
codegen_flags: <defaults>
</compile_context>

<pallas_src>
import functools

import jax
import jax.numpy as jnp
from jax.experimental import pallas as pl
from jax.experimental.pallas import tpu as pltpu

# ---------------------------------------------------------------------------
# config (scaled-down ViT-B/16 structure)
# ---------------------------------------------------------------------------
CFG = dict(
    batch=2,
    in_channels=3,
    image=32,
    patch=16,
    hidden=128,
    heads=4,
    layers=2,
    mlp=256,
    num_classes=10,
    ln_eps=1e-6,            # torchvision ViT uses LayerNorm(eps=1e-6)
)
CFG["n_patches"] = (CFG["image"] // CFG["patch"]) ** 2
CFG["seq"] = CFG["n_patches"] + 1                      # +1 class token
CFG["seq_pad"] = ((CFG["seq"] + 7) // 8) * 8           # sublane-aligned tokens
CFG["nc_pad"] = 128                                    # lane-dense head output


# ---------------------------------------------------------------------------
# in-kernel math helpers
# ---------------------------------------------------------------------------
def _erf(x):
    # Abramowitz & Stegun 7.1.26 polynomial, |err| < 1.5e-7.
    a1, a2, a3, a4, a5 = 0.254829592, -0.284496736, 1.421413741, -1.453152027, 1.061405429
    p = 0.3275911
    sgn = jnp.where(x >= 0.0, 1.0, -1.0)
    ax = jnp.abs(x)
    t = 1.0 / (1.0 + p * ax)
    poly = ((((a5 * t + a4) * t + a3) * t + a2) * t + a1) * t
    return sgn * (1.0 - poly * jnp.exp(-ax * ax))


def _gelu_exact(x):
    # nn.GELU() default = exact erf GELU
    return 0.5 * x * (1.0 + _erf(x * 0.7071067811865476))


def _layernorm(x, w, b, eps):
    # x: (rows, D); w, b: (1, D)
    mu = jnp.mean(x, axis=-1, keepdims=True)
    d = x - mu
    var = jnp.mean(d * d, axis=-1, keepdims=True)
    return d * jax.lax.rsqrt(var + eps) * w + b


# ---------------------------------------------------------------------------
# kernel 1: patch embedding + class token + positional embedding
# (at real batch sizes this would be tiled over >=512-row blocks; at the toy
#  size a single block is fine)
# ---------------------------------------------------------------------------
def _embed_kernel(patches_ref, cw_ref, cb_ref, clsrow_ref, postok_ref, o_ref,
                  *, B, n, S_pad, D):
    # conv(kernel=stride=patch) == one matmul over flattened patches
    tok = (jnp.dot(patches_ref[...], cw_ref[...], preferred_element_type=jnp.float32)
           + cb_ref[...])                                              # (B*n, D)
    n_pad = S_pad - 1 - n
    zeros_pad = jnp.zeros((max(n_pad, 1), D), jnp.float32)
    for b in range(B):                                  # static unroll, B tiny
        r0 = b * S_pad
        o_ref[pl.ds(r0, 1), :] = clsrow_ref[...]                       # cls + pos[0]
        o_ref[pl.ds(r0 + 1, n), :] = tok[b * n:(b + 1) * n, :] + postok_ref[...]
        if n_pad:
            o_ref[pl.ds(r0 + 1 + n, n_pad), :] = zeros_pad[:n_pad]     # zero padding tokens


# ---------------------------------------------------------------------------
# kernel 2: full encoder stack + final LN + classification head
#   grid = (num_layers,); per-layer weights stacked along the grid axis,
#   activations resident in a VMEM scratch across layers.
# ---------------------------------------------------------------------------
def _encoder_kernel(x0_ref, qkvw_ref, qvb_ref, wo_ref, fc1w_ref, fc2w_ref,
                    vec_ref, mask_ref, finvec_ref, headw_ref,
                    logits_ref, state_ref,
                    *, B, S_pad, heads, dh, eps, NCp):
    layer = pl.program_id(0)
    D = heads * dh

    @pl.when(layer == 0)
    def _():
        state_ref[...] = x0_ref[...]

    x = state_ref[...]                       # (B*S_pad, D) resident activations
    kmask = mask_ref[...]                    # (B*S_pad, B*S_pad) additive mask (constant input)

    vec = vec_ref[0]                         # (8, mlp) packed per-layer vectors
    ln1_w, ln1_b = vec[0:1, :D], vec[1:2, :D]
    ln2_w, ln2_b = vec[2:3, :D], vec[3:4, :D]
    out_b, fc2_b = vec[4:5, :D], vec[5:6, :D]
    fc1_b = vec[6:7, :]

    # ---- self-attention block: x = x + sum_h (softmax(q_h k_h^T + mask) v_h) Wo_h + out_b ----
    h = _layernorm(x, ln1_w, ln1_b, eps)
    attn = None
    for hh in range(heads):                  # per-head weights: leading-dim ref index only
        q = (jnp.dot(h, qkvw_ref[0, hh], preferred_element_type=jnp.float32)
             + qvb_ref[0, hh])                                   # scale folded into wq / bq
        k = jnp.dot(h, qkvw_ref[0, heads + hh], preferred_element_type=jnp.float32)
        v = (jnp.dot(h, qkvw_ref[0, 2 * heads + hh], preferred_element_type=jnp.float32)
             + qvb_ref[0, heads + hh])
        s = jax.lax.dot_general(q, k, (((1,), (1,)), ((), ())),
                                preferred_element_type=jnp.float32) + kmask
        m = jnp.max(s, axis=-1, keepdims=True)
        p = jnp.exp(s - m)
        p = p * pl.reciprocal(jnp.sum(p, axis=-1, keepdims=True), approx=True)  # EUP path
        o = jnp.dot(p, v, preferred_element_type=jnp.float32)                   # (B*S_pad, dh)
        c = jnp.dot(o, wo_ref[0, hh], preferred_element_type=jnp.float32)       # (B*S_pad, D)
        attn = c if attn is None else attn + c
    x = attn + out_b + x

    # ---- MLP block: x = x + W2 * GELU(W1 * LN2(x)) ----
    h = _layernorm(x, ln2_w, ln2_b, eps)
    h = _gelu_exact(jnp.dot(h, fc1w_ref[0], preferred_element_type=jnp.float32) + fc1_b)
    x = jnp.dot(h, fc2w_ref[0], preferred_element_type=jnp.float32) + fc2_b + x

    state_ref[...] = x

    # ---- final LayerNorm + head, on class-token rows only ----
    @pl.when(layer == pl.num_programs(0) - 1)
    def _():
        fin = finvec_ref[...]
        lnf_w, lnf_b, head_b = fin[0:1, :D], fin[1:2, :D], fin[2:3, :NCp]
        for b in range(B):
            crow = _layernorm(x[b * S_pad:b * S_pad + 1, :], lnf_w, lnf_b, eps)
            logits_ref[pl.ds(b, 1), :] = (
                jnp.dot(crow, headw_ref[...], preferred_element_type=jnp.float32) + head_b)


# ---------------------------------------------------------------------------
# forward pass
# ---------------------------------------------------------------------------
def vit_forward(params, x):
    B, C, H, W = x.shape
    p = CFG["patch"]
    D = CFG["hidden"]
    heads = CFG["heads"]
    dh = D // heads
    Hp, Wp = H // p, W // p
    n = Hp * Wp
    S_pad = CFG["seq_pad"]
    L = CFG["layers"]
    mlp = CFG["mlp"]
    NC, NCp = CFG["num_classes"], CFG["nc_pad"]
    eps = CFG["ln_eps"]
    Cpp = C * p * p
    R = B * S_pad

    # ---- patchify (pure layout glue; conv with kernel=stride=patch == matmul) ----
    patches = (x.reshape(B, C, Hp, p, Wp, p)
                 .transpose(0, 2, 4, 1, 3, 5)
                 .reshape(B * n, Cpp))

    # ---- kernel 1: patch embed + class token + pos embedding ----
    embed = functools.partial(_embed_kernel, B=B, n=n, S_pad=S_pad, D=D)
    x0 = pl.pallas_call(
        embed,
        out_shape=jax.ShapeDtypeStruct((R, D), jnp.float32),
        grid=(1,),
        in_specs=[pl.BlockSpec((B * n, Cpp), lambda i: (0, 0)),
                  pl.BlockSpec((Cpp, D), lambda i: (0, 0)),
                  pl.BlockSpec((1, D), lambda i: (0, 0)),
                  pl.BlockSpec((1, D), lambda i: (0, 0)),
                  pl.BlockSpec((n, D), lambda i: (0, 0))],
        out_specs=pl.BlockSpec((R, D), lambda i: (0, 0)),
        compiler_params=pltpu.CompilerParams(dimension_semantics=("arbitrary",)),
    )(patches, params["conv_w"], params["conv_b"],
      params["cls_row"], params["pos_tok"])

    # ---- kernel 2: whole encoder stack + final LN + head ----
    enc = functools.partial(_encoder_kernel, B=B, S_pad=S_pad, heads=heads,
                            dh=dh, eps=eps, NCp=NCp)
    logits_pad = pl.pallas_call(
        enc,
        out_shape=jax.ShapeDtypeStruct((B, NCp), jnp.float32),
        grid=(L,),
        in_specs=[
            pl.BlockSpec((R, D), lambda l: (0, 0)),                        # x0 (resident)
            pl.BlockSpec((1, 3 * heads, D, dh), lambda l: (l, 0, 0, 0)),   # per-head wq|wk|wv
            pl.BlockSpec((1, 2 * heads, 1, dh), lambda l: (l, 0, 0, 0)),   # per-head bq|bv
            pl.BlockSpec((1, heads, dh, D), lambda l: (l, 0, 0, 0)),       # per-head out-proj
            pl.BlockSpec((1, D, mlp), lambda l: (l, 0, 0)),                # fc1_w
            pl.BlockSpec((1, mlp, D), lambda l: (l, 0, 0)),                # fc2_w
            pl.BlockSpec((1, 8, mlp), lambda l: (l, 0, 0)),                # packed small vectors
            pl.BlockSpec((R, R), lambda l: (0, 0)),                        # attention mask (const)
            pl.BlockSpec((8, max(D, NCp)), lambda l: (0, 0)),              # final ln w/b + head_b
            pl.BlockSpec((D, NCp), lambda l: (0, 0)),                      # head_w (lane-padded)
        ],
        out_specs=pl.BlockSpec((B, NCp), lambda l: (0, 0)),
        scratch_shapes=[pltpu.VMEM((R, D), jnp.float32)],
        compiler_params=pltpu.CompilerParams(
            dimension_semantics=("arbitrary",),
            vmem_limit_bytes=32 * 1024 * 1024),
    )(x0, params["qkv_w"], params["qv_b"], params["wo"],
      params["fc1_w"], params["fc2_w"], params["vecs"], params["attn_mask"],
      params["fin_vec"], params["head_w"])

    return logits_pad[:, :NC]                            # strip head padding


# ---------------------------------------------------------------------------
# parameters: PyTorch-layout init + one-time conversion to kernel layout
# ---------------------------------------------------------------------------
def init_params(key):
    """Parameters in PyTorch layout (weights are (out, in), like the nn.Module)."""
    C, p, D = CFG["in_channels"], CFG["patch"], CFG["hidden"]
    mlp, ncls, L, S = CFG["mlp"], CFG["num_classes"], CFG["layers"], CFG["seq"]
    keys = iter(jax.random.split(key, 64))

    def nrm(shape):
        return (0.02 * jax.random.normal(next(keys), shape)).astype(jnp.float32)

    zeros = lambda shape: jnp.zeros(shape, jnp.float32)
    ones = lambda shape: jnp.ones(shape, jnp.float32)

    params = {
        "conv_w": nrm((D, C, p, p)),
        "conv_b": zeros((D,)),
        "class_token": nrm((1, 1, D)),
        "pos_embedding": nrm((1, S, D)),
        "ln_w": ones((D,)),
        "ln_b": zeros((D,)),
        "head_w": nrm((ncls, D)),       # custom nn.Linear head (out, in)
        "head_b": zeros((ncls,)),
        "layers": [],
    }
    for _ in range(L):
        params["layers"].append({
            "ln1_w": ones((D,)), "ln1_b": zeros((D,)),
            "in_w": nrm((3 * D, D)), "in_b": zeros((3 * D,)),
            "out_w": nrm((D, D)), "out_b": zeros((D,)),
            "ln2_w": ones((D,)), "ln2_b": zeros((D,)),
            "fc1_w": nrm((mlp, D)), "fc1_b": zeros((mlp,)),
            "fc2_w": nrm((D, mlp)), "fc2_b": zeros((D,)),
        })
    return params


def prepare_params(raw):
    """One-time layout conversion (outside jit): transpose weights to (K, N),
    split attention weights per head, fold the 1/sqrt(dh) scale into Q, pack the
    small per-layer vectors, and precompute the additive attention mask."""
    C, p, D, mlp = CFG["in_channels"], CFG["patch"], CFG["hidden"], CFG["mlp"]
    heads = CFG["heads"]
    dh = D // heads
    Cpp = C * p * p
    B = CFG["batch"]
    S, S_pad = CFG["seq"], CFG["seq_pad"]
    n = CFG["n_patches"]
    NC, NCp = CFG["num_classes"], CFG["nc_pad"]
    R = B * S_pad
    scale = 1.0 / (dh ** 0.5)

    pos = raw["pos_embedding"].reshape(S, D)

    def heads_cols(w):       # (D, D) -> (heads, D, dh): column blocks per head
        return jnp.transpose(w.reshape(D, heads, dh), (1, 0, 2))

    qkv_w, qv_b, wo, fc1_w, fc2_w, vecs = [], [], [], [], [], []
    for lyr in raw["layers"]:
        in_wT = lyr["in_w"].T                      # (D, 3D): columns = q|k|v outputs
        wq = in_wT[:, :D] * scale                  # 1/sqrt(dh) folded into Q weights
        wk = in_wT[:, D:2 * D]
        wv = in_wT[:, 2 * D:]
        bq = (lyr["in_b"][:D] * scale).reshape(heads, 1, dh)
        bv = lyr["in_b"][2 * D:].reshape(heads, 1, dh)
        # K bias is dropped: it only adds a per-query constant to the attention
        # logits, which softmax is invariant to.
        qkv_w.append(jnp.concatenate([heads_cols(wq), heads_cols(wk), heads_cols(wv)], 0))
        qv_b.append(jnp.concatenate([bq, bv], 0))
        wo.append(lyr["out_w"].T.reshape(heads, dh, D))   # per-head row blocks of out-proj
        fc1_w.append(lyr["fc1_w"].T)                      # (D, mlp)
        fc2_w.append(lyr["fc2_w"].T)                      # (mlp, D)
        v = jnp.zeros((8, mlp), jnp.float32)
        v = v.at[0, :D].set(lyr["ln1_w"]).at[1, :D].set(lyr["ln1_b"])
        v = v.at[2, :D].set(lyr["ln2_w"]).at[3, :D].set(lyr["ln2_b"])
        v = v.at[4, :D].set(lyr["out_b"]).at[5, :D].set(lyr["fc2_b"])
        v = v.at[6, :].set(lyr["fc1_b"])
        vecs.append(v)

    # additive attention mask: same-image block diagonal + key-padding (static)
    row = jnp.arange(R)[:, None]
    col = jnp.arange(R)[None, :]
    valid = (row // S_pad == col // S_pad) & ((col % S_pad) < S)
    attn_mask = jnp.where(valid, 0.0, -1e30).astype(jnp.float32)

    fin = jnp.zeros((8, max(D, NCp)), jnp.float32)
    fin = fin.at[0, :D].set(raw["ln_w"]).at[1, :D].set(raw["ln_b"])
    fin = fin.at[2, :NC].set(raw["head_b"])

    head_w = jnp.zeros((D, NCp), jnp.float32).at[:, :NC].set(raw["head_w"].T)

    return {
        "conv_w": raw["conv_w"].reshape(D, Cpp).T,                        # (Cpp, D)
        "conv_b": raw["conv_b"].reshape(1, D),
        "cls_row": raw["class_token"].reshape(1, D) + pos[0:1, :],        # cls + pos[0]
        "pos_tok": pos[1:1 + n, :],                                       # (n, D)
        "qkv_w": jnp.stack(qkv_w, 0),     # (L, 3*heads, D, dh), scale folded into Q
        "qv_b": jnp.stack(qv_b, 0),       # (L, 2*heads, 1, dh)
        "wo": jnp.stack(wo, 0),           # (L, heads, dh, D)
        "fc1_w": jnp.stack(fc1_w, 0),     # (L, D, mlp)
        "fc2_w": jnp.stack(fc2_w, 0),     # (L, mlp, D)
        "vecs": jnp.stack(vecs, 0),       # (L, 8, mlp) packed small per-layer vectors
        "attn_mask": attn_mask,           # (B*S_pad, B*S_pad)
        "fin_vec": fin,                   # (8, max(D, NCp)): ln_w, ln_b, head_b
        "head_w": head_w,                 # (D, 128) lane-padded head
    }


# ---------------------------------------------------------------------------
if __name__ == "__main__":
    key = jax.random.PRNGKey(0)
    pkey, xkey = jax.random.split(key)
    params = prepare_params(init_params(pkey))
    x = jax.random.normal(
        xkey, (CFG["batch"], CFG["in_channels"], CFG["image"], CFG["image"]),
        dtype=jnp.float32)

    fwd = jax.jit(vit_forward)
    logits = fwd(params, x)
    jax.block_until_ready(logits)
    assert logits.shape == (CFG["batch"], CFG["num_classes"])
    assert logits.dtype == jnp.float32
    print("KERNEL_OK")
</pallas_src>

<mosaic_0001>
module attributes {stable_mosaic.version = 11 : i64} {
  func.func @_embed_kernel(%arg0: i32, %arg1: memref<8x768xf32, #tpu.memory_space<vmem>>, %arg2: memref<768x128xf32, #tpu.memory_space<vmem>>, %arg3: memref<1x128xf32, #tpu.memory_space<vmem>>, %arg4: memref<1x128xf32, #tpu.memory_space<vmem>>, %arg5: memref<4x128xf32, #tpu.memory_space<vmem>>, %arg6: memref<16x128xf32, #tpu.memory_space<vmem>>) attributes {dimension_semantics = [#tpu.dimension_semantics<arbitrary>], iteration_bounds = array<i64: 1>, scalar_prefetch = 0 : i64, scratch_operands = 0 : i64, tpu.core_type = #tpu.core_type<tc>, window_params = [{pipeline_mode = #tpu.pipeline_mode<synchronous>, transform_indices = @transform_0, window_bounds = array<i64: 8, 768>}, {pipeline_mode = #tpu.pipeline_mode<synchronous>, transform_indices = @transform_1, window_bounds = array<i64: 768, 128>}, {pipeline_mode = #tpu.pipeline_mode<synchronous>, transform_indices = @transform_2, window_bounds = array<i64: 1, 128>}, {pipeline_mode = #tpu.pipeline_mode<synchronous>, transform_indices = @transform_3, window_bounds = array<i64: 1, 128>}, {pipeline_mode = #tpu.pipeline_mode<synchronous>, transform_indices = @transform_4, window_bounds = array<i64: 4, 128>}, {pipeline_mode = #tpu.pipeline_mode<synchronous>, transform_indices = @transform_5, window_bounds = array<i64: 16, 128>}]} {
    %c0 = arith.constant 0 : index
    %c0_0 = arith.constant 0 : index
    %0 = vector.load %arg1[%c0, %c0_0] : memref<8x768xf32, #tpu.memory_space<vmem>>, vector<8x768xf32>
    %c0_1 = arith.constant 0 : index
    %c0_2 = arith.constant 0 : index
    %1 = vector.load %arg2[%c0_1, %c0_2] : memref<768x128xf32, #tpu.memory_space<vmem>>, vector<768x128xf32>
    %cst = arith.constant dense<0.000000e+00> : vector<8x128xf32>
    %2 = tpu.matmul %0, %1, %cst {dimension_numbers = #tpu.dot_dimension_numbers<[1], [0], [0], [1], [0, 0, 1, 1], [], []>} : vector<8x768xf32>, vector<768x128xf32>, vector<8x128xf32> -> vector<8x128xf32>
    %c0_3 = arith.constant 0 : index
    %c0_4 = arith.constant 0 : index
    %3 = vector.load %arg3[%c0_3, %c0_4] : memref<1x128xf32, #tpu.memory_space<vmem>>, vector<1x128xf32>
    %4 = vector.broadcast %3 : vector<1x128xf32> to vector<8x128xf32>
    %5 = arith.addf %2, %4 : vector<8x128xf32>
    %cst_5 = arith.constant 0.000000e+00 : f32
    %6 = vector.broadcast %cst_5 : f32 to vector<3x128xf32>
    %c0_6 = arith.constant 0 : index
    %c0_7 = arith.constant 0 : index
    %7 = vector.load %arg4[%c0_6, %c0_7] : memref<1x128xf32, #tpu.memory_space<vmem>>, vector<1x128xf32>
    %c0_8 = arith.constant 0 : index
    %c0_9 = arith.constant 0 : index
    %8 = vector.load %arg6[%c0_8, %c0_9] : memref<16x128xf32, #tpu.memory_space<vmem>>, vector<1x128xf32>
    tpu.vector_store %arg6[%c0_8, %c0_9], %7 {strides = array<i32>} : memref<16x128xf32, #tpu.memory_space<vmem>>, vector<1x128xf32>,
    %9 = vector.extract_strided_slice %5 {offsets = [0, 0], sizes = [4, 128], strides = [1, 1]} : vector<8x128xf32> to vector<4x128xf32>
    %c0_10 = arith.constant 0 : index
    %c0_11 = arith.constant 0 : index
    %10 = vector.load %arg5[%c0_10, %c0_11] : memref<4x128xf32, #tpu.memory_space<vmem>>, vector<4x128xf32>
    %11 = arith.addf %9, %10 : vector<4x128xf32>
    %c1 = arith.constant 1 : index
    %c0_12 = arith.constant 0 : index
    %12 = vector.load %arg6[%c1, %c0_12] : memref<16x128xf32, #tpu.memory_space<vmem>>, vector<4x128xf32>
    tpu.vector_store %arg6[%c1, %c0_12], %11 {strides = array<i32>} : memref<16x128xf32, #tpu.memory_space<vmem>>, vector<4x128xf32>,
    %c5 = arith.constant 5 : index
    %c0_13 = arith.constant 0 : index
    %13 = vector.load %arg6[%c5, %c0_13] : memref<16x128xf32, #tpu.memory_space<vmem>>, vector<3x128xf32>
    tpu.vector_store %arg6[%c5, %c0_13], %6 {strides = array<i32>} : memref<16x128xf32, #tpu.memory_space<vmem>>, vector<3x128xf32>,
    %c0_14 = arith.constant 0 : index
    %c0_15 = arith.constant 0 : index
    %14 = vector.load %arg4[%c0_14, %c0_15] : memref<1x128xf32, #tpu.memory_space<vmem>>, vector<1x128xf32>
    %c8 = arith.constant 8 : index
    %c0_16 = arith.constant 0 : index
    %15 = vector.load %arg6[%c8, %c0_16] : memref<16x128xf32, #tpu.memory_space<vmem>>, vector<1x128xf32>
    tpu.vector_store %arg6[%c8, %c0_16], %14 {strides = array<i32>} : memref<16x128xf32, #tpu.memory_space<vmem>>, vector<1x128xf32>,
    %16 = vector.extract_strided_slice %5 {offsets = [4, 0], sizes = [4, 128], strides = [1, 1]} : vector<8x128xf32> to vector<4x128xf32>
    %c0_17 = arith.constant 0 : index
    %c0_18 = arith.constant 0 : index
    %17 = vector.load %arg5[%c0_17, %c0_18] : memref<4x128xf32, #tpu.memory_space<vmem>>, vector<4x128xf32>
    %18 = arith.addf %16, %17 : vector<4x128xf32>
    %c9 = arith.constant 9 : index
    %c0_19 = arith.constant 0 : index
    %19 = vector.load %arg6[%c9, %c0_19] : memref<16x128xf32, #tpu.memory_space<vmem>>, vector<4x128xf32>
    tpu.vector_store %arg6[%c9, %c0_19], %18 {strides = array<i32>} : memref<16x128xf32, #tpu.memory_space<vmem>>, vector<4x128xf32>,
    %c13 = arith.constant 13 : index
    %c0_20 = arith.constant 0 : index
    %20 = vector.load %arg6[%c13, %c0_20] : memref<16x128xf32, #tpu.memory_space<vmem>>, vector<3x128xf32>
    tpu.vector_store %arg6[%c13, %c0_20], %6 {strides = array<i32>} : memref<16x128xf32, #tpu.memory_space<vmem>>, vector<3x128xf32>,
    return
  }
  func.func @transform_0(%arg0: i32) -> (i32, i32) {
    %c0_i32 = arith.constant 0 : i32
    %c0_i32_0 = arith.constant 0 : i32
    %c0_i32_1 = arith.constant 0 : i32
    return %c0_i32, %c0_i32_0 : i32, i32
  }
  func.func @transform_1(%arg0: i32) -> (i32, i32) {
    %c0_i32 = arith.constant 0 : i32
    %c0_i32_0 = arith.constant 0 : i32
    %c0_i32_1 = arith.constant 0 : i32
    return %c0_i32, %c0_i32_0 : i32, i32
  }
  func.func @transform_2(%arg0: i32) -> (i32, i32) {
    %c0_i32 = arith.constant 0 : i32
    %c0_i32_0 = arith.constant 0 : i32
    %c0_i32_1 = arith.constant 0 : i32
    return %c0_i32, %c0_i32_0 : i32, i32
  }
  func.func @transform_3(%arg0: i32) -> (i32, i32) {
    %c0_i32 = arith.constant 0 : i32
    %c0_i32_0 = arith.constant 0 : i32
    %c0_i32_1 = arith.constant 0 : i32
    return %c0_i32, %c0_i32_0 : i32, i32
  }
  func.func @transform_4(%arg0: i32) -> (i32, i32) {
    %c0_i32 = arith.constant 0 : i32
    %c0_i32_0 = arith.constant 0 : i32
    %c0_i32_1 = arith.constant 0 : i32
    return %c0_i32, %c0_i32_0 : i32, i32
  }
  func.func @transform_5(%arg0: i32) -> (i32, i32) {
    %c0_i32 = arith.constant 0 : i32
    %c0_i32_0 = arith.constant 0 : i32
    %c0_i32_1 = arith.constant 0 : i32
    return %c0_i32, %c0_i32_0 : i32, i32
  }
}

module attributes {stable_mosaic.version = 11 : i64} {
  func.func @_encoder_kernel(%arg0: i32, %arg1: memref<16x128xf32, #tpu.memory_space<vmem>>, %arg2: memref<1x12x128x32xf32, #tpu.memory_space<vmem>>, %arg3: memref<1x8x1x32xf32, #tpu.memory_space<vmem>>, %arg4: memref<1x4x32x128xf32, #tpu.memory_space<vmem>>, %arg5: memref<1x128x256xf32, #tpu.memory_space<vmem>>, %arg6: memref<1x256x128xf32, #tpu.memory_space<vmem>>, %arg7: memref<1x8x256xf32, #tpu.memory_space<vmem>>, %arg8: memref<16x16xf32, #tpu.memory_space<vmem>>, %arg9: memref<8x128xf32, #tpu.memory_space<vmem>>, %arg10: memref<128x128xf32, #tpu.memory_space<vmem>>, %arg11: memref<2x128xf32, #tpu.memory_space<vmem>>, %arg12: memref<16x128xf32, #tpu.memory_space<vmem>>) attributes {dimension_semantics = [#tpu.dimension_semantics<arbitrary>], iteration_bounds = array<i64: 2>, scalar_prefetch = 0 : i64, scratch_operands = 1 : i64, tpu.core_type = #tpu.core_type<tc>, window_params = [{pipeline_mode = #tpu.pipeline_mode<synchronous>, transform_indices = @transform_0, window_bounds = array<i64: 16, 128>}, {transform_indices = @transform_1, window_bounds = array<i64: 1, 12, 128, 32>}, {transform_indices = @transform_2, window_bounds = array<i64: 1, 8, 1, 32>}, {transform_indices = @transform_3, window_bounds = array<i64: 1, 4, 32, 128>}, {transform_indices = @transform_4, window_bounds = array<i64: 1, 128, 256>}, {transform_indices = @transform_5, window_bounds = array<i64: 1, 256, 128>}, {transform_indices = @transform_6, window_bounds = array<i64: 1, 8, 256>}, {pipeline_mode = #tpu.pipeline_mode<synchronous>, transform_indices = @transform_7, window_bounds = array<i64: 16, 16>}, {pipeline_mode = #tpu.pipeline_mode<synchronous>, transform_indices = @transform_8, window_bounds = array<i64: 8, 128>}, {pipeline_mode = #tpu.pipeline_mode<synchronous>, transform_indices = @transform_9, window_bounds = array<i64: 128, 128>}, {pipeline_mode = #tpu.pipeline_mode<synchronous>, transform_indices = @transform_10, window_bounds = array<i64: 2, 128>}]} {
    %c0_i32 = arith.constant 0 : i32
    %0 = arith.cmpi eq, %arg0, %c0_i32 : i32
    %1 = arith.extui %0 : i1 to i32
    %c0_i32_0 = arith.constant 0 : i32
    %2 = arith.cmpi ne, %1, %c0_i32_0 : i32
    scf.if %2 {
      %c0_160 = arith.constant 0 : index
      %c0_161 = arith.constant 0 : index
      %248 = vector.load %arg1[%c0_160, %c0_161] : memref<16x128xf32, #tpu.memory_space<vmem>>, vector<16x128xf32>
      %c0_162 = arith.constant 0 : index
      %c0_163 = arith.constant 0 : index
      %249 = vector.load %arg12[%c0_162, %c0_163] : memref<16x128xf32, #tpu.memory_space<vmem>>, vector<16x128xf32>
      tpu.vector_store %arg12[%c0_162, %c0_163], %248 {strides = array<i32>} : memref<16x128xf32, #tpu.memory_space<vmem>>, vector<16x128xf32>,
    } else {
    }
    %c0 = arith.constant 0 : index
    %c0_1 = arith.constant 0 : index
    %3 = vector.load %arg12[%c0, %c0_1] : memref<16x128xf32, #tpu.memory_space<vmem>>, vector<16x128xf32>
    %c0_2 = arith.constant 0 : index
    %c0_3 = arith.constant 0 : index
    %4 = vector.load %arg8[%c0_2, %c0_3] : memref<16x16xf32, #tpu.memory_space<vmem>>, vector<16x16xf32>
    %c0_4 = arith.constant 0 : index
    %c0_5 = arith.constant 0 : index
    %c0_6 = arith.constant 0 : index
    %5 = vector.load %arg7[%c0_4, %c0_5, %c0_6] : memref<1x8x256xf32, #tpu.memory_space<vmem>>, vector<1x8x256xf32>
    %6 = vector.shape_cast %5 : vector<1x8x256xf32> to vector<8x256xf32>
    %7 = vector.extract_strided_slice %6 {offsets = [0, 0], sizes = [1, 128], strides = [1, 1]} : vector<8x256xf32> to vector<1x128xf32>
    %8 = vector.extract_strided_slice %6 {offsets = [1, 0], sizes = [1, 128], strides = [1, 1]} : vector<8x256xf32> to vector<1x128xf32>
    %9 = vector.extract_strided_slice %6 {offsets = [2, 0], sizes = [1, 128], strides = [1, 1]} : vector<8x256xf32> to vector<1x128xf32>
    %10 = vector.extract_strided_slice %6 {offsets = [3, 0], sizes = [1, 128], strides = [1, 1]} : vector<8x256xf32> to vector<1x128xf32>
    %11 = vector.extract_strided_slice %6 {offsets = [4, 0], sizes = [1, 128], strides = [1, 1]} : vector<8x256xf32> to vector<1x128xf32>
    %12 = vector.extract_strided_slice %6 {offsets = [5, 0], sizes = [1, 128], strides = [1, 1]} : vector<8x256xf32> to vector<1x128xf32>
    %13 = vector.extract_strided_slice %6 {offsets = [6, 0], sizes = [1, 256], strides = [1, 1]} : vector<8x256xf32> to vector<1x256xf32>
    %cst = arith.constant dense<0.000000e+00> : vector<16xf32>
    %14 = vector.multi_reduction <add>, %3, %cst [1] : vector<16x128xf32> to vector<16xf32>
    %15 = vector.shape_cast %14 : vector<16xf32> to vector<16x1xf32>
    %cst_7 = arith.constant 1.280000e+02 : f32
    %16 = vector.broadcast %cst_7 : f32 to vector<16x1xf32>
    %17 = arith.divf %15, %16 : vector<16x1xf32>
    %18 = vector.broadcast %17 : vector<16x1xf32> to vector<16x128xf32>
    %19 = arith.subf %3, %18 : vector<16x128xf32>
    %20 = arith.mulf %19, %19 : vector<16x128xf32>
    %cst_8 = arith.constant dense<0.000000e+00> : vector<16xf32>
    %21 = vector.multi_reduction <add>, %20, %cst_8 [1] : vector<16x128xf32> to vector<16xf32>
    %22 = vector.shape_cast %21 : vector<16xf32> to vector<16x1xf32>
    %cst_9 = arith.constant 1.280000e+02 : f32
    %23 = vector.broadcast %cst_9 : f32 to vector<16x1xf32>
    %24 = arith.divf %22, %23 : vector<16x1xf32>
    %cst_10 = arith.constant 9.99999997E-7 : f32
    %25 = vector.broadcast %cst_10 : f32 to vector<16x1xf32>
    %26 = arith.addf %24, %25 : vector<16x1xf32>
    %27 = math.rsqrt %26 : vector<16x1xf32>
    %28 = vector.broadcast %27 : vector<16x1xf32> to vector<16x128xf32>
    %29 = arith.mulf %19, %28 : vector<16x128xf32>
    %30 = vector.broadcast %7 : vector<1x128xf32> to vector<16x128xf32>
    %31 = arith.mulf %29, %30 : vector<16x128xf32>
    %32 = vector.broadcast %8 : vector<1x128xf32> to vector<16x128xf32>
    %33 = arith.addf %31, %32 : vector<16x128xf32>
    %c0_11 = arith.constant 0 : index
    %c0_12 = arith.constant 0 : index
    %c0_13 = arith.constant 0 : index
    %c0_14 = arith.constant 0 : index
    %34 = vector.load %arg2[%c0_11, %c0_12, %c0_13, %c0_14] : memref<1x12x128x32xf32, #tpu.memory_space<vmem>>, vector<1x1x128x32xf32>
    %35 = vector.shape_cast %34 : vector<1x1x128x32xf32> to vector<128x32xf32>
    %cst_15 = arith.constant dense<0.000000e+00> : vector<16x32xf32>
    %36 = tpu.matmul %33, %35, %cst_15 {dimension_numbers = #tpu.dot_dimension_numbers<[1], [0], [0], [1], [0, 0, 1, 1], [], []>} : vector<16x128xf32>, vector<128x32xf32>, vector<16x32xf32> -> vector<16x32xf32>
    %c0_16 = arith.constant 0 : index
    %c0_17 = arith.constant 0 : index
    %c0_18 = arith.constant 0 : index
    %c0_19 = arith.constant 0 : index
    %37 = vector.load %arg3[%c0_16, %c0_17, %c0_18, %c0_19] : memref<1x8x1x32xf32, #tpu.memory_space<vmem>>, vector<1x1x1x32xf32>
    %38 = vector.shape_cast %37 : vector<1x1x1x32xf32> to vector<1x32xf32>
    %39 = vector.broadcast %38 : vector<1x32xf32> to vector<16x32xf32>
    %40 = arith.addf %36, %39 : vector<16x32xf32>
    %c0_20 = arith.constant 0 : index
    %c4 = arith.constant 4 : index
    %c0_21 = arith.constant 0 : index
    %c0_22 = arith.constant 0 : index
    %41 = vector.load %arg2[%c0_20, %c4, %c0_21, %c0_22] : memref<1x12x128x32xf32, #tpu.memory_space<vmem>>, vector<1x1x128x32xf32>
    %42 = vector.shape_cast %41 : vector<1x1x128x32xf32> to vector<128x32xf32>
    %cst_23 = arith.constant dense<0.000000e+00> : vector<16x32xf32>
    %43 = tpu.matmul %33, %42, %cst_23 {dimension_numbers = #tpu.dot_dimension_numbers<[1], [0], [0], [1], [0, 0, 1, 1], [], []>} : vector<16x128xf32>, vector<128x32xf32>, vector<16x32xf32> -> vector<16x32xf32>
    %c0_24 = arith.constant 0 : index
    %c8 = arith.constant 8 : index
    %c0_25 = arith.constant 0 : index
    %c0_26 = arith.constant 0 : index
    %44 = vector.load %arg2[%c0_24, %c8, %c0_25, %c0_26] : memref<1x12x128x32xf32, #tpu.memory_space<vmem>>, vector<1x1x128x32xf32>
    %45 = vector.shape_cast %44 : vector<1x1x128x32xf32> to vector<128x32xf32>
    %cst_27 = arith.constant dense<0.000000e+00> : vector<16x32xf32>
    %46 = tpu.matmul %33, %45, %cst_27 {dimension_numbers = #tpu.dot_dimension_numbers<[1], [0], [0], [1], [0, 0, 1, 1], [], []>} : vector<16x128xf32>, vector<128x32xf32>, vector<16x32xf32> -> vector<16x32xf32>
    %c0_28 = arith.constant 0 : index
    %c4_29 = arith.constant 4 : index
    %c0_30 = arith.constant 0 : index
    %c0_31 = arith.constant 0 : index
    %47 = vector.load %arg3[%c0_28, %c4_29, %c0_30, %c0_31] : memref<1x8x1x32xf32, #tpu.memory_space<vmem>>, vector<1x1x1x32xf32>
    %48 = vector.shape_cast %47 : vector<1x1x1x32xf32> to vector<1x32xf32>
    %49 = vector.broadcast %48 : vector<1x32xf32> to vector<16x32xf32>
    %50 = arith.addf %46, %49 : vector<16x32xf32>
    %cst_32 = arith.constant dense<0.000000e+00> : vector<16x16xf32>
    %51 = tpu.matmul %40, %43, %cst_32 {dimension_numbers = #tpu.dot_dimension_numbers<[1], [1], [0], [0], [0, 0, 1, 0], [], []>} : vector<16x32xf32>, vector<16x32xf32>, vector<16x16xf32> -> vector<16x16xf32>
    %52 = arith.addf %51, %4 : vector<16x16xf32>
    %cst_33 = arith.constant dense<0xFF800000> : vector<16xf32>
    %53 = vector.multi_reduction <maximumf>, %52, %cst_33 [1] : vector<16x16xf32> to vector<16xf32>
    %54 = vector.shape_cast %53 : vector<16xf32> to vector<16x1xf32>
    %55 = vector.broadcast %54 : vector<16x1xf32> to vector<16x16xf32>
    %56 = arith.subf %52, %55 : vector<16x16xf32>
    %57 = math.exp %56 : vector<16x16xf32>
    %cst_34 = arith.constant dense<0.000000e+00> : vector<16xf32>
    %58 = vector.multi_reduction <add>, %57, %cst_34 [1] : vector<16x16xf32> to vector<16xf32>
    %59 = vector.shape_cast %58 : vector<16xf32> to vector<16x1xf32>
    %60 = tpu.reciprocal %59 {approx = true} : vector<16x1xf32> -> vector<16x1xf32>
    %61 = vector.broadcast %60 : vector<16x1xf32> to vector<16x16xf32>
    %62 = arith.mulf %57, %61 : vector<16x16xf32>
    %cst_35 = arith.constant dense<0.000000e+00> : vector<16x32xf32>
    %63 = tpu.matmul %62, %50, %cst_35 {dimension_numbers = #tpu.dot_dimension_numbers<[1], [0], [0], [1], [0, 0, 1, 1], [], []>} : vector<16x16xf32>, vector<16x32xf32>, vector<16x32xf32> -> vector<16x32xf32>
    %c0_36 = arith.constant 0 : index
    %c0_37 = arith.constant 0 : index
    %c0_38 = arith.constant 0 : index
    %c0_39 = arith.constant 0 : index
    %64 = vector.load %arg4[%c0_36, %c0_37, %c0_38, %c0_39] : memref<1x4x32x128xf32, #tpu.memory_space<vmem>>, vector<1x1x32x128xf32>
    %65 = vector.shape_cast %64 : vector<1x1x32x128xf32> to vector<32x128xf32>
    %cst_40 = arith.constant dense<0.000000e+00> : vector<16x128xf32>
    %66 = tpu.matmul %63, %65, %cst_40 {dimension_numbers = #tpu.dot_dimension_numbers<[1], [0], [0], [1], [0, 0, 1, 1], [], []>} : vector<16x32xf32>, vector<32x128xf32>, vector<16x128xf32> -> vector<16x128xf32>
    %c0_41 = arith.constant 0 : index
    %c1 = arith.constant 1 : index
    %c0_42 = arith.constant 0 : index
    %c0_43 = arith.constant 0 : index
    %67 = vector.load %arg2[%c0_41, %c1, %c0_42, %c0_43] : memref<1x12x128x32xf32, #tpu.memory_space<vmem>>, vector<1x1x128x32xf32>
    %68 = vector.shape_cast %67 : vector<1x1x128x32xf32> to vector<128x32xf32>
    %cst_44 = arith.constant dense<0.000000e+00> : vector<16x32xf32>
    %69 = tpu.matmul %33, %68, %cst_44 {dimension_numbers = #tpu.dot_dimension_numbers<[1], [0], [0], [1], [0, 0, 1, 1], [], []>} : vector<16x128xf32>, vector<128x32xf32>, vector<16x32xf32> -> vector<16x32xf32>
    %c0_45 = arith.constant 0 : index
    %c1_46 = arith.constant 1 : index
    %c0_47 = arith.constant 0 : index
    %c0_48 = arith.constant 0 : index
    %70 = vector.load %arg3[%c0_45, %c1_46, %c0_47, %c0_48] : memref<1x8x1x32xf32, #tpu.memory_space<vmem>>, vector<1x1x1x32xf32>
    %71 = vector.shape_cast %70 : vector<1x1x1x32xf32> to vector<1x32xf32>
    %72 = vector.broadcast %71 : vector<1x32xf32> to vector<16x32xf32>
    %73 = arith.addf %69, %72 : vector<16x32xf32>
    %c0_49 = arith.constant 0 : index
    %c5 = arith.constant 5 : index
    %c0_50 = arith.constant 0 : index
    %c0_51 = arith.constant 0 : index
    %74 = vector.load %arg2[%c0_49, %c5, %c0_50, %c0_51] : memref<1x12x128x32xf32, #tpu.memory_space<vmem>>, vector<1x1x128x32xf32>
    %75 = vector.shape_cast %74 : vector<1x1x128x32xf32> to vector<128x32xf32>
    %cst_52 = arith.constant dense<0.000000e+00> : vector<16x32xf32>
    %76 = tpu.matmul %33, %75, %cst_52 {dimension_numbers = #tpu.dot_dimension_numbers<[1], [0], [0], [1], [0, 0, 1, 1], [], []>} : vector<16x128xf32>, vector<128x32xf32>, vector<16x32xf32> -> vector<16x32xf32>
    %c0_53 = arith.constant 0 : index
    %c9 = arith.constant 9 : index
    %c0_54 = arith.constant 0 : index
    %c0_55 = arith.constant 0 : index
    %77 = vector.load %arg2[%c0_53, %c9, %c0_54, %c0_55] : memref<1x12x128x32xf32, #tpu.memory_space<vmem>>, vector<1x1x128x32xf32>
    %78 = vector.shape_cast %77 : vector<1x1x128x32xf32> to vector<128x32xf32>
    %cst_56 = arith.constant dense<0.000000e+00> : vector<16x32xf32>
    %79 = tpu.matmul %33, %78, %cst_56 {dimension_numbers = #tpu.dot_dimension_numbers<[1], [0], [0], [1], [0, 0, 1, 1], [], []>} : vector<16x128xf32>, vector<128x32xf32>, vector<16x32xf32> -> vector<16x32xf32>
    %c0_57 = arith.constant 0 : index
    %c5_58 = arith.constant 5 : index
    %c0_59 = arith.constant 0 : index
    %c0_60 = arith.constant 0 : index
    %80 = vector.load %arg3[%c0_57, %c5_58, %c0_59, %c0_60] : memref<1x8x1x32xf32, #tpu.memory_space<vmem>>, vector<1x1x1x32xf32>
    %81 = vector.shape_cast %80 : vector<1x1x1x32xf32> to vector<1x32xf32>
    %82 = vector.broadcast %81 : vector<1x32xf32> to vector<16x32xf32>
    %83 = arith.addf %79, %82 : vector<16x32xf32>
    %cst_61 = arith.constant dense<0.000000e+00> : vector<16x16xf32>
    %84 = tpu.matmul %73, %76, %cst_61 {dimension_numbers = #tpu.dot_dimension_numbers<[1], [1], [0], [0], [0, 0, 1, 0], [], []>} : vector<16x32xf32>, vector<16x32xf32>, vector<16x16xf32> -> vector<16x16xf32>
    %85 = arith.addf %84, %4 : vector<16x16xf32>
    %cst_62 = arith.constant dense<0xFF800000> : vector<16xf32>
    %86 = vector.multi_reduction <maximumf>, %85, %cst_62 [1] : vector<16x16xf32> to vector<16xf32>
    %87 = vector.shape_cast %86 : vector<16xf32> to vector<16x1xf32>
    %88 = vector.broadcast %87 : vector<16x1xf32> to vector<16x16xf32>
    %89 = arith.subf %85, %88 : vector<16x16xf32>
    %90 = math.exp %89 : vector<16x16xf32>
    %cst_63 = arith.constant dense<0.000000e+00> : vector<16xf32>
    %91 = vector.multi_reduction <add>, %90, %cst_63 [1] : vector<16x16xf32> to vector<16xf32>
    %92 = vector.shape_cast %91 : vector<16xf32> to vector<16x1xf32>
    %93 = tpu.reciprocal %92 {approx = true} : vector<16x1xf32> -> vector<16x1xf32>
    %94 = vector.broadcast %93 : vector<16x1xf32> to vector<16x16xf32>
    %95 = arith.mulf %90, %94 : vector<16x16xf32>
    %cst_64 = arith.constant dense<0.000000e+00> : vector<16x32xf32>
    %96 = tpu.matmul %95, %83, %cst_64 {dimension_numbers = #tpu.dot_dimension_numbers<[1], [0], [0], [1], [0, 0, 1, 1], [], []>} : vector<16x16xf32>, vector<16x32xf32>, vector<16x32xf32> -> vector<16x32xf32>
    %c0_65 = arith.constant 0 : index
    %c1_66 = arith.constant 1 : index
    %c0_67 = arith.constant 0 : index
    %c0_68 = arith.constant 0 : index
    %97 = vector.load %arg4[%c0_65, %c1_66, %c0_67, %c0_68] : memref<1x4x32x128xf32, #tpu.memory_space<vmem>>, vector<1x1x32x128xf32>
    %98 = vector.shape_cast %97 : vector<1x1x32x128xf32> to vector<32x128xf32>
    %cst_69 = arith.constant dense<0.000000e+00> : vector<16x128xf32>
    %99 = tpu.matmul %96, %98, %cst_69 {dimension_numbers = #tpu.dot_dimension_numbers<[1], [0], [0], [1], [0, 0, 1, 1], [], []>} : vector<16x32xf32>, vector<32x128xf32>, vector<16x128xf32> -> vector<16x128xf32>
    %100 = arith.addf %66, %99 : vector<16x128xf32>
    %c0_70 = arith.constant 0 : index
    %c2 = arith.constant 2 : index
    %c0_71 = arith.constant 0 : index
    %c0_72 = arith.constant 0 : index
    %101 = vector.load %arg2[%c0_70, %c2, %c0_71, %c0_72] : memref<1x12x128x32xf32, #tpu.memory_space<vmem>>, vector<1x1x128x32xf32>
    %102 = vector.shape_cast %101 : vector<1x1x128x32xf32> to vector<128x32xf32>
    %cst_73 = arith.constant dense<0.000000e+00> : vector<16x32xf32>
    %103 = tpu.matmul %33, %102, %cst_73 {dimension_numbers = #tpu.dot_dimension_numbers<[1], [0], [0], [1], [0, 0, 1, 1], [], []>} : vector<16x128xf32>, vector<128x32xf32>, vector<16x32xf32> -> vector<16x32xf32>
    %c0_74 = arith.constant 0 : index
    %c2_75 = arith.constant 2 : index
    %c0_76 = arith.constant 0 : index
    %c0_77 = arith.constant 0 : index
    %104 = vector.load %arg3[%c0_74, %c2_75, %c0_76, %c0_77] : memref<1x8x1x32xf32, #tpu.memory_space<vmem>>, vector<1x1x1x32xf32>
    %105 = vector.shape_cast %104 : vector<1x1x1x32xf32> to vector<1x32xf32>
    %106 = vector.broadcast %105 : vector<1x32xf32> to vector<16x32xf32>
    %107 = arith.addf %103, %106 : vector<16x32xf32>
    %c0_78 = arith.constant 0 : index
    %c6 = arith.constant 6 : index
    %c0_79 = arith.constant 0 : index
    %c0_80 = arith.constant 0 : index
    %108 = vector.load %arg2[%c0_78, %c6, %c0_79, %c0_80] : memref<1x12x128x32xf32, #tpu.memory_space<vmem>>, vector<1x1x128x32xf32>
    %109 = vector.shape_cast %108 : vector<1x1x128x32xf32> to vector<128x32xf32>
    %cst_81 = arith.constant dense<0.000000e+00> : vector<16x32xf32>
    %110 = tpu.matmul %33, %109, %cst_81 {dimension_numbers = #tpu.dot_dimension_numbers<[1], [0], [0], [1], [0, 0, 1, 1], [], []>} : vector<16x128xf32>, vector<128x32xf32>, vector<16x32xf32> -> vector<16x32xf32>
    %c0_82 = arith.constant 0 : index
    %c10 = arith.constant 10 : index
    %c0_83 = arith.constant 0 : index
    %c0_84 = arith.constant 0 : index
    %111 = vector.load %arg2[%c0_82, %c10, %c0_83, %c0_84] : memref<1x12x128x32xf32, #tpu.memory_space<vmem>>, vector<1x1x128x32xf32>
    %112 = vector.shape_cast %111 : vector<1x1x128x32xf32> to vector<128x32xf32>
    %cst_85 = arith.constant dense<0.000000e+00> : vector<16x32xf32>
    %113 = tpu.matmul %33, %112, %cst_85 {dimension_numbers = #tpu.dot_dimension_numbers<[1], [0], [0], [1], [0, 0, 1, 1], [], []>} : vector<16x128xf32>, vector<128x32xf32>, vector<16x32xf32> -> vector<16x32xf32>
    %c0_86 = arith.constant 0 : index
    %c6_87 = arith.constant 6 : index
    %c0_88 = arith.constant 0 : index
    %c0_89 = arith.constant 0 : index
    %114 = vector.load %arg3[%c0_86, %c6_87, %c0_88, %c0_89] : memref<1x8x1x32xf32, #tpu.memory_space<vmem>>, vector<1x1x1x32xf32>
    %115 = vector.shape_cast %114 : vector<1x1x1x32xf32> to vector<1x32xf32>
    %116 = vector.broadcast %115 : vector<1x32xf32> to vector<16x32xf32>
    %117 = arith.addf %113, %116 : vector<16x32xf32>
    %cst_90 = arith.constant dense<0.000000e+00> : vector<16x16xf32>
    %118 = tpu.matmul %107, %110, %cst_90 {dimension_numbers = #tpu.dot_dimension_numbers<[1], [1], [0], [0], [0, 0, 1, 0], [], []>} : vector<16x32xf32>, vector<16x32xf32>, vector<16x16xf32> -> vector<16x16xf32>
    %119 = arith.addf %118, %4 : vector<16x16xf32>
    %cst_91 = arith.constant dense<0xFF800000> : vector<16xf32>
    %120 = vector.multi_reduction <maximumf>, %119, %cst_91 [1] : vector<16x16xf32> to vector<16xf32>
    %121 = vector.shape_cast %120 : vector<16xf32> to vector<16x1xf32>
    %122 = vector.broadcast %121 : vector<16x1xf32> to vector<16x16xf32>
    %123 = arith.subf %119, %122 : vector<16x16xf32>
    %124 = math.exp %123 : vector<16x16xf32>
    %cst_92 = arith.constant dense<0.000000e+00> : vector<16xf32>
    %125 = vector.multi_reduction <add>, %124, %cst_92 [1] : vector<16x16xf32> to vector<16xf32>
    %126 = vector.shape_cast %125 : vector<16xf32> to vector<16x1xf32>
    %127 = tpu.reciprocal %126 {approx = true} : vector<16x1xf32> -> vector<16x1xf32>
    %128 = vector.broadcast %127 : vector<16x1xf32> to vector<16x16xf32>
    %129 = arith.mulf %124, %128 : vector<16x16xf32>
    %cst_93 = arith.constant dense<0.000000e+00> : vector<16x32xf32>
    %130 = tpu.matmul %129, %117, %cst_93 {dimension_numbers = #tpu.dot_dimension_numbers<[1], [0], [0], [1], [0, 0, 1, 1], [], []>} : vector<16x16xf32>, vector<16x32xf32>, vector<16x32xf32> -> vector<16x32xf32>
    %c0_94 = arith.constant 0 : index
    %c2_95 = arith.constant 2 : index
    %c0_96 = arith.constant 0 : index
    %c0_97 = arith.constant 0 : index
    %131 = vector.load %arg4[%c0_94, %c2_95, %c0_96, %c0_97] : memref<1x4x32x128xf32, #tpu.memory_space<vmem>>, vector<1x1x32x128xf32>
    %132 = vector.shape_cast %131 : vector<1x1x32x128xf32> to vector<32x128xf32>
    %cst_98 = arith.constant dense<0.000000e+00> : vector<16x128xf32>
    %133 = tpu.matmul %130, %132, %cst_98 {dimension_numbers = #tpu.dot_dimension_numbers<[1], [0], [0], [1], [0, 0, 1, 1], [], []>} : vector<16x32xf32>, vector<32x128xf32>, vector<16x128xf32> -> vector<16x128xf32>
    %134 = arith.addf %100, %133 : vector<16x128xf32>
    %c0_99 = arith.constant 0 : index
    %c3 = arith.constant 3 : index
    %c0_100 = arith.constant 0 : index
    %c0_101 = arith.constant 0 : index
    %135 = vector.load %arg2[%c0_99, %c3, %c0_100, %c0_101] : memref<1x12x128x32xf32, #tpu.memory_space<vmem>>, vector<1x1x128x32xf32>
    %136 = vector.shape_cast %135 : vector<1x1x128x32xf32> to vector<128x32xf32>
    %cst_102 = arith.constant dense<0.000000e+00> : vector<16x32xf32>
    %137 = tpu.matmul %33, %136, %cst_102 {dimension_numbers = #tpu.dot_dimension_numbers<[1], [0], [0], [1], [0, 0, 1, 1], [], []>} : vector<16x128xf32>, vector<128x32xf32>, vector<16x32xf32> -> vector<16x32xf32>
    %c0_103 = arith.constant 0 : index
    %c3_104 = arith.constant 3 : index
    %c0_105 = arith.constant 0 : index
    %c0_106 = arith.constant 0 : index
    %138 = vector.load %arg3[%c0_103, %c3_104, %c0_105, %c0_106] : memref<1x8x1x32xf32, #tpu.memory_space<vmem>>, vector<1x1x1x32xf32>
    %139 = vector.shape_cast %138 : vector<1x1x1x32xf32> to vector<1x32xf32>
    %140 = vector.broadcast %139 : vector<1x32xf32> to vector<16x32xf32>
    %141 = arith.addf %137, %140 : vector<16x32xf32>
    %c0_107 = arith.constant 0 : index
    %c7 = arith.constant 7 : index
    %c0_108 = arith.constant 0 : index
    %c0_109 = arith.constant 0 : index
    %142 = vector.load %arg2[%c0_107, %c7, %c0_108, %c0_109] : memref<1x12x128x32xf32, #tpu.memory_space<vmem>>, vector<1x1x128x32xf32>
    %143 = vector.shape_cast %142 : vector<1x1x128x32xf32> to vector<128x32xf32>
    %cst_110 = arith.constant dense<0.000000e+00> : vector<16x32xf32>
    %144 = tpu.matmul %33, %143, %cst_110 {dimension_numbers = #tpu.dot_dimension_numbers<[1], [0], [0], [1], [0, 0, 1, 1], [], []>} : vector<16x128xf32>, vector<128x32xf32>, vector<16x32xf32> -> vector<16x32xf32>
    %c0_111 = arith.constant 0 : index
    %c11 = arith.constant 11 : index
    %c0_112 = arith.constant 0 : index
    %c0_113 = arith.constant 0 : index
    %145 = vector.load %arg2[%c0_111, %c11, %c0_112, %c0_113] : memref<1x12x128x32xf32, #tpu.memory_space<vmem>>, vector<1x1x128x32xf32>
    %146 = vector.shape_cast %145 : vector<1x1x128x32xf32> to vector<128x32xf32>
    %cst_114 = arith.constant dense<0.000000e+00> : vector<16x32xf32>
    %147 = tpu.matmul %33, %146, %cst_114 {dimension_numbers = #tpu.dot_dimension_numbers<[1], [0], [0], [1], [0, 0, 1, 1], [], []>} : vector<16x128xf32>, vector<128x32xf32>, vector<16x32xf32> -> vector<16x32xf32>
    %c0_115 = arith.constant 0 : index
    %c7_116 = arith.constant 7 : index
    %c0_117 = arith.constant 0 : index
    %c0_118 = arith.constant 0 : index
    %148 = vector.load %arg3[%c0_115, %c7_116, %c0_117, %c0_118] : memref<1x8x1x32xf32, #tpu.memory_space<vmem>>, vector<1x1x1x32xf32>
    %149 = vector.shape_cast %148 : vector<1x1x1x32xf32> to vector<1x32xf32>
    %150 = vector.broadcast %149 : vector<1x32xf32> to vector<16x32xf32>
    %151 = arith.addf %147, %150 : vector<16x32xf32>
    %cst_119 = arith.constant dense<0.000000e+00> : vector<16x16xf32>
    %152 = tpu.matmul %141, %144, %cst_119 {dimension_numbers = #tpu.dot_dimension_numbers<[1], [1], [0], [0], [0, 0, 1, 0], [], []>} : vector<16x32xf32>, vector<16x32xf32>, vector<16x16xf32> -> vector<16x16xf32>
    %153 = arith.addf %152, %4 : vector<16x16xf32>
    %cst_120 = arith.constant dense<0xFF800000> : vector<16xf32>
    %154 = vector.multi_reduction <maximumf>, %153, %cst_120 [1] : vector<16x16xf32> to vector<16xf32>
    %155 = vector.shape_cast %154 : vector<16xf32> to vector<16x1xf32>
    %156 = vector.broadcast %155 : vector<16x1xf32> to vector<16x16xf32>
    %157 = arith.subf %153, %156 : vector<16x16xf32>
    %158 = math.exp %157 : vector<16x16xf32>
    %cst_121 = arith.constant dense<0.000000e+00> : vector<16xf32>
    %159 = vector.multi_reduction <add>, %158, %cst_121 [1] : vector<16x16xf32> to vector<16xf32>
    %160 = vector.shape_cast %159 : vector<16xf32> to vector<16x1xf32>
    %161 = tpu.reciprocal %160 {approx = true} : vector<16x1xf32> -> vector<16x1xf32>
    %162 = vector.broadcast %161 : vector<16x1xf32> to vector<16x16xf32>
    %163 = arith.mulf %158, %162 : vector<16x16xf32>
    %cst_122 = arith.constant dense<0.000000e+00> : vector<16x32xf32>
    %164 = tpu.matmul %163, %151, %cst_122 {dimension_numbers = #tpu.dot_dimension_numbers<[1], [0], [0], [1], [0, 0, 1, 1], [], []>} : vector<16x16xf32>, vector<16x32xf32>, vector<16x32xf32> -> vector<16x32xf32>
    %c0_123 = arith.constant 0 : index
    %c3_124 = arith.constant 3 : index
    %c0_125 = arith.constant 0 : index
    %c0_126 = arith.constant 0 : index
    %165 = vector.load %arg4[%c0_123, %c3_124, %c0_125, %c0_126] : memref<1x4x32x128xf32, #tpu.memory_space<vmem>>, vector<1x1x32x128xf32>
    %166 = vector.shape_cast %165 : vector<1x1x32x128xf32> to vector<32x128xf32>
    %cst_127 = arith.constant dense<0.000000e+00> : vector<16x128xf32>
    %167 = tpu.matmul %164, %166, %cst_127 {dimension_numbers = #tpu.dot_dimension_numbers<[1], [0], [0], [1], [0, 0, 1, 1], [], []>} : vector<16x32xf32>, vector<32x128xf32>, vector<16x128xf32> -> vector<16x128xf32>
    %168 = arith.addf %134, %167 : vector<16x128xf32>
    %169 = vector.broadcast %11 : vector<1x128xf32> to vector<16x128xf32>
    %170 = arith.addf %168, %169 : vector<16x128xf32>
    %171 = arith.addf %170, %3 : vector<16x128xf32>
    %cst_128 = arith.constant dense<0.000000e+00> : vector<16xf32>
    %172 = vector.multi_reduction <add>, %171, %cst_128 [1] : vector<16x128xf32> to vector<16xf32>
    %173 = vector.shape_cast %172 : vector<16xf32> to vector<16x1xf32>
    %cst_129 = arith.constant 1.280000e+02 : f32
    %174 = vector.broadcast %cst_129 : f32 to vector<16x1xf32>
    %175 = arith.divf %173, %174 : vector<16x1xf32>
    %176 = vector.broadcast %175 : vector<16x1xf32> to vector<16x128xf32>
    %177 = arith.subf %171, %176 : vector<16x128xf32>
    %178 = arith.mulf %177, %177 : vector<16x128xf32>
    %cst_130 = arith.constant dense<0.000000e+00> : vector<16xf32>
    %179 = vector.multi_reduction <add>, %178, %cst_130 [1] : vector<16x128xf32> to vector<16xf32>
    %180 = vector.shape_cast %179 : vector<16xf32> to vector<16x1xf32>
    %cst_131 = arith.constant 1.280000e+02 : f32
    %181 = vector.broadcast %cst_131 : f32 to vector<16x1xf32>
    %182 = arith.divf %180, %181 : vector<16x1xf32>
    %cst_132 = arith.constant 9.99999997E-7 : f32
    %183 = vector.broadcast %cst_132 : f32 to vector<16x1xf32>
    %184 = arith.addf %182, %183 : vector<16x1xf32>
    %185 = math.rsqrt %184 : vector<16x1xf32>
    %186 = vector.broadcast %185 : vector<16x1xf32> to vector<16x128xf32>
    %187 = arith.mulf %177, %186 : vector<16x128xf32>
    %188 = vector.broadcast %9 : vector<1x128xf32> to vector<16x128xf32>
    %189 = arith.mulf %187, %188 : vector<16x128xf32>
    %190 = vector.broadcast %10 : vector<1x128xf32> to vector<16x128xf32>
    %191 = arith.addf %189, %190 : vector<16x128xf32>
    %c0_133 = arith.constant 0 : index
    %c0_134 = arith.constant 0 : index
    %c0_135 = arith.constant 0 : index
    %192 = vector.load %arg5[%c0_133, %c0_134, %c0_135] : memref<1x128x256xf32, #tpu.memory_space<vmem>>, vector<1x128x256xf32>
    %193 = vector.shape_cast %192 : vector<1x128x256xf32> to vector<128x256xf32>
    %cst_136 = arith.constant dense<0.000000e+00> : vector<16x256xf32>
    %194 = tpu.matmul %191, %193, %cst_136 {dimension_numbers = #tpu.dot_dimension_numbers<[1], [0], [0], [1], [0, 0, 1, 1], [], []>} : vector<16x128xf32>, vector<128x256xf32>, vector<16x256xf32> -> vector<16x256xf32>
    %195 = vector.broadcast %13 : vector<1x256xf32> to vector<16x256xf32>
    %196 = arith.addf %194, %195 : vector<16x256xf32>
    %cst_137 = arith.constant 5.000000e-01 : f32
    %197 = vector.broadcast %cst_137 : f32 to vector<16x256xf32>
    %198 = arith.mulf %197, %196 : vector<16x256xf32>
    %cst_138 = arith.constant 0.707106769 : f32
    %199 = vector.broadcast %cst_138 : f32 to vector<16x256xf32>
    %200 = arith.mulf %196, %199 : vector<16x256xf32>
    %cst_139 = arith.constant 0.000000e+00 : f32
    %201 = vector.broadcast %cst_139 : f32 to vector<16x256xf32>
    %202 = arith.cmpf oge, %200, %201 : vector<16x256xf32>
    %cst_140 = arith.constant 1.000000e+00 : f32
    %cst_141 = arith.constant -1.000000e+00 : f32
    %203 = vector.broadcast %cst_140 : f32 to vector<16x256xf32>
    %204 = vector.broadcast %cst_141 : f32 to vector<16x256xf32>
    %205 = arith.select %202, %203, %204 : vector<16x256xi1>, vector<16x256xf32>
    %206 = math.absf %200 : vector<16x256xf32>
    %cst_142 = arith.constant 0.327591091 : f32
    %207 = vector.broadcast %cst_142 : f32 to vector<16x256xf32>
    %208 = arith.mulf %207, %206 : vector<16x256xf32>
    %cst_143 = arith.constant 1.000000e+00 : f32
    %209 = vector.broadcast %cst_143 : f32 to vector<16x256xf32>
    %210 = arith.addf %209, %208 : vector<16x256xf32>
    %cst_144 = arith.constant 1.000000e+00 : f32
    %211 = vector.broadcast %cst_144 : f32 to vector<16x256xf32>
    %212 = arith.divf %211, %210 : vector<16x256xf32>
    %cst_145 = arith.constant 1.06140542 : f32
    %213 = vector.broadcast %cst_145 : f32 to vector<16x256xf32>
    %214 = arith.mulf %213, %212 : vector<16x256xf32>
    %cst_146 = arith.constant -1.45315206 : f32
    %215 = vector.broadcast %cst_146 : f32 to vector<16x256xf32>
    %216 = arith.addf %214, %215 : vector<16x256xf32>
    %217 = arith.mulf %216, %212 : vector<16x256xf32>
    %cst_147 = arith.constant 1.42141378 : f32
    %218 = vector.broadcast %cst_147 : f32 to vector<16x256xf32>
    %219 = arith.addf %217, %218 : vector<16x256xf32>
    %220 = arith.mulf %219, %212 : vector<16x256xf32>
    %cst_148 = arith.constant -0.284496725 : f32
    %221 = vector.broadcast %cst_148 : f32 to vector<16x256xf32>
    %222 = arith.addf %220, %221 : vector<16x256xf32>
    %223 = arith.mulf %222, %212 : vector<16x256xf32>
    %cst_149 = arith.constant 0.254829586 : f32
    %224 = vector.broadcast %cst_149 : f32 to vector<16x256xf32>
    %225 = arith.addf %223, %224 : vector<16x256xf32>
    %226 = arith.mulf %225, %212 : vector<16x256xf32>
    %cst_150 = arith.constant 0.000000e+00 : f32
    %227 = vector.broadcast %cst_150 : f32 to vector<16x256xf32>
    %228 = arith.subf %227, %206 : vector<16x256xf32>
    %229 = arith.mulf %228, %206 : vector<16x256xf32>
    %230 = math.exp %229 : vector<16x256xf32>
    %231 = arith.mulf %226, %230 : vector<16x256xf32>
    %cst_151 = arith.constant 1.000000e+00 : f32
    %232 = vector.broadcast %cst_151 : f32 to vector<16x256xf32>
    %233 = arith.subf %232, %231 : vector<16x256xf32>
    %234 = arith.mulf %205, %233 : vector<16x256xf32>
    %cst_152 = arith.constant 1.000000e+00 : f32
    %235 = vector.broadcast %cst_152 : f32 to vector<16x256xf32>
    %236 = arith.addf %235, %234 : vector<16x256xf32>
    %237 = arith.mulf %198, %236 : vector<16x256xf32>
    %c0_153 = arith.constant 0 : index
    %c0_154 = arith.constant 0 : index
    %c0_155 = arith.constant 0 : index
    %238 = vector.load %arg6[%c0_153, %c0_154, %c0_155] : memref<1x256x128xf32, #tpu.memory_space<vmem>>, vector<1x256x128xf32>
    %239 = vector.shape_cast %238 : vector<1x256x128xf32> to vector<256x128xf32>
    %cst_156 = arith.constant dense<0.000000e+00> : vector<16x128xf32>
    %240 = tpu.matmul %237, %239, %cst_156 {dimension_numbers = #tpu.dot_dimension_numbers<[1], [0], [0], [1], [0, 0, 1, 1], [], []>} : vector<16x256xf32>, vector<256x128xf32>, vector<16x128xf32> -> vector<16x128xf32>
    %241 = vector.broadcast %12 : vector<1x128xf32> to vector<16x128xf32>
    %242 = arith.addf %240, %241 : vector<16x128xf32>
    %243 = arith.addf %242, %171 : vector<16x128xf32>
    %c0_157 = arith.constant 0 : index
    %c0_158 = arith.constant 0 : index
    %244 = vector.load %arg12[%c0_157, %c0_158] : memref<16x128xf32, #tpu.memory_space<vmem>>, vector<16x128xf32>
    tpu.vector_store %arg12[%c0_157, %c0_158], %243 {strides = array<i32>} : memref<16x128xf32, #tpu.memory_space<vmem>>, vector<16x128xf32>,
    %c1_i32 = arith.constant 1 : i32
    %245 = arith.cmpi eq, %arg0, %c1_i32 : i32
    %246 = arith.extui %245 : i1 to i32
    %c0_i32_159 = arith.constant 0 : i32
    %247 = arith.cmpi ne, %246, %c0_i32_159 : i32
    scf.if %247 {
      %c0_160 = arith.constant 0 : index
      %c0_161 = arith.constant 0 : index
      %248 = vector.load %arg9[%c0_160, %c0_161] : memref<8x128xf32, #tpu.memory_space<vmem>>, vector<8x128xf32>
      %249 = vector.extract_strided_slice %248 {offsets = [0, 0], sizes = [1, 128], strides = [1, 1]} : vector<8x128xf32> to vector<1x128xf32>
      %250 = vector.extract_strided_slice %248 {offsets = [1, 0], sizes = [1, 128], strides = [1, 1]} : vector<8x128xf32> to vector<1x128xf32>
      %251 = vector.extract_strided_slice %248 {offsets = [2, 0], sizes = [1, 128], strides = [1, 1]} : vector<8x128xf32> to vector<1x128xf32>
      %252 = vector.extract_strided_slice %243 {offsets = [0, 0], sizes = [1, 128], strides = [1, 1]} : vector<16x128xf32> to vector<1x128xf32>
      %cst_162 = arith.constant dense<0.000000e+00> : vector<1xf32>
      %253 = vector.multi_reduction <add>, %252, %cst_162 [1] : vector<1x128xf32> to vector<1xf32>
      %254 = vector.shape_cast %253 : vector<1xf32> to vector<1x1xf32>
      %cst_163 = arith.constant 1.280000e+02 : f32
      %255 = vector.broadcast %cst_163 : f32 to vector<1x1xf32>
      %256 = arith.divf %254, %255 : vector<1x1xf32>
      %257 = vector.broadcast %256 : vector<1x1xf32> to vector<1x128xf32>
      %258 = arith.subf %252, %257 : vector<1x128xf32>
      %259 = arith.mulf %258, %258 : vector<1x128xf32>
      %cst_164 = arith.constant dense<0.000000e+00> : vector<1xf32>
      %260 = vector.multi_reduction <add>, %259, %cst_164 [1] : vector<1x128xf32> to vector<1xf32>
      %261 = vector.shape_cast %260 : vector<1xf32> to vector<1x1xf32>
      %cst_165 = arith.constant 1.280000e+02 : f32
      %262 = vector.broadcast %cst_165 : f32 to vector<1x1xf32>
      %263 = arith.divf %261, %262 : vector<1x1xf32>
      %cst_166 = arith.constant 9.99999997E-7 : f32
      %264 = vector.broadcast %cst_166 : f32 to vector<1x1xf32>
      %265 = arith.addf %263, %264 : vector<1x1xf32>
      %266 = math.rsqrt %265 : vector<1x1xf32>
      %267 = vector.broadcast %266 : vector<1x1xf32> to vector<1x128xf32>
      %268 = arith.mulf %258, %267 : vector<1x128xf32>
      %269 = arith.mulf %268, %249 : vector<1x128xf32>
      %270 = arith.addf %269, %250 : vector<1x128xf32>
      %c0_167 = arith.constant 0 : index
      %c0_168 = arith.constant 0 : index
      %271 = vector.load %arg10[%c0_167, %c0_168] : memref<128x128xf32, #tpu.memory_space<vmem>>, vector<128x128xf32>
      %cst_169 = arith.constant dense<0.000000e+00> : vector<1x128xf32>
      %272 = tpu.matmul %270, %271, %cst_169 {dimension_numbers = #tpu.dot_dimension_numbers<[1], [0], [0], [1], [0, 0, 1, 1], [], []>} : vector<1x128xf32>, vector<128x128xf32>, vector<1x128xf32> -> vector<1x128xf32>
      %273 = arith.addf %272, %251 : vector<1x128xf32>
      %c0_170 = arith.constant 0 : index
      %c0_171 = arith.constant 0 : index
      %274 = vector.load %arg11[%c0_170, %c0_171] : memref<2x128xf32, #tpu.memory_space<vmem>>, vector<1x128xf32>
      tpu.vector_store %arg11[%c0_170, %c0_171], %273 {strides = array<i32>} : memref<2x128xf32, #tpu.memory_space<vmem>>, vector<1x128xf32>,
      %275 = vector.extract_strided_slice %243 {offsets = [8, 0], sizes = [1, 128], strides = [1, 1]} : vector<16x128xf32> to vector<1x128xf32>
      %cst_172 = arith.constant dense<0.000000e+00> : vector<1xf32>
      %276 = vector.multi_reduction <add>, %275, %cst_172 [1] : vector<1x128xf32> to vector<1xf32>
      %277 = vector.shape_cast %276 : vector<1xf32> to vector<1x1xf32>
      %cst_173 = arith.constant 1.280000e+02 : f32
      %278 = vector.broadcast %cst_173 : f32 to vector<1x1xf32>
      %279 = arith.divf %277, %278 : vector<1x1xf32>
      %280 = vector.broadcast %279 : vector<1x1xf32> to vector<1x128xf32>
      %281 = arith.subf %275, %280 : vector<1x128xf32>
      %282 = arith.mulf %281, %281 : vector<1x128xf32>
      %cst_174 = arith.constant dense<0.000000e+00> : vector<1xf32>
      %283 = vector.multi_reduction <add>, %282, %cst_174 [1] : vector<1x128xf32> to vector<1xf32>
      %284 = vector.shape_cast %283 : vector<1xf32> to vector<1x1xf32>
      %cst_175 = arith.constant 1.280000e+02 : f32
      %285 = vector.broadcast %cst_175 : f32 to vector<1x1xf32>
      %286 = arith.divf %284, %285 : vector<1x1xf32>
      %cst_176 = arith.constant 9.99999997E-7 : f32
      %287 = vector.broadcast %cst_176 : f32 to vector<1x1xf32>
      %288 = arith.addf %286, %287 : vector<1x1xf32>
      %289 = math.rsqrt %288 : vector<1x1xf32>
      %290 = vector.broadcast %289 : vector<1x1xf32> to vector<1x128xf32>
      %291 = arith.mulf %281, %290 : vector<1x128xf32>
      %292 = arith.mulf %291, %249 : vector<1x128xf32>
      %293 = arith.addf %292, %250 : vector<1x128xf32>
      %c0_177 = arith.constant 0 : index
      %c0_178 = arith.constant 0 : index
      %294 = vector.load %arg10[%c0_177, %c0_178] : memref<128x128xf32, #tpu.memory_space<vmem>>, vector<128x128xf32>
      %cst_179 = arith.constant dense<0.000000e+00> : vector<1x128xf32>
      %295 = tpu.matmul %293, %294, %cst_179 {dimension_numbers = #tpu.dot_dimension_numbers<[1], [0], [0], [1], [0, 0, 1, 1], [], []>} : vector<1x128xf32>, vector<128x128xf32>, vector<1x128xf32> -> vector<1x128xf32>
      %296 = arith.addf %295, %251 : vector<1x128xf32>
      %c1_180 = arith.constant 1 : index
      %c0_181 = arith.constant 0 : index
      %297 = vector.load %arg11[%c1_180, %c0_181] : memref<2x128xf32, #tpu.memory_space<vmem>>, vector<1x128xf32>
      tpu.vector_store %arg11[%c1_180, %c0_181], %296 {strides = array<i32>} : memref<2x128xf32, #tpu.memory_space<vmem>>, vector<1x128xf32>,
    } else {
    }
    return
  }
  func.func @transform_0(%arg0: i32) -> (i32, i32) {
    %c0_i32 = arith.constant 0 : i32
    %c0_i32_0 = arith.constant 0 : i32
    %c0_i32_1 = arith.constant 0 : i32
    return %c0_i32, %c0_i32_0 : i32, i32
  }
  func.func @transform_1(%arg0: i32) -> (i32, i32, i32, i32) {
    %c0_i32 = arith.constant 0 : i32
    %c0_i32_0 = arith.constant 0 : i32
    %c0_i32_1 = arith.constant 0 : i32
    %c0_i32_2 = arith.constant 0 : i32
    return %arg0, %c0_i32, %c0_i32_0, %c0_i32_1 : i32, i32, i32, i32
  }
  func.func @transform_2(%arg0: i32) -> (i32, i32, i32, i32) {
    %c0_i32 = arith.constant 0 : i32
    %c0_i32_0 = arith.constant 0 : i32
    %c0_i32_1 = arith.constant 0 : i32
    %c0_i32_2 = arith.constant 0 : i32
    return %arg0, %c0_i32, %c0_i32_0, %c0_i32_1 : i32, i32, i32, i32
  }
  func.func @transform_3(%arg0: i32) -> (i32, i32, i32, i32) {
    %c0_i32 = arith.constant 0 : i32
    %c0_i32_0 = arith.constant 0 : i32
    %c0_i32_1 = arith.constant 0 : i32
    %c0_i32_2 = arith.constant 0 : i32
    return %arg0, %c0_i32, %c0_i32_0, %c0_i32_1 : i32, i32, i32, i32
  }
  func.func @transform_4(%arg0: i32) -> (i32, i32, i32) {
    %c0_i32 = arith.constant 0 : i32
    %c0_i32_0 = arith.constant 0 : i32
    %c0_i32_1 = arith.constant 0 : i32
    return %arg0, %c0_i32, %c0_i32_0 : i32, i32, i32
  }
  func.func @transform_5(%arg0: i32) -> (i32, i32, i32) {
    %c0_i32 = arith.constant 0 : i32
    %c0_i32_0 = arith.constant 0 : i32
    %c0_i32_1 = arith.constant 0 : i32
    return %arg0, %c0_i32, %c0_i32_0 : i32, i32, i32
  }
  func.func @transform_6(%arg0: i32) -> (i32, i32, i32) {
    %c0_i32 = arith.constant 0 : i32
    %c0_i32_0 = arith.constant 0 : i32
    %c0_i32_1 = arith.constant 0 : i32
    return %arg0, %c0_i32, %c0_i32_0 : i32, i32, i32
  }
  func.func @transform_7(%arg0: i32) -> (i32, i32) {
    %c0_i32 = arith.constant 0 : i32
    %c0_i32_0 = arith.constant 0 : i32
    %c0_i32_1 = arith.constant 0 : i32
    return %c0_i32, %c0_i32_0 : i32, i32
  }
  func.func @transform_8(%arg0: i32) -> (i32, i32) {
    %c0_i32 = arith.constant 0 : i32
    %c0_i32_0 = arith.constant 0 : i32
    %c0_i32_1 = arith.constant 0 : i32
    return %c0_i32, %c0_i32_0 : i32, i32
  }
  func.func @transform_9(%arg0: i32) -> (i32, i32) {
    %c0_i32 = arith.constant 0 : i32
    %c0_i32_0 = arith.constant 0 : i32
    %c0_i32_1 = arith.constant 0 : i32
    return %c0_i32, %c0_i32_0 : i32, i32
  }
  func.func @transform_10(%arg0: i32) -> (i32, i32) {
    %c0_i32 = arith.constant 0 : i32
    %c0_i32_0 = arith.constant 0 : i32
    %c0_i32_1 = arith.constant 0 : i32
    return %c0_i32, %c0_i32_0 : i32, i32
  }
}

</mosaic_0001>

<llo_original>
// kernel: vit_forward.2
$region0: #{vit_forward.2}
  #allocation0 [shape = 'u32[]', space=smem, size = 0x4, offset = 0x4, fixed_abs, tag = 'smem constant byte address 0x4 - core index']
  #allocation1 [shape = 'u32[72,128]{1,0:T(1,128)}', space=vmem, size = 0x9000, scoped, tag = 'internal scratch']
  %s0 = inlined_call_operand.vmem [shape: f32[8,768], index: 0, kind: input, shape index: {}]
  %s1 = inlined_call_operand.hbm [shape: f32[768,128], index: 1, kind: input, shape index: {}]
  %s2 = inlined_call_operand.hbm [shape: f32[1,128], index: 2, kind: input, shape index: {}]
  %s3 = inlined_call_operand.hbm [shape: f32[1,128], index: 3, kind: input, shape index: {}]
  %s4 = inlined_call_operand.hbm [shape: f32[4,128], index: 4, kind: input, shape index: {}]
  %s5 = inlined_call_operand.vmem [shape: f32[16,128], index: 5, kind: output, shape index: {}]
  %s6 = sld [smem:[#allocation0]]
  $region46: #{vit_forward.2} parent=0
    _
  %s8 = ssub.s32 1, %s6
  %s9 = scalar_select 0, %s8, %s6
  $region1: #{vit_forward.2} parent=0
    #allocation2 [shape = 'u8[393216]{0}', space=vmem, size = 0x60000, scoped, tag = 'input window, operand 1, single buffered']
    #allocation3 [shape = 's32[1]{0}', space=sflag, size = 0x4, scoped, tag = 'scoped memory for vit_forward.2']
    #allocation4 [shape = 'u8[512]{0}', space=vmem, size = 0x400, scoped, tag = 'input window, operand 2, single buffered']
    #allocation5 [shape = 's32[1]{0}', space=sflag, size = 0x4, scoped, tag = 'scoped memory for vit_forward.2']
    #allocation6 [shape = 'u8[512]{0}', space=vmem, size = 0x400, scoped, tag = 'input window, operand 3, single buffered']
    #allocation7 [shape = 'u8[2048]{0}', space=vmem, size = 0x800, scoped, tag = 'input window, operand 4, single buffered']
    #allocation8 [shape = 's32[1]{0}', space=sflag, size = 0x4, scoped, tag = 'scoped memory for vit_forward.2']
    %10 = vsyncpa [#allocation3], 0
    %11 = vsyncpa [#allocation5], 0
    %12 = vsyncpa [#allocation8], 0
    // Predicated region
    $region2: #{vit_forward.2} parent=1 // pred_check
      _
    $region3: #{vit_forward.2} parent=1 // pred_check_branch
      %14 = sbr.rel (0) target = $region5
    $region4: #{vit_forward.2} parent=1 // pred_region
      _
    $region5: #{vit_forward.2} parent=1 // pred_fallthru
      _
    // Predicated region
    $region6: #{vit_forward.2} parent=1 // pred_check
      _
    $region7: #{vit_forward.2} parent=1 // pred_check_branch
      %16 = sbr.rel (0) target = $region9
    $region8: #{vit_forward.2} parent=1 // pred_region
      %18 = vsyncadd [#allocation3], 0
      %s19 = sshll.u32 %s1, 4
      %s20 = int_to_ptr.hbm [resolvable:$true] %s19
      %s21 = sshll.u32 [#allocation2], 4
      %s22 = int_to_ptr.vmem [resolvable:$true] %s21
      %27 = dma.hbm_to_vmem [thread:$0]  %s20, 12288, %s22, [#allocation3], 128, 128, 8
    $region9: #{vit_forward.2} parent=1 // pred_fallthru
      _
    // Predicated region
    $region10: #{vit_forward.2} parent=1 // pred_check
      _
    $region11: #{vit_forward.2} parent=1 // pred_check_branch
      %29 = sbr.rel (0) target = $region13
    $region12: #{vit_forward.2} parent=1 // pred_region
      %31 = vsyncadd [#allocation5], 0
      %s33 = sshll.u32 %s2, 4
      %s34 = int_to_ptr.hbm [resolvable:$true] %s33
      %s35 = sshll.u32 [#allocation4], 4
      %s36 = int_to_ptr.vmem [resolvable:$true] %s35
      %38 = dma.hbm_to_vmem [thread:$0]  %s34, 16, %s36, [#allocation5]
    $region13: #{vit_forward.2} parent=1 // pred_fallthru
      _
    // Predicated region
    $region14: #{vit_forward.2} parent=1 // pred_check
      _
    $region15: #{vit_forward.2} parent=1 // pred_check_branch
      %40 = sbr.rel (0) target = $region17
    $region16: #{vit_forward.2} parent=1 // pred_region
      %42 = vsyncadd [#allocation5], 0
      %s44 = sshll.u32 %s3, 4
      %s45 = int_to_ptr.hbm [resolvable:$true] %s44
      %s46 = sshll.u32 [#allocation6], 4
      %s47 = int_to_ptr.vmem [resolvable:$true] %s46
      %49 = dma.hbm_to_vmem [thread:$0]  %s45, 16, %s47, [#allocation5]
    $region17: #{vit_forward.2} parent=1 // pred_fallthru
      _
    // Predicated region
    $region18: #{vit_forward.2} parent=1 // pred_check
      _
    $region19: #{vit_forward.2} parent=1 // pred_check_branch
      %51 = sbr.rel (0) target = $region21
    $region20: #{vit_forward.2} parent=1 // pred_region
      %53 = vsyncadd [#allocation8], 0
      %s55 = sshll.u32 %s4, 4
      %s56 = int_to_ptr.hbm [resolvable:$true] %s55
      %s57 = sshll.u32 [#allocation7], 4
      %s58 = int_to_ptr.vmem [resolvable:$true] %s57
      %60 = dma.hbm_to_vmem [thread:$0]  %s56, 64, %s58, [#allocation8]
    $region21: #{vit_forward.2} parent=1 // pred_fallthru
      _
    // Predicated region
    $region22: #{vit_forward.2} parent=1 // pred_check
      _
    $region23: #{vit_forward.2} parent=1 // pred_check_branch
      %62 = sbr.rel (0) target = $region25
    $region24: #{vit_forward.2} parent=1 // pred_region
      %64 = dma.done [#allocation3], 12288
    $region25: #{vit_forward.2} parent=1 // pred_fallthru
      _
    // Predicated region
    $region26: #{vit_forward.2} parent=1 // pred_check
      _
    $region27: #{vit_forward.2} parent=1 // pred_check_branch
      %66 = sbr.rel (0) target = $region29
    $region28: #{vit_forward.2} parent=1 // pred_region
      %68 = dma.done [#allocation5], 16
    $region29: #{vit_forward.2} parent=1 // pred_fallthru
      _
    // Predicated region
    $region30: #{vit_forward.2} parent=1 // pred_check
      _
    $region31: #{vit_forward.2} parent=1 // pred_check_branch
      %70 = sbr.rel (0) target = $region33
    $region32: #{vit_forward.2} parent=1 // pred_region
      %72 = dma.done [#allocation5], 16
    $region33: #{vit_forward.2} parent=1 // pred_fallthru
      _
    // Predicated region
    $region34: #{vit_forward.2} parent=1 // pred_check
      _
    $region35: #{vit_forward.2} parent=1 // pred_check_branch
      %74 = sbr.rel (0) target = $region37
    $region36: #{vit_forward.2} parent=1 // pred_region
      %76 = dma.done [#allocation8], 64
    $region37: #{vit_forward.2} parent=1 // pred_fallthru
      _
    %v77 = vld [vmem:[%s0] sm:$0xff]
    %v78 = vld [vmem:[%s0 + $0x8] sm:$0xff]
    %v79 = vld [vmem:[%s0 + $0x10] sm:$0xff]
    %v80 = vld [vmem:[%s0 + $0x18] sm:$0xff]
    %v81 = vld [vmem:[%s0 + $0x20] sm:$0xff]
    %v82 = vld [vmem:[%s0 + $0x28] sm:$0xff]
    %v83 = vld [vmem:[#allocation2] sm:$0xff]
    %v84 = vld [vmem:[#allocation2 + $0x8] sm:$0xff]
    %v85 = vld [vmem:[#allocation2 + $0x10] sm:$0xff]
    %v86 = vld [vmem:[#allocation2 + $0x18] sm:$0xff]
    %v87 = vld [vmem:[#allocation2 + $0x20] sm:$0xff]
    %v88 = vld [vmem:[#allocation2 + $0x28] sm:$0xff]
    %v89 = vld [vmem:[#allocation2 + $0x30] sm:$0xff]
    %v90 = vld [vmem:[#allocation2 + $0x38] sm:$0xff]
    %v91 = vld [vmem:[#allocation2 + $0x40] sm:$0xff]
    %v92 = vld [vmem:[#allocation2 + $0x48] sm:$0xff]
    %v93 = vld [vmem:[#allocation2 + $0x50] sm:$0xff]
    %v94 = vld [vmem:[#allocation2 + $0x58] sm:$0xff]
    %v95 = vld [vmem:[#allocation2 + $0x60] sm:$0xff]
    %v96 = vld [vmem:[#allocation2 + $0x68] sm:$0xff]
    %v97 = vld [vmem:[#allocation2 + $0x70] sm:$0xff]
    %v98 = vld [vmem:[#allocation2 + $0x78] sm:$0xff]
    %v99 = vld [vmem:[#allocation2 + $0x80] sm:$0xff]
    %v100 = vld [vmem:[#allocation2 + $0x88] sm:$0xff]
    %v101 = vld [vmem:[#allocation2 + $0x90] sm:$0xff]
    %v102 = vld [vmem:[#allocation2 + $0x98] sm:$0xff]
    %v103 = vld [vmem:[#allocation2 + $0xa0] sm:$0xff]
    %v104 = vld [vmem:[#allocation2 + $0xa8] sm:$0xff]
    %v105 = vld [vmem:[#allocation2 + $0xb0] sm:$0xff]
    %v106 = vld [vmem:[#allocation2 + $0xb8] sm:$0xff]
    %v107 = vld [vmem:[#allocation2 + $0xc0] sm:$0xff]
    %v108 = vld [vmem:[#allocation2 + $0xc8] sm:$0xff]
    %v109 = vld [vmem:[#allocation2 + $0xd0] sm:$0xff]
    %v110 = vld [vmem:[#allocation2 + $0xd8] sm:$0xff]
    %v111 = vld [vmem:[#allocation2 + $0xe0] sm:$0xff]
    %v112 = vld [vmem:[#allocation2 + $0xe8] sm:$0xff]
    %v113 = vld [vmem:[#allocation2 + $0xf0] sm:$0xff]
    %v114 = vld [vmem:[#allocation2 + $0xf8] sm:$0xff]
    %v115 = vld [vmem:[#allocation2 + $0x100] sm:$0xff]
    %v116 = vld [vmem:[#allocation2 + $0x108] sm:$0xff]
    %v117 = vld [vmem:[#allocation2 + $0x110] sm:$0xff]
    %v118 = vld [vmem:[#allocation2 + $0x118] sm:$0xff]
    %v119 = vld [vmem:[#allocation2 + $0x120] sm:$0xff]
    %v120 = vld [vmem:[#allocation2 + $0x128] sm:$0xff]
    %v121 = vld [vmem:[#allocation2 + $0x130] sm:$0xff]
    %v122 = vld [vmem:[#allocation2 + $0x138] sm:$0xff]
    %v123 = vld [vmem:[#allocation2 + $0x140] sm:$0xff]
    %v124 = vld [vmem:[#allocation2 + $0x148] sm:$0xff]
    %v125 = vld [vmem:[#allocation2 + $0x150] sm:$0xff]
    %v126 = vld [vmem:[#allocation2 + $0x158] sm:$0xff]
    %v127 = vld [vmem:[#allocation2 + $0x160] sm:$0xff]
    %v128 = vld [vmem:[#allocation2 + $0x168] sm:$0xff]
    %v129 = vld [vmem:[#allocation2 + $0x170] sm:$0xff]
    %v130 = vld [vmem:[#allocation2 + $0x178] sm:$0xff]
    %v131 = vld [vmem:[#allocation2 + $0x180] sm:$0xff]
    %v132 = vld [vmem:[#allocation2 + $0x188] sm:$0xff]
    %v133 = vld [vmem:[#allocation2 + $0x190] sm:$0xff]
    %v134 = vld [vmem:[#allocation2 + $0x198] sm:$0xff]
    %v135 = vld [vmem:[#allocation2 + $0x1a0] sm:$0xff]
    %v136 = vld [vmem:[#allocation2 + $0x1a8] sm:$0xff]
    %v137 = vld [vmem:[#allocation2 + $0x1b0] sm:$0xff]
    %v138 = vld [vmem:[#allocation2 + $0x1b8] sm:$0xff]
    %v139 = vld [vmem:[#allocation2 + $0x1c0] sm:$0xff]
    %v140 = vld [vmem:[#allocation2 + $0x1c8] sm:$0xff]
    %v141 = vld [vmem:[#allocation2 + $0x1d0] sm:$0xff]
    %v142 = vld [vmem:[#allocation2 + $0x1d8] sm:$0xff]
    %v143 = vld [vmem:[#allocation2 + $0x1e0] sm:$0xff]
    %v144 = vld [vmem:[#allocation2 + $0x1e8] sm:$0xff]
    %v145 = vld [vmem:[#allocation2 + $0x1f0] sm:$0xff]
    %v146 = vld [vmem:[#allocation2 + $0x1f8] sm:$0xff]
    %v147 = vld [vmem:[#allocation2 + $0x200] sm:$0xff]
    %v148 = vld [vmem:[#allocation2 + $0x208] sm:$0xff]
    %v149 = vld [vmem:[#allocation2 + $0x210] sm:$0xff]
    %v150 = vld [vmem:[#allocation2 + $0x218] sm:$0xff]
    %v151 = vld [vmem:[#allocation2 + $0x220] sm:$0xff]
    %v152 = vld [vmem:[#allocation2 + $0x228] sm:$0xff]
    %v153 = vld [vmem:[#allocation2 + $0x230] sm:$0xff]
    %v154 = vld [vmem:[#allocation2 + $0x238] sm:$0xff]
    %v155 = vld [vmem:[#allocation2 + $0x240] sm:$0xff]
    %v156 = vld [vmem:[#allocation2 + $0x248] sm:$0xff]
    %v157 = vld [vmem:[#allocation2 + $0x250] sm:$0xff]
    %v158 = vld [vmem:[#allocation2 + $0x258] sm:$0xff]
    %v159 = vld [vmem:[#allocation2 + $0x260] sm:$0xff]
    %v160 = vld [vmem:[#allocation2 + $0x268] sm:$0xff]
    %v161 = vld [vmem:[#allocation2 + $0x270] sm:$0xff]
    %v162 = vld [vmem:[#allocation2 + $0x278] sm:$0xff]
    %v163 = vld [vmem:[#allocation2 + $0x280] sm:$0xff]
    %v164 = vld [vmem:[#allocation2 + $0x288] sm:$0xff]
    %v165 = vld [vmem:[#allocation2 + $0x290] sm:$0xff]
    %v166 = vld [vmem:[#allocation2 + $0x298] sm:$0xff]
    %v167 = vld [vmem:[#allocation2 + $0x2a0] sm:$0xff]
    %v168 = vld [vmem:[#allocation2 + $0x2a8] sm:$0xff]
    %v169 = vld [vmem:[#allocation2 + $0x2b0] sm:$0xff]
    %v170 = vld [vmem:[#allocation2 + $0x2b8] sm:$0xff]
    %v171 = vld [vmem:[#allocation2 + $0x2c0] sm:$0xff]
    %v172 = vld [vmem:[#allocation2 + $0x2c8] sm:$0xff]
    %v173 = vld [vmem:[#allocation2 + $0x2d0] sm:$0xff]
    %v174 = vld [vmem:[#allocation2 + $0x2d8] sm:$0xff]
    %v175 = vld [vmem:[#allocation2 + $0x2e0] sm:$0xff]
    %v176 = vld [vmem:[#allocation2 + $0x2e8] sm:$0xff]
    %v177 = vld [vmem:[#allocation2 + $0x2f0] sm:$0xff]
    %v178 = vld [vmem:[#allocation2 + $0x2f8] sm:$0xff]
    %v179 = vld [vmem:[#allocation4] sm:$0x1]
    %v181 = vperm.slane %v179, 0
    %183 = vmatpush.msra.mxu0 %v98
    %184 = vmatpush.msra.mxu0 %v97
    %185 = vmatpush.msra.mxu0 %v96
    %186 = vmatpush.msra.mxu0 %v95
    %187 = vmatpush.msra.mxu0 %v94
    %188 = vmatpush.msra.mxu0 %v93
    %189 = vmatpush.msra.mxu0 %v92
    %190 = vmatpush.msra.mxu0 %v91
    %191 = vmatpush.msra.mxu0 %v90
    %192 = vmatpush.msra.mxu0 %v89
    %193 = vmatpush.msra.mxu0 %v88
    %194 = vmatpush.msra.mxu0 %v87
    %195 = vmatpush.msra.mxu0 %v86
    %196 = vmatpush.msra.mxu0 %v85
    %197 = vmatpush.msra.mxu0 %v84
    %198 = vmatpush.msra.mxu0 %v83
    %199 = vmatmul.f32.gmra.mxu0 %v77
    %v200 = vpop.f32.mrf.mxu0
    %v201 = vadd.f32 %v181, %v200
    %202 = vdwg.mxu0
    %203 = vmatpush.msra.mxu0 %v114
    %204 = vmatpush.msra.mxu0 %v113
    %205 = vmatpush.msra.mxu0 %v112
    %206 = vmatpush.msra.mxu0 %v111
    %207 = vmatpush.msra.mxu0 %v110
    %208 = vmatpush.msra.mxu0 %v109
    %209 = vmatpush.msra.mxu0 %v108
    %210 = vmatpush.msra.mxu0 %v107
    %211 = vmatpush.msra.mxu0 %v106
    %212 = vmatpush.msra.mxu0 %v105
    %213 = vmatpush.msra.mxu0 %v104
    %214 = vmatpush.msra.mxu0 %v103
    %215 = vmatpush.msra.mxu0 %v102
    %216 = vmatpush.msra.mxu0 %v101
    %217 = vmatpush.msra.mxu0 %v100
    %218 = vmatpush.msra.mxu0 %v99
    %219 = vmatmul.f32.gmra.mxu0 %v78
    %v220 = vpop.f32.mrf.mxu0
    %v221 = vadd.f32 %v201, %v220
    %222 = vdwg.mxu0
    %223 = vmatpush.msra.mxu0 %v130
    %224 = vmatpush.msra.mxu0 %v129
    %225 = vmatpush.msra.mxu0 %v128
    %226 = vmatpush.msra.mxu0 %v127
    %227 = vmatpush.msra.mxu0 %v126
    %228 = vmatpush.msra.mxu0 %v125
    %229 = vmatpush.msra.mxu0 %v124
    %230 = vmatpush.msra.mxu0 %v123
    %231 = vmatpush.msra.mxu0 %v122
    %232 = vmatpush.msra.mxu0 %v121
    %233 = vmatpush.msra.mxu0 %v120
    %234 = vmatpush.msra.mxu0 %v119
    %235 = vmatpush.msra.mxu0 %v118
    %236 = vmatpush.msra.mxu0 %v117
    %237 = vmatpush.msra.mxu0 %v116
    %238 = vmatpush.msra.mxu0 %v115
    %239 = vmatmul.f32.gmra.mxu0 %v79
    %v240 = vpop.f32.mrf.mxu0
    %v241 = vadd.f32 %v221, %v240
    %242 = vdwg.mxu0
    %243 = vmatpush.msra.mxu0 %v146
    %244 = vmatpush.msra.mxu0 %v145
    %245 = vmatpush.msra.mxu0 %v144
    %246 = vmatpush.msra.mxu0 %v143
    %247 = vmatpush.msra.mxu0 %v142
    %248 = vmatpush.msra.mxu0 %v141
    %249 = vmatpush.msra.mxu0 %v140
    %250 = vmatpush.msra.mxu0 %v139
    %251 = vmatpush.msra.mxu0 %v138
    %252 = vmatpush.msra.mxu0 %v137
    %253 = vmatpush.msra.mxu0 %v136
    %254 = vmatpush.msra.mxu0 %v135
    %255 = vmatpush.msra.mxu0 %v134
    %256 = vmatpush.msra.mxu0 %v133
    %257 = vmatpush.msra.mxu0 %v132
    %258 = vmatpush.msra.mxu0 %v131
    %259 = vmatmul.f32.gmra.mxu0 %v80
    %v260 = vpop.f32.mrf.mxu0
    %v261 = vadd.f32 %v241, %v260
    %262 = vdwg.mxu0
    %263 = vmatpush.msra.mxu0 %v162
    %264 = vmatpush.msra.mxu0 %v161
    %265 = vmatpush.msra.mxu0 %v160
    %266 = vmatpush.msra.mxu0 %v159
    %267 = vmatpush.msra.mxu0 %v158
    %268 = vmatpush.msra.mxu0 %v157
    %269 = vmatpush.msra.mxu0 %v156
    %270 = vmatpush.msra.mxu0 %v155
    %271 = vmatpush.msra.mxu0 %v154
    %272 = vmatpush.msra.mxu0 %v153
    %273 = vmatpush.msra.mxu0 %v152
    %274 = vmatpush.msra.mxu0 %v151
    %275 = vmatpush.msra.mxu0 %v150
    %276 = vmatpush.msra.mxu0 %v149
    %277 = vmatpush.msra.mxu0 %v148
    %278 = vmatpush.msra.mxu0 %v147
    %279 = vmatmul.f32.gmra.mxu0 %v81
    %v280 = vpop.f32.mrf.mxu0
    %v281 = vadd.f32 %v261, %v280
    %282 = vdwg.mxu0
    %283 = vmatpush.msra.mxu0 %v178
    %284 = vmatpush.msra.mxu0 %v177
    %285 = vmatpush.msra.mxu0 %v176
    %286 = vmatpush.msra.mxu0 %v175
    %287 = vmatpush.msra.mxu0 %v174
    %288 = vmatpush.msra.mxu0 %v173
    %289 = vmatpush.msra.mxu0 %v172
    %290 = vmatpush.msra.mxu0 %v171
    %291 = vmatpush.msra.mxu0 %v170
    %292 = vmatpush.msra.mxu0 %v169
    %293 = vmatpush.msra.mxu0 %v168
    %294 = vmatpush.msra.mxu0 %v167
    %295 = vmatpush.msra.mxu0 %v166
    %296 = vmatpush.msra.mxu0 %v165
    %297 = vmatpush.msra.mxu0 %v164
    %298 = vmatpush.msra.mxu0 %v163
    %299 = vmatmul.f32.gmra.mxu0 %v82
    %v300 = vpop.f32.mrf.mxu0
    %v301 = vadd.f32 %v281, %v300
    %302 = vdwg.mxu0
    %v303 = vld [vmem:[#allocation6] sm:$0x1]
    %304 = vst [vmem:[%s5] sm:$0x1] %v303
    %v305 = vld [vmem:[#allocation7] sm:$0xf]
    %v306 = vadd.f32 %v301, %v305
    %307 = vst [vmem:[%s5 + $0x1] sm:$0xf] %v306
    %308 = vst [vmem:[%s5 + $0x5] sm:$0x7] 0.0
    %v309 = vld [vmem:[#allocation6] sm:$0x1]
    %310 = vst [vmem:[%s5 + $0x8] sm:$0x1] %v309
    %v311 = vld [vmem:[#allocation7] sm:$0xf]
    %v313 = vrot.slane %v311, 4
    %v315 = vadd.f32 %v301, %v313
    %316 = vst [vmem:[%s5 + $0x5] sm:$0xf0] %v315
    %317 = vst [vmem:[%s5 + $0xd] sm:$0x7] 0.0
    // Predicated region
    $region38: #{vit_forward.2} parent=1 // pred_check
      _
    $region39: #{vit_forward.2} parent=1 // pred_check_branch
      %319 = sbr.rel (0) target = $region41
    $region40: #{vit_forward.2} parent=1 // pred_region
      _
    $region41: #{vit_forward.2} parent=1 // pred_fallthru
      _
    // Predicated region
    $region42: #{vit_forward.2} parent=1 // pred_check
      _
    $region43: #{vit_forward.2} parent=1 // pred_check_branch
      %321 = sbr.rel (0) target = $region45
    $region44: #{vit_forward.2} parent=1 // pred_region
      _
    $region45: #{vit_forward.2} parent=1 // pred_fallthru
      _
    %322 = vsyncpa [#allocation3], 1
    %323 = vsyncpa [#allocation5], 1
    %324 = vsyncpa [#allocation8], 1

// kernel: vit_forward.3
$region0: #{vit_forward.3}
  #allocation0 [shape = 'u32[]', space=smem, size = 0x4, offset = 0x4, fixed_abs, tag = 'smem constant byte address 0x4 - core index']
  #allocation1 [shape = 'u32[72,128]{1,0:T(1,128)}', space=vmem, size = 0x9000, scoped, tag = 'internal scratch']
  #allocation2 [shape = 'f32[16,128]{1,0:T(8,128)}', space=vmem, size = 0x2000, scoped, tag = 'scratch operand']
  %s0 = inlined_call_operand.vmem [shape: f32[16,128], index: 0, kind: input, shape index: {}]
  %s1 = inlined_call_operand.vmem [shape: f32[2,12,128,32], index: 1, kind: input, shape index: {}]
  %s2 = inlined_call_operand.vmem [shape: f32[2,8,1,32], index: 2, kind: input, shape index: {}]
  %s3 = inlined_call_operand.vmem [shape: f32[2,4,32,128], index: 3, kind: input, shape index: {}]
  %s4 = inlined_call_operand.vmem [shape: f32[2,128,256], index: 4, kind: input, shape index: {}]
  %s5 = inlined_call_operand.vmem [shape: f32[2,256,128], index: 5, kind: input, shape index: {}]
  %s6 = inlined_call_operand.vmem [shape: f32[2,8,256], index: 6, kind: input, shape index: {}]
  %s7 = inlined_call_operand.vmem [shape: f32[16,16], index: 7, kind: input, shape index: {}]
  %s8 = inlined_call_operand.vmem [shape: f32[8,128], index: 8, kind: input, shape index: {}]
  %s9 = inlined_call_operand.vmem [shape: f32[128,128], index: 9, kind: input, shape index: {}]
  %s10 = inlined_call_operand.hbm [shape: f32[2,128], index: 10, kind: output, shape index: {}]
  %s11 = sld [smem:[#allocation0]]
  $region81: #{vit_forward.3} parent=0
    _
  %s13 = ssub.s32 1, %s11
  %s14 = scalar_select 0, %s13, %s11
  $region1: #{vit_forward.3} parent=0
    #allocation3 [shape = 'u8[1024]{0}', space=vmem, size = 0x400, scoped, tag = 'output window, operand 0, single buffered']
    #allocation4 [shape = 's32[2]{0}', space=sflag, size = 0x8, scoped, tag = 'scoped memory for vit_forward.3']
    %15 = vsyncpa [#allocation4], 0
    loop: start=0, step=1, limit=4
    $region2: #{vit_forward.3} parent=1 // loop_pre_header
      _
    $region3: #{vit_forward.3} parent=1 // loop_header
      %s17 = sphi 0, %s21
      %p18 = scmp.ge.s32.totalorder %s17, 4
      %s25 = sphi 0, %s25
      %s27 = sphi 0, %s25
      %s28 = sphi 0, %s27
      %s42 = sphi 0, %s28
      %s48 = sphi 0, %s50
      %s51 = sphi 0, %s48
      %s52 = sphi 0, %s51
      %s68 = sphi 0, %s52
      %s74 = sphi 0, %s76
      %s77 = sphi 0, %s74
      %s78 = sphi 0, %s77
      %s94 = sphi 0, %s78
      %s100 = sphi 0, %s102
      %s103 = sphi 0, %s100
      %s104 = sphi 0, %s103
      %s120 = sphi 0, %s104
      %s126 = sphi 0, %s128
      %s129 = sphi 0, %s126
      %s130 = sphi 0, %s129
      %s146 = sphi 0, %s130
      %s152 = sphi 0, %s154
      %s155 = sphi 0, %s152
      %s156 = sphi 0, %s155
      %s172 = sphi 0, %s156
      %s178 = sphi 0, %s180
      %s181 = sphi 0, %s178
      %s182 = sphi 0, %s181
      %s198 = sphi 0, %s182
      %s202 = sphi 0, %s202
      %s204 = sphi 0, %s202
      %s205 = sphi 0, %s204
      %s219 = sphi 0, %s205
      %s223 = sphi 0, %s223
      %s225 = sphi 0, %s223
      %s226 = sphi 0, %s225
      %s240 = sphi 0, %s226
      %s244 = sphi 0, %s244
      %s246 = sphi 0, %s244
      %s247 = sphi 0, %s246
      %s261 = sphi 0, %s247
      %s265 = sphi 0, %s265
      %s267 = sphi 0, %s265
      %s268 = sphi 0, %s267
      %s282 = sphi 0, %s268
    $region4: #{vit_forward.3} parent=1 // loop_header_branch
      %20 = sbr.rel (%p18) target = $region8
    $region5: #{vit_forward.3} parent=1 // loop_body
      %s22 = ssub.s32 %s17, 1
      %s23 = ssub.s32 %s17, 2
      %s24 = sadd.s32 %s17, 1
      %s26 = sadd.s32 %s25, 1
      %p29 = scmp.eq.s32.totalorder %s17, 1
      %p30 = scmp.ne.s32.totalorder %s25, %s27
      %p31 = scmp.eq.s32.totalorder %s17, 0
      %p32 = por %p30, %p31
      %p33 = scmp.ne.s32.totalorder %s25, %s27
      %p34 = scmp.eq.s32.totalorder %s22, 1
      %p35 = por %p33, %p34
      %p36 = scmp.ne.s32.totalorder %s27, %s28
      %p37 = scmp.eq.s32.totalorder %s22, 0
      %p38 = por %p36, %p37
      %p39 = scmp.ne.s32.totalorder %s27, %s28
      %p40 = scmp.eq.s32.totalorder %s23, 1
      %p41 = por %p39, %p40
      %p43 = scmp.ne.s32.totalorder %s28, %s42
      %p44 = scmp.eq.s32.totalorder %s23, 0
      %p45 = por %p43, %p44
      %s46 = ssub.s32 %s17, %s24
      %p47 = scmp.eq.s32.totalorder %s46, 0
      %s49 = sadd.s32 %s48, 1
      %s50 = scalar_select %p47, %s48, %s49
      %p53 = pneg %p47
      %p54 = scmp.eq.s32.totalorder %s17, 1
      %p55 = por %p53, %p54
      %p56 = scmp.ne.s32.totalorder %s48, %s51
      %p57 = scmp.eq.s32.totalorder %s17, 0
      %p58 = por %p56, %p57
      %p59 = scmp.ne.s32.totalorder %s48, %s51
      %p60 = scmp.eq.s32.totalorder %s22, 1
      %p61 = por %p59, %p60
      %p62 = scmp.ne.s32.totalorder %s51, %s52
      %p63 = scmp.eq.s32.totalorder %s22, 0
      %p64 = por %p62, %p63
      %p65 = scmp.ne.s32.totalorder %s51, %s52
      %p66 = scmp.eq.s32.totalorder %s23, 1
      %p67 = por %p65, %p66
      %p69 = scmp.ne.s32.totalorder %s52, %s68
      %p70 = scmp.eq.s32.totalorder %s23, 0
      %p71 = por %p69, %p70
      %s72 = ssub.s32 %s17, %s24
      %p73 = scmp.eq.s32.totalorder %s72, 0
      %s75 = sadd.s32 %s74, 1
      %s76 = scalar_select %p73, %s74, %s75
      %p79 = pneg %p73
      %p80 = scmp.eq.s32.totalorder %s17, 1
      %p81 = por %p79, %p80
      %p82 = scmp.ne.s32.totalorder %s74, %s77
      %p83 = scmp.eq.s32.totalorder %s17, 0
      %p84 = por %p82, %p83
      %p85 = scmp.ne.s32.totalorder %s74, %s77
      %p86 = scmp.eq.s32.totalorder %s22, 1
      %p87 = por %p85, %p86
      %p88 = scmp.ne.s32.totalorder %s77, %s78
      %p89 = scmp.eq.s32.totalorder %s22, 0
      %p90 = por %p88, %p89
      %p91 = scmp.ne.s32.totalorder %s77, %s78
      %p92 = scmp.eq.s32.totalorder %s23, 1
      %p93 = por %p91, %p92
      %p95 = scmp.ne.s32.totalorder %s78, %s94
      %p96 = scmp.eq.s32.totalorder %s23, 0
      %p97 = por %p95, %p96
      %s98 = ssub.s32 %s17, %s24
      %p99 = scmp.eq.s32.totalorder %s98, 0
      %s101 = sadd.s32 %s100, 1
      %s102 = scalar_select %p99, %s100, %s101
      %p105 = pneg %p99
      %p106 = scmp.eq.s32.totalorder %s17, 1
      %p107 = por %p105, %p106
      %p108 = scmp.ne.s32.totalorder %s100, %s103
      %p109 = scmp.eq.s32.totalorder %s17, 0
      %p110 = por %p108, %p109
      %p111 = scmp.ne.s32.totalorder %s100, %s103
      %p112 = scmp.eq.s32.totalorder %s22, 1
      %p113 = por %p111, %p112
      %p114 = scmp.ne.s32.totalorder %s103, %s104
      %p115 = scmp.eq.s32.totalorder %s22, 0
      %p116 = por %p114, %p115
      %p117 = scmp.ne.s32.totalorder %s103, %s104
      %p118 = scmp.eq.s32.totalorder %s23, 1
      %p119 = por %p117, %p118
      %p121 = scmp.ne.s32.totalorder %s104, %s120
      %p122 = scmp.eq.s32.totalorder %s23, 0
      %p123 = por %p121, %p122
      %s124 = ssub.s32 %s17, %s24
      %p125 = scmp.eq.s32.totalorder %s124, 0
      %s127 = sadd.s32 %s126, 1
      %s128 = scalar_select %p125, %s126, %s127
      %p131 = pneg %p125
      %p132 = scmp.eq.s32.totalorder %s17, 1
      %p133 = por %p131, %p132
      %p134 = scmp.ne.s32.totalorder %s126, %s129
      %p135 = scmp.eq.s32.totalorder %s17, 0
      %p136 = por %p134, %p135
      %p137 = scmp.ne.s32.totalorder %s126, %s129
      %p138 = scmp.eq.s32.totalorder %s22, 1
      %p139 = por %p137, %p138
      %p140 = scmp.ne.s32.totalorder %s129, %s130
      %p141 = scmp.eq.s32.totalorder %s22, 0
      %p142 = por %p140, %p141
      %p143 = scmp.ne.s32.totalorder %s129, %s130
      %p144 = scmp.eq.s32.totalorder %s23, 1
      %p145 = por %p143, %p144
      %p147 = scmp.ne.s32.totalorder %s130, %s146
      %p148 = scmp.eq.s32.totalorder %s23, 0
      %p149 = por %p147, %p148
      %s150 = ssub.s32 %s17, %s24
      %p151 = scmp.eq.s32.totalorder %s150, 0
      %s153 = sadd.s32 %s152, 1
      %s154 = scalar_select %p151, %s152, %s153
      %p157 = pneg %p151
      %p158 = scmp.eq.s32.totalorder %s17, 1
      %p159 = por %p157, %p158
      %p160 = scmp.ne.s32.totalorder %s152, %s155
      %p161 = scmp.eq.s32.totalorder %s17, 0
      %p162 = por %p160, %p161
      %p163 = scmp.ne.s32.totalorder %s152, %s155
      %p164 = scmp.eq.s32.totalorder %s22, 1
      %p165 = por %p163, %p164
      %p166 = scmp.ne.s32.totalorder %s155, %s156
      %p167 = scmp.eq.s32.totalorder %s22, 0
      %p168 = por %p166, %p167
      %p169 = scmp.ne.s32.totalorder %s155, %s156
      %p170 = scmp.eq.s32.totalorder %s23, 1
      %p171 = por %p169, %p170
      %p173 = scmp.ne.s32.totalorder %s156, %s172
      %p174 = scmp.eq.s32.totalorder %s23, 0
      %p175 = por %p173, %p174
      %s176 = ssub.s32 %s17, %s24
      %p177 = scmp.eq.s32.totalorder %s176, 0
      %s179 = sadd.s32 %s178, 1
      %s180 = scalar_select %p177, %s178, %s179
      %p183 = pneg %p177
      %p184 = scmp.eq.s32.totalorder %s17, 1
      %p185 = por %p183, %p184
      %p186 = scmp.ne.s32.totalorder %s178, %s181
      %p187 = scmp.eq.s32.totalorder %s17, 0
      %p188 = por %p186, %p187
      %p189 = scmp.ne.s32.totalorder %s178, %s181
      %p190 = scmp.eq.s32.totalorder %s22, 1
      %p191 = por %p189, %p190
      %p192 = scmp.ne.s32.totalorder %s181, %s182
      %p193 = scmp.eq.s32.totalorder %s22, 0
      %p194 = por %p192, %p193
      %p195 = scmp.ne.s32.totalorder %s181, %s182
      %p196 = scmp.eq.s32.totalorder %s23, 1
      %p197 = por %p195, %p196
      %p199 = scmp.ne.s32.totalorder %s182, %s198
      %p200 = scmp.eq.s32.totalorder %s23, 0
      %p201 = por %p199, %p200
      %s203 = sadd.s32 %s202, 1
      %p206 = scmp.eq.s32.totalorder %s17, 1
      %p207 = scmp.ne.s32.totalorder %s202, %s204
      %p208 = scmp.eq.s32.totalorder %s17, 0
      %p209 = por %p207, %p208
      %p210 = scmp.ne.s32.totalorder %s202, %s204
      %p211 = scmp.eq.s32.totalorder %s22, 1
      %p212 = por %p210, %p211
      %p213 = scmp.ne.s32.totalorder %s204, %s205
      %p214 = scmp.eq.s32.totalorder %s22, 0
      %p215 = por %p213, %p214
      %p216 = scmp.ne.s32.totalorder %s204, %s205
      %p217 = scmp.eq.s32.totalorder %s23, 1
      %p218 = por %p216, %p217
      %p220 = scmp.ne.s32.totalorder %s205, %s219
      %p221 = scmp.eq.s32.totalorder %s23, 0
      %p222 = por %p220, %p221
      %s224 = sadd.s32 %s223, 1
      %p227 = scmp.eq.s32.totalorder %s17, 1
      %p228 = scmp.ne.s32.totalorder %s223, %s225
      %p229 = scmp.eq.s32.totalorder %s17, 0
      %p230 = por %p228, %p229
      %p231 = scmp.ne.s32.totalorder %s223, %s225
      %p232 = scmp.eq.s32.totalorder %s22, 1
      %p233 = por %p231, %p232
      %p234 = scmp.ne.s32.totalorder %s225, %s226
      %p235 = scmp.eq.s32.totalorder %s22, 0
      %p236 = por %p234, %p235
      %p237 = scmp.ne.s32.totalorder %s225, %s226
      %p238 = scmp.eq.s32.totalorder %s23, 1
      %p239 = por %p237, %p238
      %p241 = scmp.ne.s32.totalorder %s226, %s240
      %p242 = scmp.eq.s32.totalorder %s23, 0
      %p243 = por %p241, %p242
      %s245 = sadd.s32 %s244, 1
      %p248 = scmp.eq.s32.totalorder %s17, 1
      %p249 = scmp.ne.s32.totalorder %s244, %s246
      %p250 = scmp.eq.s32.totalorder %s17, 0
      %p251 = por %p249, %p250
      %p252 = scmp.ne.s32.totalorder %s244, %s246
      %p253 = scmp.eq.s32.totalorder %s22, 1
      %p254 = por %p252, %p253
      %p255 = scmp.ne.s32.totalorder %s246, %s247
      %p256 = scmp.eq.s32.totalorder %s22, 0
      %p257 = por %p255, %p256
      %p258 = scmp.ne.s32.totalorder %s246, %s247
      %p259 = scmp.eq.s32.totalorder %s23, 1
      %p260 = por %p258, %p259
      %p262 = scmp.ne.s32.totalorder %s247, %s261
      %p263 = scmp.eq.s32.totalorder %s23, 0
      %p264 = por %p262, %p263
      %s266 = sadd.s32 %s265, 1
      %p269 = scmp.eq.s32.totalorder %s17, 1
      %p270 = scmp.ne.s32.totalorder %s265, %s267
      %p271 = scmp.eq.s32.totalorder %s17, 0
      %p272 = por %p270, %p271
      %p273 = scmp.ne.s32.totalorder %s265, %s267
      %p274 = scmp.eq.s32.totalorder %s22, 1
      %p275 = por %p273, %p274
      %p276 = scmp.ne.s32.totalorder %s267, %s268
      %p277 = scmp.eq.s32.totalorder %s22, 0
      %p278 = por %p276, %p277
      %p279 = scmp.ne.s32.totalorder %s267, %s268
      %p280 = scmp.eq.s32.totalorder %s23, 1
      %p281 = por %p279, %p280
      %p283 = scmp.ne.s32.totalorder %s268, %s282
      %p284 = scmp.eq.s32.totalorder %s23, 0
      %p285 = por %p283, %p284
      %p286 = scmp.le.s32.totalorder 1, %s17
      %p287 = scmp.lt.s32.totalorder %s17, 3
      %p288 = pnand %p286, %p287
      %p289 = pneg %p288
      // Predicated region
      $region9: #{vit_forward.3} parent=5 // pred_check
        _
      $region10: #{vit_forward.3} parent=5 // pred_check_branch
        %291 = sbr.rel (%p288) target = $region12
      $region11: #{vit_forward.3} parent=5 // pred_region
        %s292 = ssub.s32 %s17, 1
        // Predicated region
        $region13: #{vit_forward.3} parent=11 // pred_check
          %p293 = pneg %p38
        $region14: #{vit_forward.3} parent=11 // pred_check_branch
          %295 = sbr.rel (%p293) target = $region16
        $region15: #{vit_forward.3} parent=11 // pred_region
          _
        $region16: #{vit_forward.3} parent=11 // pred_fallthru
          _
        // Predicated region
        $region17: #{vit_forward.3} parent=11 // pred_check
          %p296 = pneg %p215
        $region18: #{vit_forward.3} parent=11 // pred_check_branch
          %298 = sbr.rel (%p296) target = $region20
        $region19: #{vit_forward.3} parent=11 // pred_region
          _
        $region20: #{vit_forward.3} parent=11 // pred_fallthru
          _
        // Predicated region
        $region21: #{vit_forward.3} parent=11 // pred_check
          %p299 = pneg %p236
        $region22: #{vit_forward.3} parent=11 // pred_check_branch
          %301 = sbr.rel (%p299) target = $region24
        $region23: #{vit_forward.3} parent=11 // pred_region
          _
        $region24: #{vit_forward.3} parent=11 // pred_fallthru
          _
        // Predicated region
        $region25: #{vit_forward.3} parent=11 // pred_check
          %p302 = pneg %p257
        $region26: #{vit_forward.3} parent=11 // pred_check_branch
          %304 = sbr.rel (%p302) target = $region28
        $region27: #{vit_forward.3} parent=11 // pred_region
          _
        $region28: #{vit_forward.3} parent=11 // pred_fallthru
          _
      $region12: #{vit_forward.3} parent=5 // pred_fallthru
        _
      %p305 = scmp.lt.s32.totalorder %s17, 2
      // Predicated region
      $region29: #{vit_forward.3} parent=5 // pred_check
        %p306 = pneg %p305
      $region30: #{vit_forward.3} parent=5 // pred_check_branch
        %308 = sbr.rel (%p306) target = $region32
      $region31: #{vit_forward.3} parent=5 // pred_region
        // Predicated region
        $region33: #{vit_forward.3} parent=31 // pred_check
          %p309 = pneg %p58
        $region34: #{vit_forward.3} parent=31 // pred_check_branch
          %311 = sbr.rel (%p309) target = $region36
        $region35: #{vit_forward.3} parent=31 // pred_region
          %p312 = scmp.lt.s32.totalorder %s17, 1
          %s313 = scalar_select %p312, %s17, 1
          %s314 = smul.addr %s313, 192
          %s315 = smul.addr %s314, 8
          %s316 = scalar_lea.vmem %s1, %s315
        $region36: #{vit_forward.3} parent=31 // pred_fallthru
          _
        // Predicated region
        $region37: #{vit_forward.3} parent=31 // pred_check
          %p317 = pneg %p84
        $region38: #{vit_forward.3} parent=31 // pred_check_branch
          %319 = sbr.rel (%p317) target = $region40
        $region39: #{vit_forward.3} parent=31 // pred_region
          %p320 = scmp.lt.s32.totalorder %s17, 1
          %s321 = scalar_select %p320, %s17, 1
          %s322 = smul.addr %s321, 8
          %s323 = scalar_lea.vmem %s2, %s322
        $region40: #{vit_forward.3} parent=31 // pred_fallthru
          _
        // Predicated region
        $region41: #{vit_forward.3} parent=31 // pred_check
          %p324 = pneg %p110
        $region42: #{vit_forward.3} parent=31 // pred_check_branch
          %326 = sbr.rel (%p324) target = $region44
        $region43: #{vit_forward.3} parent=31 // pred_region
          %p327 = scmp.lt.s32.totalorder %s17, 1
          %s328 = scalar_select %p327, %s17, 1
          %s329 = smul.addr %s328, 16
          %s330 = smul.addr %s329, 8
          %s331 = scalar_lea.vmem %s3, %s330
        $region44: #{vit_forward.3} parent=31 // pred_fallthru
          _
        // Predicated region
        $region45: #{vit_forward.3} parent=31 // pred_check
          %p332 = pneg %p136
        $region46: #{vit_forward.3} parent=31 // pred_check_branch
          %334 = sbr.rel (%p332) target = $region48
        $region47: #{vit_forward.3} parent=31 // pred_region
          %p335 = scmp.lt.s32.totalorder %s17, 1
          %s336 = scalar_select %p335, %s17, 1
          %s337 = smul.addr %s336, 32
          %s338 = smul.addr %s337, 8
          %s339 = scalar_lea.vmem %s4, %s338
        $region48: #{vit_forward.3} parent=31 // pred_fallthru
          _
        // Predicated region
        $region49: #{vit_forward.3} parent=31 // pred_check
          %p340 = pneg %p162
        $region50: #{vit_forward.3} parent=31 // pred_check_branch
          %342 = sbr.rel (%p340) target = $region52
        $region51: #{vit_forward.3} parent=31 // pred_region
          %p343 = scmp.lt.s32.totalorder %s17, 1
          %s344 = scalar_select %p343, %s17, 1
          %s345 = smul.addr %s344, 32
          %s346 = smul.addr %s345, 8
          %s347 = scalar_lea.vmem %s5, %s346
        $region52: #{vit_forward.3} parent=31 // pred_fallthru
          _
        // Predicated region
        $region53: #{vit_forward.3} parent=31 // pred_check
          %p348 = pneg %p188
        $region54: #{vit_forward.3} parent=31 // pred_check_branch
          %350 = sbr.rel (%p348) target = $region56
        $region55: #{vit_forward.3} parent=31 // pred_region
          %p351 = scmp.lt.s32.totalorder %s17, 1
          %s352 = scalar_select %p351, %s17, 1
          %s353 = smul.addr %s352, 2
          %s354 = smul.addr %s353, 8
          %s355 = scalar_lea.vmem %s6, %s354
        $region56: #{vit_forward.3} parent=31 // pred_fallthru
          _
      $region32: #{vit_forward.3} parent=5 // pred_fallthru
        _
      %p356 = scmp.le.s32.totalorder 1, %s17
      %p357 = scmp.lt.s32.totalorder %s17, 3
      %p358 = pnand %p356, %p357
      %p359 = pneg %p358
      // Predicated region
      $region57: #{vit_forward.3} parent=5 // pred_check
        _
      $region58: #{vit_forward.3} parent=5 // pred_check_branch
        %361 = sbr.rel (%p358) target = $region60
      $region59: #{vit_forward.3} parent=5 // pred_region
        %s362 = ssub.s32 %s17, 1
        %p363 = pneg %p38
        %p364 = pneg %p35
        %p365 = scmp.lt.s32.totalorder %s22, 1
        %s366 = scalar_select %p365, %s22, 1
        %s367 = smul.addr %s366, 192
        %s368 = smul.addr %s367, 8
        %s369 = scalar_lea.vmem %s1, %s368
        %p370 = pneg %p64
        %p371 = pneg %p61
        %p372 = scmp.lt.s32.totalorder %s22, 1
        %s373 = scalar_select %p372, %s22, 1
        %s374 = smul.addr %s373, 8
        %s375 = scalar_lea.vmem %s2, %s374
        %p376 = pneg %p90
        %p377 = pneg %p87
        %p378 = scmp.lt.s32.totalorder %s22, 1
        %s379 = scalar_select %p378, %s22, 1
        %s380 = smul.addr %s379, 16
        %s381 = smul.addr %s380, 8
        %s382 = scalar_lea.vmem %s3, %s381
        %p383 = pneg %p116
        %p384 = pneg %p113
        %p385 = scmp.lt.s32.totalorder %s22, 1
        %s386 = scalar_select %p385, %s22, 1
        %s387 = smul.addr %s386, 32
        %s388 = smul.addr %s387, 8
        %s389 = scalar_lea.vmem %s4, %s388
        %p390 = pneg %p142
        %p391 = pneg %p139
        %p392 = scmp.lt.s32.totalorder %s22, 1
        %s393 = scalar_select %p392, %s22, 1
        %s394 = smul.addr %s393, 32
        %s395 = smul.addr %s394, 8
        %s396 = scalar_lea.vmem %s5, %s395
        %p397 = pneg %p168
        %p398 = pneg %p165
        %p399 = scmp.lt.s32.totalorder %s22, 1
        %s400 = scalar_select %p399, %s22, 1
        %s401 = smul.addr %s400, 2
        %s402 = smul.addr %s401, 8
        %s403 = scalar_lea.vmem %s6, %s402
        %p404 = pneg %p194
        %p405 = pneg %p191
        %p406 = pneg %p215
        %p407 = pneg %p212
        %p408 = pneg %p236
        %p409 = pneg %p233
        %p410 = pneg %p257
        %p411 = pneg %p254
        %p412 = pneg %p278
        %p413 = pneg %p275
        %p414 = scmp.lt.s32.totalorder %s22, 1
        %s415 = scalar_select %p414, %s22, 1
        %s416 = smul.addr %s415, 192
        %s417 = smul.addr %s416, 8
        %s418 = scalar_lea.vmem %s1, %s417
        %p419 = scmp.lt.s32.totalorder %s22, 1
        %s420 = scalar_select %p419, %s22, 1
        %s421 = smul.addr %s420, 8
        %s422 = scalar_lea.vmem %s2, %s421
        %p423 = scmp.lt.s32.totalorder %s22, 1
        %s424 = scalar_select %p423, %s22, 1
        %s425 = smul.addr %s424, 16
        %s426 = smul.addr %s425, 8
        %s427 = scalar_lea.vmem %s3, %s426
        %p428 = scmp.lt.s32.totalorder %s22, 1
        %s429 = scalar_select %p428, %s22, 1
        %s430 = smul.addr %s429, 32
        %s431 = smul.addr %s430, 8
        %s432 = scalar_lea.vmem %s4, %s431
        %p433 = scmp.lt.s32.totalorder %s22, 1
        %s434 = scalar_select %p433, %s22, 1
        %s435 = smul.addr %s434, 32
        %s436 = smul.addr %s435, 8
        %s437 = scalar_lea.vmem %s5, %s436
        %p438 = scmp.lt.s32.totalorder %s22, 1
        %s439 = scalar_select %p438, %s22, 1
        %s440 = smul.addr %s439, 2
        %s441 = smul.addr %s440, 8
        %s442 = scalar_lea.vmem %s6, %s441
        %p443 = scmp.eq.s32.totalorder %s22, 0
        // Predicated region
        $region61: #{vit_forward.3} parent=59 // pred_check
          %p444 = pneg %p443
        $region62: #{vit_forward.3} parent=59 // pred_check_branch
          %446 = sbr.rel (%p444) target = $region64
        $region63: #{vit_forward.3} parent=59 // pred_region
          %v447 = vld [vmem:[%s0] sm:$0xff]
          %v448 = vld [vmem:[%s0 + $0x8] sm:$0xff]
          %449 = vst [vmem:[#allocation2] sm:$0xff] %v447
          %450 = vst [vmem:[#allocation2 + $0x8] sm:$0xff] %v448
        $region64: #{vit_forward.3} parent=59 // pred_fallthru
          _
        %v451 = vld [vmem:[#allocation2] sm:$0xff]
        %v452 = vld [vmem:[#allocation2 + $0x8] sm:$0xff]
        %v453 = vld [vmem:[%s7] sm:$0xff]
        %v454 = vld [vmem:[%s7 + $0x8] sm:$0xff]
        %v455 = vld [vmem:[%s442] sm:$0xff]
        %v456 = vld [vmem:[%s442 + $0x8] sm:$0xff]
        %457 = vadd.xlane.f32.xlu0 %v451
        %v458 = vpop.xlane.xlu0 %457
        %459 = vadd.xlane.f32.xlu0 %v452
        %v460 = vpop.xlane.xlu0 %459
        %v461 = vrcp.pop 128.0
        %v462 = vmul.f32 128.0, %v461
        %v463 = vsub.f32 1.0, %v462
        %v464 = vmul.f32 %v461, %v463
        %v465 = vadd.f32 %v461, %v464
        %vm466 = vweird.f32 %v461
        %v467 = vsel %vm466, %v461, %v465
        %v468 = vmul.f32 %v458, %v467
        %v469 = vmul.f32 %v460, %v467
        %v470 = vsub.f32 %v451, %v468
        %v471 = vsub.f32 %v452, %v469
        %v472 = vmul.f32 %v470, %v470
        %v473 = vmul.f32 %v471, %v471
        %474 = vadd.xlane.f32.xlu0 %v472
        %v475 = vpop.xlane.xlu0 %474
        %476 = vadd.xlane.f32.xlu0 %v473
        %v477 = vpop.xlane.xlu0 %476
        %v478 = vmul.f32 %v475, %v467
        %v479 = vmul.f32 %v477, %v467
        %v480 = vadd.f32 %v478, 1e-06
        %v481 = vadd.f32 %v479, 1e-06
        %v482 = vrsqrt.pop %v480
        %v483 = vmul.f32 %v482, %v480
        %v484 = vmul.f32 %v483, %v482
        %v485 = vmul.f32 0.5, %v484
        %v486 = vsub.f32 1.5, %v485
        %v487 = vmul.f32 %v482, %v486
        %vm488 = vweird.f32 %v480
        %vm489 = vweird.f32 %v482
        %vm490 = vmor %vm488, %vm489
        %v491 = vsel %vm490, %v482, %v487
        %v492 = vrsqrt.pop %v481
        %v493 = vmul.f32 %v492, %v481
        %v494 = vmul.f32 %v493, %v492
        %v495 = vmul.f32 0.5, %v494
        %v496 = vsub.f32 1.5, %v495
        %v497 = vmul.f32 %v492, %v496
        %vm498 = vweird.f32 %v481
        %vm499 = vweird.f32 %v492
        %vm500 = vmor %vm498, %vm499
        %v501 = vsel %vm500, %v492, %v497
        %v502 = vmul.f32 %v470, %v491
        %v503 = vmul.f32 %v471, %v501
        %v504 = vperm.slane %v455, 0
        %v505 = vmul.f32 %v502, %v504
        %v506 = vmul.f32 %v503, %v504
        %v507 = vperm.slane %v455, 1
        %v508 = vadd.f32 %v505, %v507
        %v509 = vadd.f32 %v506, %v507
        %v510 = vld [vmem:[%s418] sm:$0xff]
        %v511 = vld [vmem:[%s418 + $0x8] sm:$0xff]
        %v512 = vld [vmem:[%s418 + $0x10] sm:$0xff]
        %v513 = vld [vmem:[%s418 + $0x18] sm:$0xff]
        %v514 = vld [vmem:[%s418 + $0x20] sm:$0xff]
        %v515 = vld [vmem:[%s418 + $0x28] sm:$0xff]
        %v516 = vld [vmem:[%s418 + $0x30] sm:$0xff]
        %v517 = vld [vmem:[%s418 + $0x38] sm:$0xff]
        %v518 = vld [vmem:[%s418 + $0x40] sm:$0xff]
        %v519 = vld [vmem:[%s418 + $0x48] sm:$0xff]
        %v520 = vld [vmem:[%s418 + $0x50] sm:$0xff]
        %v521 = vld [vmem:[%s418 + $0x58] sm:$0xff]
        %v522 = vld [vmem:[%s418 + $0x60] sm:$0xff]
        %v523 = vld [vmem:[%s418 + $0x68] sm:$0xff]
        %v524 = vld [vmem:[%s418 + $0x70] sm:$0xff]
        %v525 = vld [vmem:[%s418 + $0x78] sm:$0xff]
        %v526 = vld [vmem:[%s422] sm:$0x1]
        %v528 = vperm.slane %v526, 0
        %530 = vmatpush.msra.mxu0 %v525
        %531 = vmatpush.msra.mxu0 %v524
        %532 = vmatpush.msra.mxu0 %v523
        %533 = vmatpush.msra.mxu0 %v522
        %534 = vmatpush.msra.mxu0 %v521
        %535 = vmatpush.msra.mxu0 %v520
        %536 = vmatpush.msra.mxu0 %v519
        %537 = vmatpush.msra.mxu0 %v518
        %538 = vmatpush.msra.mxu0 %v517
        %539 = vmatpush.msra.mxu0 %v516
        %540 = vmatpush.msra.mxu0 %v515
        %541 = vmatpush.msra.mxu0 %v514
        %542 = vmatpush.msra.mxu0 %v513
        %543 = vmatpush.msra.mxu0 %v512
        %544 = vmatpush.msra.mxu0 %v511
        %545 = vmatpush.msra.mxu0 %v510
        %546 = vmatmul.f32.gmra.mxu0 %v508
        %v547 = vpop.f32.mrf.mxu0
        %v548 = vadd.f32 %v528, %v547
        %549 = vmatmul.f32.gmra.mxu0 %v509
        %v550 = vpop.f32.mrf.mxu0
        %v551 = vadd.f32 %v528, %v550
        %552 = vdwg.mxu0
        %s553 = scalar_lea.vmem %s418, 512
        %v554 = vld [vmem:[%s553] sm:$0xff]
        %v555 = vld [vmem:[%s553 + $0x8] sm:$0xff]
        %v556 = vld [vmem:[%s553 + $0x10] sm:$0xff]
        %v557 = vld [vmem:[%s553 + $0x18] sm:$0xff]
        %v558 = vld [vmem:[%s553 + $0x20] sm:$0xff]
        %v559 = vld [vmem:[%s553 + $0x28] sm:$0xff]
        %v560 = vld [vmem:[%s553 + $0x30] sm:$0xff]
        %v561 = vld [vmem:[%s553 + $0x38] sm:$0xff]
        %v562 = vld [vmem:[%s553 + $0x40] sm:$0xff]
        %v563 = vld [vmem:[%s553 + $0x48] sm:$0xff]
        %v564 = vld [vmem:[%s553 + $0x50] sm:$0xff]
        %v565 = vld [vmem:[%s553 + $0x58] sm:$0xff]
        %v566 = vld [vmem:[%s553 + $0x60] sm:$0xff]
        %v567 = vld [vmem:[%s553 + $0x68] sm:$0xff]
        %v568 = vld [vmem:[%s553 + $0x70] sm:$0xff]
        %v569 = vld [vmem:[%s553 + $0x78] sm:$0xff]
        %570 = vmatpush.msra.mxu0 %v569
        %571 = vmatpush.msra.mxu0 %v568
        %572 = vmatpush.msra.mxu0 %v567
        %573 = vmatpush.msra.mxu0 %v566
        %574 = vmatpush.msra.mxu0 %v565
        %575 = vmatpush.msra.mxu0 %v564
        %576 = vmatpush.msra.mxu0 %v563
        %577 = vmatpush.msra.mxu0 %v562
        %578 = vmatpush.msra.mxu0 %v561
        %579 = vmatpush.msra.mxu0 %v560
        %580 = vmatpush.msra.mxu0 %v559
        %581 = vmatpush.msra.mxu0 %v558
        %582 = vmatpush.msra.mxu0 %v557
        %583 = vmatpush.msra.mxu0 %v556
        %584 = vmatpush.msra.mxu0 %v555
        %585 = vmatpush.msra.mxu0 %v554
        %586 = vmatmul.f32.gmra.mxu0 %v508
        %v587 = vpop.f32.mrf.mxu0
        %v588 = vadd.f32 0.0, %v587
        %589 = vmatmul.f32.gmra.mxu0 %v509
        %v590 = vpop.f32.mrf.mxu0
        %v591 = vadd.f32 0.0, %v590
        %592 = vdwg.mxu0
        %s593 = scalar_lea.vmem %s418, 1024
        %v594 = vld [vmem:[%s593] sm:$0xff]
        %v595 = vld [vmem:[%s593 + $0x8] sm:$0xff]
        %v596 = vld [vmem:[%s593 + $0x10] sm:$0xff]
        %v597 = vld [vmem:[%s593 + $0x18] sm:$0xff]
        %v598 = vld [vmem:[%s593 + $0x20] sm:$0xff]
        %v599 = vld [vmem:[%s593 + $0x28] sm:$0xff]
        %v600 = vld [vmem:[%s593 + $0x30] sm:$0xff]
        %v601 = vld [vmem:[%s593 + $0x38] sm:$0xff]
        %v602 = vld [vmem:[%s593 + $0x40] sm:$0xff]
        %v603 = vld [vmem:[%s593 + $0x48] sm:$0xff]
        %v604 = vld [vmem:[%s593 + $0x50] sm:$0xff]
        %v605 = vld [vmem:[%s593 + $0x58] sm:$0xff]
        %v606 = vld [vmem:[%s593 + $0x60] sm:$0xff]
        %v607 = vld [vmem:[%s593 + $0x68] sm:$0xff]
        %v608 = vld [vmem:[%s593 + $0x70] sm:$0xff]
        %v609 = vld [vmem:[%s593 + $0x78] sm:$0xff]
        %s610 = scalar_lea.vmem %s422, 4
        %v611 = vld [vmem:[%s610] sm:$0x1]
        %v613 = vperm.slane %v611, 0
        %615 = vmatpush.msra.mxu0 %v609
        %616 = vmatpush.msra.mxu0 %v608
        %617 = vmatpush.msra.mxu0 %v607
        %618 = vmatpush.msra.mxu0 %v606
        %619 = vmatpush.msra.mxu0 %v605
        %620 = vmatpush.msra.mxu0 %v604
        %621 = vmatpush.msra.mxu0 %v603
        %622 = vmatpush.msra.mxu0 %v602
        %623 = vmatpush.msra.mxu0 %v601
        %624 = vmatpush.msra.mxu0 %v600
        %625 = vmatpush.msra.mxu0 %v599
        %626 = vmatpush.msra.mxu0 %v598
        %627 = vmatpush.msra.mxu0 %v597
        %628 = vmatpush.msra.mxu0 %v596
        %629 = vmatpush.msra.mxu0 %v595
        %630 = vmatpush.msra.mxu0 %v594
        %631 = vmatmul.f32.gmra.mxu0 %v508
        %v632 = vpop.f32.mrf.mxu0
        %v633 = vadd.f32 %v613, %v632
        %634 = vmatmul.f32.gmra.mxu0 %v509
        %v635 = vpop.f32.mrf.mxu0
        %v636 = vadd.f32 %v613, %v635
        %637 = vdwg.mxu0
        %vm638 = vcmask 261120
        %v640 = vsel %vm638, %v548, 0
        %v643 = vsel %vm638, %v551, 0
        %v646 = vsel %vm638, %v588, 0
        %v649 = vsel %vm638, %v591, 0
        %651 = vmatpush.xpose.msra.mxu0 0.0
        %652 = vmatpush.xpose.msra.mxu0 0.0
        %653 = vmatpush.xpose.msra.mxu0 0.0
        %654 = vmatpush.xpose.msra.mxu0 0.0
        %655 = vmatpush.xpose.msra.mxu0 0.0
        %656 = vmatpush.xpose.msra.mxu0 0.0
        %657 = vmatpush.xpose.msra.mxu0 0.0
        %658 = vmatpush.xpose.msra.mxu0 0.0
        %659 = vmatpush.xpose.msra.mxu0 0.0
        %660 = vmatpush.xpose.msra.mxu0 0.0
        %661 = vmatpush.xpose.msra.mxu0 0.0
        %662 = vmatpush.xpose.msra.mxu0 0.0
        %663 = vmatpush.xpose.msra.mxu0 0.0
        %664 = vmatpush.xpose.msra.mxu0 0.0
        %665 = vmatpush.xpose.msra.mxu0 %v649
        %666 = vmatpush.xpose.msra.mxu0 %v646
        %667 = vmatmul.f32.gmra.mxu0 %v640
        %v668 = vpop.f32.mrf.mxu0
        %v669 = vadd.f32 %v453, %v668
        %670 = vmatmul.f32.gmra.mxu0 %v643
        %v671 = vpop.f32.mrf.mxu0
        %v672 = vadd.f32 %v454, %v671
        %673 = vdwg.mxu0
        %vm674 = vcmask 130048
        %v675 = vsel %vm674, %v669, -inf
        %676 = vmax.xlane.f32.xlu0 %v675
        %v677 = vpop.xlane.xlu0 %676
        %v678 = vsel %vm674, %v672, -inf
        %679 = vmax.xlane.f32.xlu0 %v678
        %v680 = vpop.xlane.xlu0 %679
        %v681 = vsub.f32 %v669, %v677
        %v682 = vsub.f32 %v672, %v680
        %v683 = vmul.f32 %v681, 1.442695
        %v684 = vpow.pop %v683
        %v685 = vmul.f32 %v682, 1.442695
        %v686 = vpow.pop %v685
        %v687 = vsel %vm674, %v684, 0.0
        %688 = vadd.xlane.f32.xlu0 %v687
        %v689 = vpop.xlane.xlu0 %688
        %v690 = vsel %vm674, %v686, 0.0
        %691 = vadd.xlane.f32.xlu0 %v690
        %v692 = vpop.xlane.xlu0 %691
        %v693 = vrcp.pop %v689
        %v694 = vrcp.pop %v692
        %v695 = vmul.f32 %v684, %v693
        %v696 = vmul.f32 %v686, %v694
        %v698 = vsel %vm674, %v695, 0
        %v701 = vsel %vm674, %v696, 0
        %703 = vmatpush.msra.mxu0 0.0
        %704 = vmatpush.msra.mxu0 0.0
        %705 = vmatpush.msra.mxu0 0.0
        %706 = vmatpush.msra.mxu0 0.0
        %707 = vmatpush.msra.mxu0 0.0
        %708 = vmatpush.msra.mxu0 0.0
        %709 = vmatpush.msra.mxu0 0.0
        %710 = vmatpush.msra.mxu0 0.0
        %711 = vmatpush.msra.mxu0 0.0
        %712 = vmatpush.msra.mxu0 0.0
        %713 = vmatpush.msra.mxu0 0.0
        %714 = vmatpush.msra.mxu0 0.0
        %715 = vmatpush.msra.mxu0 0.0
        %716 = vmatpush.msra.mxu0 0.0
        %717 = vmatpush.msra.mxu0 %v636
        %718 = vmatpush.msra.mxu0 %v633
        %719 = vmatmul.f32.gmra.mxu0 %v698
        %v720 = vpop.f32.mrf.mxu0
        %v721 = vadd.f32 0.0, %v720
        %722 = vmatmul.f32.gmra.mxu0 %v701
        %v723 = vpop.f32.mrf.mxu0
        %v724 = vadd.f32 0.0, %v723
        %725 = vdwg.mxu0
        %v726 = vld [vmem:[%s427] sm:$0xff]
        %v727 = vld [vmem:[%s427 + $0x8] sm:$0xff]
        %v728 = vld [vmem:[%s427 + $0x10] sm:$0xff]
        %v729 = vld [vmem:[%s427 + $0x18] sm:$0xff]
        %s730 = scalar_lea.vmem %s418, 128
        %v731 = vld [vmem:[%s730] sm:$0xff]
        %v732 = vld [vmem:[%s730 + $0x8] sm:$0xff]
        %v733 = vld [vmem:[%s730 + $0x10] sm:$0xff]
        %v734 = vld [vmem:[%s730 + $0x18] sm:$0xff]
        %v735 = vld [vmem:[%s730 + $0x20] sm:$0xff]
        %v736 = vld [vmem:[%s730 + $0x28] sm:$0xff]
        %v737 = vld [vmem:[%s730 + $0x30] sm:$0xff]
        %v738 = vld [vmem:[%s730 + $0x38] sm:$0xff]
        %v739 = vld [vmem:[%s730 + $0x40] sm:$0xff]
        %v740 = vld [vmem:[%s730 + $0x48] sm:$0xff]
        %v741 = vld [vmem:[%s730 + $0x50] sm:$0xff]
        %v742 = vld [vmem:[%s730 + $0x58] sm:$0xff]
        %v743 = vld [vmem:[%s730 + $0x60] sm:$0xff]
        %v744 = vld [vmem:[%s730 + $0x68] sm:$0xff]
        %v745 = vld [vmem:[%s730 + $0x70] sm:$0xff]
        %v746 = vld [vmem:[%s730 + $0x78] sm:$0xff]
        %s747 = scalar_lea.vmem %s422, 1
        %v748 = vld [vmem:[%s747] sm:$0x1]
        %v750 = vperm.slane %v748, 0
        %752 = vmatpush.msra.mxu0 %v746
        %753 = vmatpush.msra.mxu0 %v745
        %754 = vmatpush.msra.mxu0 %v744
        %755 = vmatpush.msra.mxu0 %v743
        %756 = vmatpush.msra.mxu0 %v742
        %757 = vmatpush.msra.mxu0 %v741
        %758 = vmatpush.msra.mxu0 %v740
        %759 = vmatpush.msra.mxu0 %v739
        %760 = vmatpush.msra.mxu0 %v738
        %761 = vmatpush.msra.mxu0 %v737
        %762 = vmatpush.msra.mxu0 %v736
        %763 = vmatpush.msra.mxu0 %v735
        %764 = vmatpush.msra.mxu0 %v734
        %765 = vmatpush.msra.mxu0 %v733
        %766 = vmatpush.msra.mxu0 %v732
        %767 = vmatpush.msra.mxu0 %v731
        %768 = vmatmul.f32.gmra.mxu0 %v508
        %v769 = vpop.f32.mrf.mxu0
        %v770 = vadd.f32 %v750, %v769
        %771 = vmatmul.f32.gmra.mxu0 %v509
        %v772 = vpop.f32.mrf.mxu0
        %v773 = vadd.f32 %v750, %v772
        %774 = vdwg.mxu0
        %s775 = scalar_lea.vmem %s418, 640
        %v776 = vld [vmem:[%s775] sm:$0xff]
        %v777 = vld [vmem:[%s775 + $0x8] sm:$0xff]
        %v778 = vld [vmem:[%s775 + $0x10] sm:$0xff]
        %v779 = vld [vmem:[%s775 + $0x18] sm:$0xff]
        %v780 = vld [vmem:[%s775 + $0x20] sm:$0xff]
        %v781 = vld [vmem:[%s775 + $0x28] sm:$0xff]
        %v782 = vld [vmem:[%s775 + $0x30] sm:$0xff]
        %v783 = vld [vmem:[%s775 + $0x38] sm:$0xff]
        %v784 = vld [vmem:[%s775 + $0x40] sm:$0xff]
        %v785 = vld [vmem:[%s775 + $0x48] sm:$0xff]
        %v786 = vld [vmem:[%s775 + $0x50] sm:$0xff]
        %v787 = vld [vmem:[%s775 + $0x58] sm:$0xff]
        %v788 = vld [vmem:[%s775 + $0x60] sm:$0xff]
        %v789 = vld [vmem:[%s775 + $0x68] sm:$0xff]
        %v790 = vld [vmem:[%s775 + $0x70] sm:$0xff]
        %v791 = vld [vmem:[%s775 + $0x78] sm:$0xff]
        %792 = vmatpush.msra.mxu0 %v791
        %793 = vmatpush.msra.mxu0 %v790
        %794 = vmatpush.msra.mxu0 %v789
        %795 = vmatpush.msra.mxu0 %v788
        %796 = vmatpush.msra.mxu0 %v787
        %797 = vmatpush.msra.mxu0 %v786
        %798 = vmatpush.msra.mxu0 %v785
        %799 = vmatpush.msra.mxu0 %v784
        %800 = vmatpush.msra.mxu0 %v783
        %801 = vmatpush.msra.mxu0 %v782
        %802 = vmatpush.msra.mxu0 %v781
        %803 = vmatpush.msra.mxu0 %v780
        %804 = vmatpush.msra.mxu0 %v779
        %805 = vmatpush.msra.mxu0 %v778
        %806 = vmatpush.msra.mxu0 %v777
        %807 = vmatpush.msra.mxu0 %v776
        %808 = vmatmul.f32.gmra.mxu0 %v508
        %v809 = vpop.f32.mrf.mxu0
        %v810 = vadd.f32 0.0, %v809
        %811 = vmatmul.f32.gmra.mxu0 %v509
        %v812 = vpop.f32.mrf.mxu0
        %v813 = vadd.f32 0.0, %v812
        %814 = vdwg.mxu0
        %s815 = scalar_lea.vmem %s418, 1152
        %v816 = vld [vmem:[%s815] sm:$0xff]
        %v817 = vld [vmem:[%s815 + $0x8] sm:$0xff]
        %v818 = vld [vmem:[%s815 + $0x10] sm:$0xff]
        %v819 = vld [vmem:[%s815 + $0x18] sm:$0xff]
        %v820 = vld [vmem:[%s815 + $0x20] sm:$0xff]
        %v821 = vld [vmem:[%s815 + $0x28] sm:$0xff]
        %v822 = vld [vmem:[%s815 + $0x30] sm:$0xff]
        %v823 = vld [vmem:[%s815 + $0x38] sm:$0xff]
        %v824 = vld [vmem:[%s815 + $0x40] sm:$0xff]
        %v825 = vld [vmem:[%s815 + $0x48] sm:$0xff]
        %v826 = vld [vmem:[%s815 + $0x50] sm:$0xff]
        %v827 = vld [vmem:[%s815 + $0x58] sm:$0xff]
        %v828 = vld [vmem:[%s815 + $0x60] sm:$0xff]
        %v829 = vld [vmem:[%s815 + $0x68] sm:$0xff]
        %v830 = vld [vmem:[%s815 + $0x70] sm:$0xff]
        %v831 = vld [vmem:[%s815 + $0x78] sm:$0xff]
        %s832 = scalar_lea.vmem %s422, 5
        %v833 = vld [vmem:[%s832] sm:$0x1]
        %v835 = vperm.slane %v833, 0
        %837 = vmatpush.msra.mxu0 %v831
        %838 = vmatpush.msra.mxu0 %v830
        %839 = vmatpush.msra.mxu0 %v829
        %840 = vmatpush.msra.mxu0 %v828
        %841 = vmatpush.msra.mxu0 %v827
        %842 = vmatpush.msra.mxu0 %v826
        %843 = vmatpush.msra.mxu0 %v825
        %844 = vmatpush.msra.mxu0 %v824
        %845 = vmatpush.msra.mxu0 %v823
        %846 = vmatpush.msra.mxu0 %v822
        %847 = vmatpush.msra.mxu0 %v821
        %848 = vmatpush.msra.mxu0 %v820
        %849 = vmatpush.msra.mxu0 %v819
        %850 = vmatpush.msra.mxu0 %v818
        %851 = vmatpush.msra.mxu0 %v817
        %852 = vmatpush.msra.mxu0 %v816
        %853 = vmatmul.f32.gmra.mxu0 %v508
        %v854 = vpop.f32.mrf.mxu0
        %v855 = vadd.f32 %v835, %v854
        %856 = vmatmul.f32.gmra.mxu0 %v509
        %v857 = vpop.f32.mrf.mxu0
        %v858 = vadd.f32 %v835, %v857
        %859 = vdwg.mxu0
        %v861 = vsel %vm638, %v770, 0
        %v864 = vsel %vm638, %v773, 0
        %v867 = vsel %vm638, %v810, 0
        %v870 = vsel %vm638, %v813, 0
        %872 = vmatpush.xpose.msra.mxu0 0.0
        %873 = vmatpush.xpose.msra.mxu0 0.0
        %874 = vmatpush.xpose.msra.mxu0 0.0
        %875 = vmatpush.xpose.msra.mxu0 0.0
        %876 = vmatpush.xpose.msra.mxu0 0.0
        %877 = vmatpush.xpose.msra.mxu0 0.0
        %878 = vmatpush.xpose.msra.mxu0 0.0
        %879 = vmatpush.xpose.msra.mxu0 0.0
        %880 = vmatpush.xpose.msra.mxu0 0.0
        %881 = vmatpush.xpose.msra.mxu0 0.0
        %882 = vmatpush.xpose.msra.mxu0 0.0
        %883 = vmatpush.xpose.msra.mxu0 0.0
        %884 = vmatpush.xpose.msra.mxu0 0.0
        %885 = vmatpush.xpose.msra.mxu0 0.0
        %886 = vmatpush.xpose.msra.mxu0 %v870
        %887 = vmatpush.xpose.msra.mxu0 %v867
        %888 = vmatmul.f32.gmra.mxu0 %v861
        %v889 = vpop.f32.mrf.mxu0
        %v890 = vadd.f32 %v453, %v889
        %891 = vmatmul.f32.gmra.mxu0 %v864
        %v892 = vpop.f32.mrf.mxu0
        %v893 = vadd.f32 %v454, %v892
        %894 = vdwg.mxu0
        %v895 = vsel %vm674, %v890, -inf
        %896 = vmax.xlane.f32.xlu0 %v895
        %v897 = vpop.xlane.xlu0 %896
        %v898 = vsel %vm674, %v893, -inf
        %899 = vmax.xlane.f32.xlu0 %v898
        %v900 = vpop.xlane.xlu0 %899
        %v901 = vsub.f32 %v890, %v897
        %v902 = vsub.f32 %v893, %v900
        %v903 = vmul.f32 %v901, 1.442695
        %v904 = vpow.pop %v903
        %v905 = vmul.f32 %v902, 1.442695
        %v906 = vpow.pop %v905
        %v907 = vsel %vm674, %v904, 0.0
        %908 = vadd.xlane.f32.xlu0 %v907
        %v909 = vpop.xlane.xlu0 %908
        %v910 = vsel %vm674, %v906, 0.0
        %911 = vadd.xlane.f32.xlu0 %v910
        %v912 = vpop.xlane.xlu0 %911
        %v913 = vrcp.pop %v909
        %v914 = vrcp.pop %v912
        %v915 = vmul.f32 %v904, %v913
        %v916 = vmul.f32 %v906, %v914
        %v918 = vsel %vm674, %v915, 0
        %v921 = vsel %vm674, %v916, 0
        %923 = vmatpush.msra.mxu0 0.0
        %924 = vmatpush.msra.mxu0 0.0
        %925 = vmatpush.msra.mxu0 0.0
        %926 = vmatpush.msra.mxu0 0.0
        %927 = vmatpush.msra.mxu0 0.0
        %928 = vmatpush.msra.mxu0 0.0
        %929 = vmatpush.msra.mxu0 0.0
        %930 = vmatpush.msra.mxu0 0.0
        %931 = vmatpush.msra.mxu0 0.0
        %932 = vmatpush.msra.mxu0 0.0
        %933 = vmatpush.msra.mxu0 0.0
        %934 = vmatpush.msra.mxu0 0.0
        %935 = vmatpush.msra.mxu0 0.0
        %936 = vmatpush.msra.mxu0 0.0
        %937 = vmatpush.msra.mxu0 %v858
        %938 = vmatpush.msra.mxu0 %v855
        %939 = vmatmul.f32.gmra.mxu0 %v918
        %v940 = vpop.f32.mrf.mxu0
        %v941 = vadd.f32 0.0, %v940
        %942 = vmatmul.f32.gmra.mxu0 %v921
        %v943 = vpop.f32.mrf.mxu0
        %v944 = vadd.f32 0.0, %v943
        %945 = vdwg.mxu0
        %s946 = scalar_lea.vmem %s427, 32
        %v947 = vld [vmem:[%s946] sm:$0xff]
        %v948 = vld [vmem:[%s946 + $0x8] sm:$0xff]
        %v949 = vld [vmem:[%s946 + $0x10] sm:$0xff]
        %v950 = vld [vmem:[%s946 + $0x18] sm:$0xff]
        %v952 = vsel %vm638, %v941, 0
        %v955 = vsel %vm638, %v944, 0
        %957 = vmatpush.msra.mxu0 0.0
        %958 = vmatpush.msra.mxu0 0.0
        %959 = vmatpush.msra.mxu0 0.0
        %960 = vmatpush.msra.mxu0 0.0
        %961 = vmatpush.msra.mxu0 0.0
        %962 = vmatpush.msra.mxu0 0.0
        %963 = vmatpush.msra.mxu0 0.0
        %964 = vmatpush.msra.mxu0 0.0
        %965 = vmatpush.msra.mxu0 0.0
        %966 = vmatpush.msra.mxu0 0.0
        %967 = vmatpush.msra.mxu0 0.0
        %968 = vmatpush.msra.mxu0 0.0
        %969 = vmatpush.msra.mxu0 %v950
        %970 = vmatpush.msra.mxu0 %v949
        %971 = vmatpush.msra.mxu0 %v948
        %972 = vmatpush.msra.mxu0 %v947
        %973 = vmatmul.f32.gmra.mxu0 %v952
        %v974 = vpop.f32.mrf.mxu0
        %v975 = vadd.f32 0.0, %v974
        %976 = vmatmul.f32.gmra.mxu0 %v955
        %v977 = vpop.f32.mrf.mxu0
        %v978 = vadd.f32 0.0, %v977
        %979 = vdwg.mxu0
        %v981 = vsel %vm638, %v721, 0
        %v984 = vsel %vm638, %v724, 0
        %986 = vmatpush.msra.mxu0 0.0
        %987 = vmatpush.msra.mxu0 0.0
        %988 = vmatpush.msra.mxu0 0.0
        %989 = vmatpush.msra.mxu0 0.0
        %990 = vmatpush.msra.mxu0 0.0
        %991 = vmatpush.msra.mxu0 0.0
        %992 = vmatpush.msra.mxu0 0.0
        %993 = vmatpush.msra.mxu0 0.0
        %994 = vmatpush.msra.mxu0 0.0
        %995 = vmatpush.msra.mxu0 0.0
        %996 = vmatpush.msra.mxu0 0.0
        %997 = vmatpush.msra.mxu0 0.0
        %998 = vmatpush.msra.mxu0 %v729
        %999 = vmatpush.msra.mxu0 %v728
        %1000 = vmatpush.msra.mxu0 %v727
        %1001 = vmatpush.msra.mxu0 %v726
        %1002 = vmatmul.f32.gmra.mxu0 %v981
        %v1003 = vpop.f32.mrf.mxu0
        %v1004 = vadd.f32 %v975, %v1003
        %1005 = vmatmul.f32.gmra.mxu0 %v984
        %v1006 = vpop.f32.mrf.mxu0
        %v1007 = vadd.f32 %v978, %v1006
        %1008 = vdwg.mxu0
        %s1009 = scalar_lea.vmem %s418, 256
        %v1010 = vld [vmem:[%s1009] sm:$0xff]
        %v1011 = vld [vmem:[%s1009 + $0x8] sm:$0xff]
        %v1012 = vld [vmem:[%s1009 + $0x10] sm:$0xff]
        %v1013 = vld [vmem:[%s1009 + $0x18] sm:$0xff]
        %v1014 = vld [vmem:[%s1009 + $0x20] sm:$0xff]
        %v1015 = vld [vmem:[%s1009 + $0x28] sm:$0xff]
        %v1016 = vld [vmem:[%s1009 + $0x30] sm:$0xff]
        %v1017 = vld [vmem:[%s1009 + $0x38] sm:$0xff]
        %v1018 = vld [vmem:[%s1009 + $0x40] sm:$0xff]
        %v1019 = vld [vmem:[%s1009 + $0x48] sm:$0xff]
        %v1020 = vld [vmem:[%s1009 + $0x50] sm:$0xff]
        %v1021 = vld [vmem:[%s1009 + $0x58] sm:$0xff]
        %v1022 = vld [vmem:[%s1009 + $0x60] sm:$0xff]
        %v1023 = vld [vmem:[%s1009 + $0x68] sm:$0xff]
        %v1024 = vld [vmem:[%s1009 + $0x70] sm:$0xff]
        %v1025 = vld [vmem:[%s1009 + $0x78] sm:$0xff]
        %s1026 = scalar_lea.vmem %s422, 2
        %v1027 = vld [vmem:[%s1026] sm:$0x1]
        %v1029 = vperm.slane %v1027, 0
        %1031 = vmatpush.msra.mxu0 %v1025
        %1032 = vmatpush.msra.mxu0 %v1024
        %1033 = vmatpush.msra.mxu0 %v1023
        %1034 = vmatpush.msra.mxu0 %v1022
        %1035 = vmatpush.msra.mxu0 %v1021
        %1036 = vmatpush.msra.mxu0 %v1020
        %1037 = vmatpush.msra.mxu0 %v1019
        %1038 = vmatpush.msra.mxu0 %v1018
        %1039 = vmatpush.msra.mxu0 %v1017
        %1040 = vmatpush.msra.mxu0 %v1016
        %1041 = vmatpush.msra.mxu0 %v1015
        %1042 = vmatpush.msra.mxu0 %v1014
        %1043 = vmatpush.msra.mxu0 %v1013
        %1044 = vmatpush.msra.mxu0 %v1012
        %1045 = vmatpush.msra.mxu0 %v1011
        %1046 = vmatpush.msra.mxu0 %v1010
        %1047 = vmatmul.f32.gmra.mxu0 %v508
        %v1048 = vpop.f32.mrf.mxu0
        %v1049 = vadd.f32 %v1029, %v1048
        %1050 = vmatmul.f32.gmra.mxu0 %v509
        %v1051 = vpop.f32.mrf.mxu0
        %v1052 = vadd.f32 %v1029, %v1051
        %1053 = vdwg.mxu0
        %s1054 = scalar_lea.vmem %s418, 768
        %v1055 = vld [vmem:[%s1054] sm:$0xff]
        %v1056 = vld [vmem:[%s1054 + $0x8] sm:$0xff]
        %v1057 = vld [vmem:[%s1054 + $0x10] sm:$0xff]
        %v1058 = vld [vmem:[%s1054 + $0x18] sm:$0xff]
        %v1059 = vld [vmem:[%s1054 + $0x20] sm:$0xff]
        %v1060 = vld [vmem:[%s1054 + $0x28] sm:$0xff]
        %v1061 = vld [vmem:[%s1054 + $0x30] sm:$0xff]
        %v1062 = vld [vmem:[%s1054 + $0x38] sm:$0xff]
        %v1063 = vld [vmem:[%s1054 + $0x40] sm:$0xff]
        %v1064 = vld [vmem:[%s1054 + $0x48] sm:$0xff]
        %v1065 = vld [vmem:[%s1054 + $0x50] sm:$0xff]
        %v1066 = vld [vmem:[%s1054 + $0x58] sm:$0xff]
        %v1067 = vld [vmem:[%s1054 + $0x60] sm:$0xff]
        %v1068 = vld [vmem:[%s1054 + $0x68] sm:$0xff]
        %v1069 = vld [vmem:[%s1054 + $0x70] sm:$0xff]
        %v1070 = vld [vmem:[%s1054 + $0x78] sm:$0xff]
        %1071 = vmatpush.msra.mxu0 %v1070
        %1072 = vmatpush.msra.mxu0 %v1069
        %1073 = vmatpush.msra.mxu0 %v1068
        %1074 = vmatpush.msra.mxu0 %v1067
        %1075 = vmatpush.msra.mxu0 %v1066
        %1076 = vmatpush.msra.mxu0 %v1065
        %1077 = vmatpush.msra.mxu0 %v1064
        %1078 = vmatpush.msra.mxu0 %v1063
        %1079 = vmatpush.msra.mxu0 %v1062
        %1080 = vmatpush.msra.mxu0 %v1061
        %1081 = vmatpush.msra.mxu0 %v1060
        %1082 = vmatpush.msra.mxu0 %v1059
        %1083 = vmatpush.msra.mxu0 %v1058
        %1084 = vmatpush.msra.mxu0 %v1057
        %1085 = vmatpush.msra.mxu0 %v1056
        %1086 = vmatpush.msra.mxu0 %v1055
        %1087 = vmatmul.f32.gmra.mxu0 %v508
        %v1088 = vpop.f32.mrf.mxu0
        %v1089 = vadd.f32 0.0, %v1088
        %1090 = vmatmul.f32.gmra.mxu0 %v509
        %v1091 = vpop.f32.mrf.mxu0
        %v1092 = vadd.f32 0.0, %v1091
        %1093 = vdwg.mxu0
        %s1094 = scalar_lea.vmem %s418, 1280
        %v1095 = vld [vmem:[%s1094] sm:$0xff]
        %v1096 = vld [vmem:[%s1094 + $0x8] sm:$0xff]
        %v1097 = vld [vmem:[%s1094 + $0x10] sm:$0xff]
        %v1098 = vld [vmem:[%s1094 + $0x18] sm:$0xff]
        %v1099 = vld [vmem:[%s1094 + $0x20] sm:$0xff]
        %v1100 = vld [vmem:[%s1094 + $0x28] sm:$0xff]
        %v1101 = vld [vmem:[%s1094 + $0x30] sm:$0xff]
        %v1102 = vld [vmem:[%s1094 + $0x38] sm:$0xff]
        %v1103 = vld [vmem:[%s1094 + $0x40] sm:$0xff]
        %v1104 = vld [vmem:[%s1094 + $0x48] sm:$0xff]
        %v1105 = vld [vmem:[%s1094 + $0x50] sm:$0xff]
        %v1106 = vld [vmem:[%s1094 + $0x58] sm:$0xff]
        %v1107 = vld [vmem:[%s1094 + $0x60] sm:$0xff]
        %v1108 = vld [vmem:[%s1094 + $0x68] sm:$0xff]
        %v1109 = vld [vmem:[%s1094 + $0x70] sm:$0xff]
        %v1110 = vld [vmem:[%s1094 + $0x78] sm:$0xff]
        %s1111 = scalar_lea.vmem %s422, 6
        %v1112 = vld [vmem:[%s1111] sm:$0x1]
        %v1114 = vperm.slane %v1112, 0
        %1116 = vmatpush.msra.mxu0 %v1110
        %1117 = vmatpush.msra.mxu0 %v1109
        %1118 = vmatpush.msra.mxu0 %v1108
        %1119 = vmatpush.msra.mxu0 %v1107
        %1120 = vmatpush.msra.mxu0 %v1106
        %1121 = vmatpush.msra.mxu0 %v1105
        %1122 = vmatpush.msra.mxu0 %v1104
        %1123 = vmatpush.msra.mxu0 %v1103
        %1124 = vmatpush.msra.mxu0 %v1102
        %1125 = vmatpush.msra.mxu0 %v1101
        %1126 = vmatpush.msra.mxu0 %v1100
        %1127 = vmatpush.msra.mxu0 %v1099
        %1128 = vmatpush.msra.mxu0 %v1098
        %1129 = vmatpush.msra.mxu0 %v1097
        %1130 = vmatpush.msra.mxu0 %v1096
        %1131 = vmatpush.msra.mxu0 %v1095
        %1132 = vmatmul.f32.gmra.mxu0 %v508
        %v1133 = vpop.f32.mrf.mxu0
        %v1134 = vadd.f32 %v1114, %v1133
        %1135 = vmatmul.f32.gmra.mxu0 %v509
        %v1136 = vpop.f32.mrf.mxu0
        %v1137 = vadd.f32 %v1114, %v1136
        %1138 = vdwg.mxu0
        %v1140 = vsel %vm638, %v1049, 0
        %v1143 = vsel %vm638, %v1052, 0
        %v1146 = vsel %vm638, %v1089, 0
        %v1149 = vsel %vm638, %v1092, 0
        %1151 = vmatpush.xpose.msra.mxu0 0.0
        %1152 = vmatpush.xpose.msra.mxu0 0.0
        %1153 = vmatpush.xpose.msra.mxu0 0.0
        %1154 = vmatpush.xpose.msra.mxu0 0.0
        %1155 = vmatpush.xpose.msra.mxu0 0.0
        %1156 = vmatpush.xpose.msra.mxu0 0.0
        %1157 = vmatpush.xpose.msra.mxu0 0.0
        %1158 = vmatpush.xpose.msra.mxu0 0.0
        %1159 = vmatpush.xpose.msra.mxu0 0.0
        %1160 = vmatpush.xpose.msra.mxu0 0.0
        %1161 = vmatpush.xpose.msra.mxu0 0.0
        %1162 = vmatpush.xpose.msra.mxu0 0.0
        %1163 = vmatpush.xpose.msra.mxu0 0.0
        %1164 = vmatpush.xpose.msra.mxu0 0.0
        %1165 = vmatpush.xpose.msra.mxu0 %v1149
        %1166 = vmatpush.xpose.msra.mxu0 %v1146
        %1167 = vmatmul.f32.gmra.mxu0 %v1140
        %v1168 = vpop.f32.mrf.mxu0
        %v1169 = vadd.f32 %v453, %v1168
        %1170 = vmatmul.f32.gmra.mxu0 %v1143
        %v1171 = vpop.f32.mrf.mxu0
        %v1172 = vadd.f32 %v454, %v1171
        %1173 = vdwg.mxu0
        %v1174 = vsel %vm674, %v1169, -inf
        %1175 = vmax.xlane.f32.xlu0 %v1174
        %v1176 = vpop.xlane.xlu0 %1175
        %v1177 = vsel %vm674, %v1172, -inf
        %1178 = vmax.xlane.f32.xlu0 %v1177
        %v1179 = vpop.xlane.xlu0 %1178
        %v1180 = vsub.f32 %v1169, %v1176
        %v1181 = vsub.f32 %v1172, %v1179
        %v1182 = vmul.f32 %v1180, 1.442695
        %v1183 = vpow.pop %v1182
        %v1184 = vmul.f32 %v1181, 1.442695
        %v1185 = vpow.pop %v1184
        %v1186 = vsel %vm674, %v1183, 0.0
        %1187 = vadd.xlane.f32.xlu0 %v1186
        %v1188 = vpop.xlane.xlu0 %1187
        %v1189 = vsel %vm674, %v1185, 0.0
        %1190 = vadd.xlane.f32.xlu0 %v1189
        %v1191 = vpop.xlane.xlu0 %1190
        %v1192 = vrcp.pop %v1188
        %v1193 = vrcp.pop %v1191
        %v1194 = vmul.f32 %v1183, %v1192
        %v1195 = vmul.f32 %v1185, %v1193
        %v1197 = vsel %vm674, %v1194, 0
        %v1200 = vsel %vm674, %v1195, 0
        %1202 = vmatpush.msra.mxu0 0.0
        %1203 = vmatpush.msra.mxu0 0.0
        %1204 = vmatpush.msra.mxu0 0.0
        %1205 = vmatpush.msra.mxu0 0.0
        %1206 = vmatpush.msra.mxu0 0.0
        %1207 = vmatpush.msra.mxu0 0.0
        %1208 = vmatpush.msra.mxu0 0.0
        %1209 = vmatpush.msra.mxu0 0.0
        %1210 = vmatpush.msra.mxu0 0.0
        %1211 = vmatpush.msra.mxu0 0.0
        %1212 = vmatpush.msra.mxu0 0.0
        %1213 = vmatpush.msra.mxu0 0.0
        %1214 = vmatpush.msra.mxu0 0.0
        %1215 = vmatpush.msra.mxu0 0.0
        %1216 = vmatpush.msra.mxu0 %v1137
        %1217 = vmatpush.msra.mxu0 %v1134
        %1218 = vmatmul.f32.gmra.mxu0 %v1197
        %v1219 = vpop.f32.mrf.mxu0
        %v1220 = vadd.f32 0.0, %v1219
        %1221 = vmatmul.f32.gmra.mxu0 %v1200
        %v1222 = vpop.f32.mrf.mxu0
        %v1223 = vadd.f32 0.0, %v1222
        %1224 = vdwg.mxu0
        %s1225 = scalar_lea.vmem %s427, 64
        %v1226 = vld [vmem:[%s1225] sm:$0xff]
        %v1227 = vld [vmem:[%s1225 + $0x8] sm:$0xff]
        %v1228 = vld [vmem:[%s1225 + $0x10] sm:$0xff]
        %v1229 = vld [vmem:[%s1225 + $0x18] sm:$0xff]
        %v1231 = vsel %vm638, %v1220, 0
        %v1234 = vsel %vm638, %v1223, 0
        %1236 = vmatpush.msra.mxu0 0.0
        %1237 = vmatpush.msra.mxu0 0.0
        %1238 = vmatpush.msra.mxu0 0.0
        %1239 = vmatpush.msra.mxu0 0.0
        %1240 = vmatpush.msra.mxu0 0.0
        %1241 = vmatpush.msra.mxu0 0.0
        %1242 = vmatpush.msra.mxu0 0.0
        %1243 = vmatpush.msra.mxu0 0.0
        %1244 = vmatpush.msra.mxu0 0.0
        %1245 = vmatpush.msra.mxu0 0.0
        %1246 = vmatpush.msra.mxu0 0.0
        %1247 = vmatpush.msra.mxu0 0.0
        %1248 = vmatpush.msra.mxu0 %v1229
        %1249 = vmatpush.msra.mxu0 %v1228
        %1250 = vmatpush.msra.mxu0 %v1227
        %1251 = vmatpush.msra.mxu0 %v1226
        %1252 = vmatmul.f32.gmra.mxu0 %v1231
        %v1253 = vpop.f32.mrf.mxu0
        %v1254 = vadd.f32 0.0, %v1253
        %1255 = vmatmul.f32.gmra.mxu0 %v1234
        %v1256 = vpop.f32.mrf.mxu0
        %v1257 = vadd.f32 0.0, %v1256
        %1258 = vdwg.mxu0
        %v1259 = vadd.f32 %v1004, %v1254
        %v1260 = vadd.f32 %v1007, %v1257
        %s1261 = scalar_lea.vmem %s418, 384
        %v1262 = vld [vmem:[%s1261] sm:$0xff]
        %v1263 = vld [vmem:[%s1261 + $0x8] sm:$0xff]
        %v1264 = vld [vmem:[%s1261 + $0x10] sm:$0xff]
        %v1265 = vld [vmem:[%s1261 + $0x18] sm:$0xff]
        %v1266 = vld [vmem:[%s1261 + $0x20] sm:$0xff]
        %v1267 = vld [vmem:[%s1261 + $0x28] sm:$0xff]
        %v1268 = vld [vmem:[%s1261 + $0x30] sm:$0xff]
        %v1269 = vld [vmem:[%s1261 + $0x38] sm:$0xff]
        %v1270 = vld [vmem:[%s1261 + $0x40] sm:$0xff]
        %v1271 = vld [vmem:[%s1261 + $0x48] sm:$0xff]
        %v1272 = vld [vmem:[%s1261 + $0x50] sm:$0xff]
        %v1273 = vld [vmem:[%s1261 + $0x58] sm:$0xff]
        %v1274 = vld [vmem:[%s1261 + $0x60] sm:$0xff]
        %v1275 = vld [vmem:[%s1261 + $0x68] sm:$0xff]
        %v1276 = vld [vmem:[%s1261 + $0x70] sm:$0xff]
        %v1277 = vld [vmem:[%s1261 + $0x78] sm:$0xff]
        %s1278 = scalar_lea.vmem %s422, 3
        %v1279 = vld [vmem:[%s1278] sm:$0x1]
        %v1281 = vperm.slane %v1279, 0
        %1283 = vmatpush.msra.mxu0 %v1277
        %1284 = vmatpush.msra.mxu0 %v1276
        %1285 = vmatpush.msra.mxu0 %v1275
        %1286 = vmatpush.msra.mxu0 %v1274
        %1287 = vmatpush.msra.mxu0 %v1273
        %1288 = vmatpush.msra.mxu0 %v1272
        %1289 = vmatpush.msra.mxu0 %v1271
        %1290 = vmatpush.msra.mxu0 %v1270
        %1291 = vmatpush.msra.mxu0 %v1269
        %1292 = vmatpush.msra.mxu0 %v1268
        %1293 = vmatpush.msra.mxu0 %v1267
        %1294 = vmatpush.msra.mxu0 %v1266
        %1295 = vmatpush.msra.mxu0 %v1265
        %1296 = vmatpush.msra.mxu0 %v1264
        %1297 = vmatpush.msra.mxu0 %v1263
        %1298 = vmatpush.msra.mxu0 %v1262
        %1299 = vmatmul.f32.gmra.mxu0 %v508
        %v1300 = vpop.f32.mrf.mxu0
        %v1301 = vadd.f32 %v1281, %v1300
        %1302 = vmatmul.f32.gmra.mxu0 %v509
        %v1303 = vpop.f32.mrf.mxu0
        %v1304 = vadd.f32 %v1281, %v1303
        %1305 = vdwg.mxu0
        %s1306 = scalar_lea.vmem %s418, 896
        %v1307 = vld [vmem:[%s1306] sm:$0xff]
        %v1308 = vld [vmem:[%s1306 + $0x8] sm:$0xff]
        %v1309 = vld [vmem:[%s1306 + $0x10] sm:$0xff]
        %v1310 = vld [vmem:[%s1306 + $0x18] sm:$0xff]
        %v1311 = vld [vmem:[%s1306 + $0x20] sm:$0xff]
        %v1312 = vld [vmem:[%s1306 + $0x28] sm:$0xff]
        %v1313 = vld [vmem:[%s1306 + $0x30] sm:$0xff]
        %v1314 = vld [vmem:[%s1306 + $0x38] sm:$0xff]
        %v1315 = vld [vmem:[%s1306 + $0x40] sm:$0xff]
        %v1316 = vld [vmem:[%s1306 + $0x48] sm:$0xff]
        %v1317 = vld [vmem:[%s1306 + $0x50] sm:$0xff]
        %v1318 = vld [vmem:[%s1306 + $0x58] sm:$0xff]
        %v1319 = vld [vmem:[%s1306 + $0x60] sm:$0xff]
        %v1320 = vld [vmem:[%s1306 + $0x68] sm:$0xff]
        %v1321 = vld [vmem:[%s1306 + $0x70] sm:$0xff]
        %v1322 = vld [vmem:[%s1306 + $0x78] sm:$0xff]
        %1323 = vmatpush.msra.mxu0 %v1322
        %1324 = vmatpush.msra.mxu0 %v1321
        %1325 = vmatpush.msra.mxu0 %v1320
        %1326 = vmatpush.msra.mxu0 %v1319
        %1327 = vmatpush.msra.mxu0 %v1318
        %1328 = vmatpush.msra.mxu0 %v1317
        %1329 = vmatpush.msra.mxu0 %v1316
        %1330 = vmatpush.msra.mxu0 %v1315
        %1331 = vmatpush.msra.mxu0 %v1314
        %1332 = vmatpush.msra.mxu0 %v1313
        %1333 = vmatpush.msra.mxu0 %v1312
        %1334 = vmatpush.msra.mxu0 %v1311
        %1335 = vmatpush.msra.mxu0 %v1310
        %1336 = vmatpush.msra.mxu0 %v1309
        %1337 = vmatpush.msra.mxu0 %v1308
        %1338 = vmatpush.msra.mxu0 %v1307
        %1339 = vmatmul.f32.gmra.mxu0 %v508
        %v1340 = vpop.f32.mrf.mxu0
        %v1341 = vadd.f32 0.0, %v1340
        %1342 = vmatmul.f32.gmra.mxu0 %v509
        %v1343 = vpop.f32.mrf.mxu0
        %v1344 = vadd.f32 0.0, %v1343
        %1345 = vdwg.mxu0
        %s1346 = scalar_lea.vmem %s418, 1408
        %v1347 = vld [vmem:[%s1346] sm:$0xff]
        %v1348 = vld [vmem:[%s1346 + $0x8] sm:$0xff]
        %v1349 = vld [vmem:[%s1346 + $0x10] sm:$0xff]
        %v1350 = vld [vmem:[%s1346 + $0x18] sm:$0xff]
        %v1351 = vld [vmem:[%s1346 + $0x20] sm:$0xff]
        %v1352 = vld [vmem:[%s1346 + $0x28] sm:$0xff]
        %v1353 = vld [vmem:[%s1346 + $0x30] sm:$0xff]
        %v1354 = vld [vmem:[%s1346 + $0x38] sm:$0xff]
        %v1355 = vld [vmem:[%s1346 + $0x40] sm:$0xff]
        %v1356 = vld [vmem:[%s1346 + $0x48] sm:$0xff]
        %v1357 = vld [vmem:[%s1346 + $0x50] sm:$0xff]
        %v1358 = vld [vmem:[%s1346 + $0x58] sm:$0xff]
        %v1359 = vld [vmem:[%s1346 + $0x60] sm:$0xff]
        %v1360 = vld [vmem:[%s1346 + $0x68] sm:$0xff]
        %v1361 = vld [vmem:[%s1346 + $0x70] sm:$0xff]
        %v1362 = vld [vmem:[%s1346 + $0x78] sm:$0xff]
        %s1363 = scalar_lea.vmem %s422, 7
        %v1364 = vld [vmem:[%s1363] sm:$0x1]
        %v1366 = vperm.slane %v1364, 0
        %1368 = vmatpush.msra.mxu0 %v1362
        %1369 = vmatpush.msra.mxu0 %v1361
        %1370 = vmatpush.msra.mxu0 %v1360
        %1371 = vmatpush.msra.mxu0 %v1359
        %1372 = vmatpush.msra.mxu0 %v1358
        %1373 = vmatpush.msra.mxu0 %v1357
        %1374 = vmatpush.msra.mxu0 %v1356
        %1375 = vmatpush.msra.mxu0 %v1355
        %1376 = vmatpush.msra.mxu0 %v1354
        %1377 = vmatpush.msra.mxu0 %v1353
        %1378 = vmatpush.msra.mxu0 %v1352
        %1379 = vmatpush.msra.mxu0 %v1351
        %1380 = vmatpush.msra.mxu0 %v1350
        %1381 = vmatpush.msra.mxu0 %v1349
        %1382 = vmatpush.msra.mxu0 %v1348
        %1383 = vmatpush.msra.mxu0 %v1347
        %1384 = vmatmul.f32.gmra.mxu0 %v508
        %v1385 = vpop.f32.mrf.mxu0
        %v1386 = vadd.f32 %v1366, %v1385
        %1387 = vmatmul.f32.gmra.mxu0 %v509
        %v1388 = vpop.f32.mrf.mxu0
        %v1389 = vadd.f32 %v1366, %v1388
        %1390 = vdwg.mxu0
        %v1392 = vsel %vm638, %v1301, 0
        %v1395 = vsel %vm638, %v1304, 0
        %v1398 = vsel %vm638, %v1341, 0
        %v1401 = vsel %vm638, %v1344, 0
        %1403 = vmatpush.xpose.msra.mxu0 0.0
        %1404 = vmatpush.xpose.msra.mxu0 0.0
        %1405 = vmatpush.xpose.msra.mxu0 0.0
        %1406 = vmatpush.xpose.msra.mxu0 0.0
        %1407 = vmatpush.xpose.msra.mxu0 0.0
        %1408 = vmatpush.xpose.msra.mxu0 0.0
        %1409 = vmatpush.xpose.msra.mxu0 0.0
        %1410 = vmatpush.xpose.msra.mxu0 0.0
        %1411 = vmatpush.xpose.msra.mxu0 0.0
        %1412 = vmatpush.xpose.msra.mxu0 0.0
        %1413 = vmatpush.xpose.msra.mxu0 0.0
        %1414 = vmatpush.xpose.msra.mxu0 0.0
        %1415 = vmatpush.xpose.msra.mxu0 0.0
        %1416 = vmatpush.xpose.msra.mxu0 0.0
        %1417 = vmatpush.xpose.msra.mxu0 %v1401
        %1418 = vmatpush.xpose.msra.mxu0 %v1398
        %1419 = vmatmul.f32.gmra.mxu0 %v1392
        %v1420 = vpop.f32.mrf.mxu0
        %v1421 = vadd.f32 %v453, %v1420
        %1422 = vmatmul.f32.gmra.mxu0 %v1395
        %v1423 = vpop.f32.mrf.mxu0
        %v1424 = vadd.f32 %v454, %v1423
        %1425 = vdwg.mxu0
        %v1426 = vsel %vm674, %v1421, -inf
        %1427 = vmax.xlane.f32.xlu0 %v1426
        %v1428 = vpop.xlane.xlu0 %1427
        %v1429 = vsel %vm674, %v1424, -inf
        %1430 = vmax.xlane.f32.xlu0 %v1429
        %v1431 = vpop.xlane.xlu0 %1430
        %v1432 = vsub.f32 %v1421, %v1428
        %v1433 = vsub.f32 %v1424, %v1431
        %v1434 = vmul.f32 %v1432, 1.442695
        %v1435 = vpow.pop %v1434
        %v1436 = vmul.f32 %v1433, 1.442695
        %v1437 = vpow.pop %v1436
        %v1438 = vsel %vm674, %v1435, 0.0
        %1439 = vadd.xlane.f32.xlu0 %v1438
        %v1440 = vpop.xlane.xlu0 %1439
        %v1441 = vsel %vm674, %v1437, 0.0
        %1442 = vadd.xlane.f32.xlu0 %v1441
        %v1443 = vpop.xlane.xlu0 %1442
        %v1444 = vrcp.pop %v1440
        %v1445 = vrcp.pop %v1443
        %v1446 = vmul.f32 %v1435, %v1444
        %v1447 = vmul.f32 %v1437, %v1445
        %v1449 = vsel %vm674, %v1446, 0
        %v1452 = vsel %vm674, %v1447, 0
        %1454 = vmatpush.msra.mxu0 0.0
        %1455 = vmatpush.msra.mxu0 0.0
        %1456 = vmatpush.msra.mxu0 0.0
        %1457 = vmatpush.msra.mxu0 0.0
        %1458 = vmatpush.msra.mxu0 0.0
        %1459 = vmatpush.msra.mxu0 0.0
        %1460 = vmatpush.msra.mxu0 0.0
        %1461 = vmatpush.msra.mxu0 0.0
        %1462 = vmatpush.msra.mxu0 0.0
        %1463 = vmatpush.msra.mxu0 0.0
        %1464 = vmatpush.msra.mxu0 0.0
        %1465 = vmatpush.msra.mxu0 0.0
        %1466 = vmatpush.msra.mxu0 0.0
        %1467 = vmatpush.msra.mxu0 0.0
        %1468 = vmatpush.msra.mxu0 %v1389
        %1469 = vmatpush.msra.mxu0 %v1386
        %1470 = vmatmul.f32.gmra.mxu0 %v1449
        %v1471 = vpop.f32.mrf.mxu0
        %v1472 = vadd.f32 0.0, %v1471
        %1473 = vmatmul.f32.gmra.mxu0 %v1452
        %v1474 = vpop.f32.mrf.mxu0
        %v1475 = vadd.f32 0.0, %v1474
        %1476 = vdwg.mxu0
        %s1477 = scalar_lea.vmem %s427, 96
        %v1478 = vld [vmem:[%s1477] sm:$0xff]
        %v1479 = vld [vmem:[%s1477 + $0x8] sm:$0xff]
        %v1480 = vld [vmem:[%s1477 + $0x10] sm:$0xff]
        %v1481 = vld [vmem:[%s1477 + $0x18] sm:$0xff]
        %v1483 = vsel %vm638, %v1472, 0
        %v1486 = vsel %vm638, %v1475, 0
        %1488 = vmatpush.msra.mxu0 0.0
        %1489 = vmatpush.msra.mxu0 0.0
        %1490 = vmatpush.msra.mxu0 0.0
        %1491 = vmatpush.msra.mxu0 0.0
        %1492 = vmatpush.msra.mxu0 0.0
        %1493 = vmatpush.msra.mxu0 0.0
        %1494 = vmatpush.msra.mxu0 0.0
        %1495 = vmatpush.msra.mxu0 0.0
        %1496 = vmatpush.msra.mxu0 0.0
        %1497 = vmatpush.msra.mxu0 0.0
        %1498 = vmatpush.msra.mxu0 0.0
        %1499 = vmatpush.msra.mxu0 0.0
        %1500 = vmatpush.msra.mxu0 %v1481
        %1501 = vmatpush.msra.mxu0 %v1480
        %1502 = vmatpush.msra.mxu0 %v1479
        %1503 = vmatpush.msra.mxu0 %v1478
        %1504 = vmatmul.f32.gmra.mxu0 %v1483
        %v1505 = vpop.f32.mrf.mxu0
        %v1506 = vadd.f32 0.0, %v1505
        %1507 = vmatmul.f32.gmra.mxu0 %v1486
        %v1508 = vpop.f32.mrf.mxu0
        %v1509 = vadd.f32 0.0, %v1508
        %1510 = vdwg.mxu0
        %v1511 = vadd.f32 %v1259, %v1506
        %v1512 = vadd.f32 %v1260, %v1509
        %v1513 = vperm.slane %v455, 4
        %v1514 = vadd.f32 %v1511, %v1513
        %v1515 = vadd.f32 %v1512, %v1513
        %v1516 = vadd.f32 %v1514, %v451
        %v1517 = vadd.f32 %v1515, %v452
        %1518 = vadd.xlane.f32.xlu0 %v1516
        %v1519 = vpop.xlane.xlu0 %1518
        %1520 = vadd.xlane.f32.xlu0 %v1517
        %v1521 = vpop.xlane.xlu0 %1520
        %v1522 = vmul.f32 %v1519, %v467
        %v1523 = vmul.f32 %v1521, %v467
        %v1524 = vsub.f32 %v1516, %v1522
        %v1525 = vsub.f32 %v1517, %v1523
        %v1526 = vmul.f32 %v1524, %v1524
        %v1527 = vmul.f32 %v1525, %v1525
        %1528 = vadd.xlane.f32.xlu0 %v1526
        %v1529 = vpop.xlane.xlu0 %1528
        %1530 = vadd.xlane.f32.xlu0 %v1527
        %v1531 = vpop.xlane.xlu0 %1530
        %v1532 = vmul.f32 %v1529, %v467
        %v1533 = vmul.f32 %v1531, %v467
        %v1534 = vadd.f32 %v1532, 1e-06
        %v1535 = vadd.f32 %v1533, 1e-06
        %v1536 = vrsqrt.pop %v1534
        %v1537 = vmul.f32 %v1536, %v1534
        %v1538 = vmul.f32 %v1537, %v1536
        %v1539 = vmul.f32 0.5, %v1538
        %v1540 = vsub.f32 1.5, %v1539
        %v1541 = vmul.f32 %v1536, %v1540
        %vm1542 = vweird.f32 %v1534
        %vm1543 = vweird.f32 %v1536
        %vm1544 = vmor %vm1542, %vm1543
        %v1545 = vsel %vm1544, %v1536, %v1541
        %v1546 = vrsqrt.pop %v1535
        %v1547 = vmul.f32 %v1546, %v1535
        %v1548 = vmul.f32 %v1547, %v1546
        %v1549 = vmul.f32 0.5, %v1548
        %v1550 = vsub.f32 1.5, %v1549
        %v1551 = vmul.f32 %v1546, %v1550
        %vm1552 = vweird.f32 %v1535
        %vm1553 = vweird.f32 %v1546
        %vm1554 = vmor %vm1552, %vm1553
        %v1555 = vsel %vm1554, %v1546, %v1551
        %v1556 = vmul.f32 %v1524, %v1545
        %v1557 = vmul.f32 %v1525, %v1555
        %v1558 = vperm.slane %v455, 2
        %v1559 = vmul.f32 %v1556, %v1558
        %v1560 = vmul.f32 %v1557, %v1558
        %v1561 = vperm.slane %v455, 3
        %v1562 = vadd.f32 %v1559, %v1561
        %v1563 = vadd.f32 %v1560, %v1561
        %v1564 = vld [vmem:[%s432] sm:$0xff]
        %v1565 = vld [vmem:[%s432 + $0x8] sm:$0xff]
        %v1566 = vld [vmem:[%s432 + $0x10] sm:$0xff]
        %v1567 = vld [vmem:[%s432 + $0x18] sm:$0xff]
        %v1568 = vld [vmem:[%s432 + $0x20] sm:$0xff]
        %v1569 = vld [vmem:[%s432 + $0x28] sm:$0xff]
        %v1570 = vld [vmem:[%s432 + $0x30] sm:$0xff]
        %v1571 = vld [vmem:[%s432 + $0x38] sm:$0xff]
        %v1572 = vld [vmem:[%s432 + $0x40] sm:$0xff]
        %v1573 = vld [vmem:[%s432 + $0x48] sm:$0xff]
        %v1574 = vld [vmem:[%s432 + $0x50] sm:$0xff]
        %v1575 = vld [vmem:[%s432 + $0x58] sm:$0xff]
        %v1576 = vld [vmem:[%s432 + $0x60] sm:$0xff]
        %v1577 = vld [vmem:[%s432 + $0x68] sm:$0xff]
        %v1578 = vld [vmem:[%s432 + $0x70] sm:$0xff]
        %v1579 = vld [vmem:[%s432 + $0x78] sm:$0xff]
        %v1580 = vld [vmem:[%s432 + $0x80] sm:$0xff]
        %v1581 = vld [vmem:[%s432 + $0x88] sm:$0xff]
        %v1582 = vld [vmem:[%s432 + $0x90] sm:$0xff]
        %v1583 = vld [vmem:[%s432 + $0x98] sm:$0xff]
        %v1584 = vld [vmem:[%s432 + $0xa0] sm:$0xff]
        %v1585 = vld [vmem:[%s432 + $0xa8] sm:$0xff]
        %v1586 = vld [vmem:[%s432 + $0xb0] sm:$0xff]
        %v1587 = vld [vmem:[%s432 + $0xb8] sm:$0xff]
        %v1588 = vld [vmem:[%s432 + $0xc0] sm:$0xff]
        %v1589 = vld [vmem:[%s432 + $0xc8] sm:$0xff]
        %v1590 = vld [vmem:[%s432 + $0xd0] sm:$0xff]
        %v1591 = vld [vmem:[%s432 + $0xd8] sm:$0xff]
        %v1592 = vld [vmem:[%s432 + $0xe0] sm:$0xff]
        %v1593 = vld [vmem:[%s432 + $0xe8] sm:$0xff]
        %v1594 = vld [vmem:[%s432 + $0xf0] sm:$0xff]
        %v1595 = vld [vmem:[%s432 + $0xf8] sm:$0xff]
        %v1596 = vperm.slane %v455, 6
        %v1597 = vperm.slane %v456, 6
        %1598 = vmatpush.msra.mxu0 %v1594
        %1599 = vmatpush.msra.mxu0 %v1592
        %1600 = vmatpush.msra.mxu0 %v1590
        %1601 = vmatpush.msra.mxu0 %v1588
        %1602 = vmatpush.msra.mxu0 %v1586
        %1603 = vmatpush.msra.mxu0 %v1584
        %1604 = vmatpush.msra.mxu0 %v1582
        %1605 = vmatpush.msra.mxu0 %v1580
        %1606 = vmatpush.msra.mxu0 %v1578
        %1607 = vmatpush.msra.mxu0 %v1576
        %1608 = vmatpush.msra.mxu0 %v1574
        %1609 = vmatpush.msra.mxu0 %v1572
        %1610 = vmatpush.msra.mxu0 %v1570
        %1611 = vmatpush.msra.mxu0 %v1568
        %1612 = vmatpush.msra.mxu0 %v1566
        %1613 = vmatpush.msra.mxu0 %v1564
        %1614 = vmatmul.f32.gmra.mxu0 %v1562
        %v1615 = vpop.f32.mrf.mxu0
        %v1616 = vadd.f32 %v1596, %v1615
        %1617 = vmatmul.f32.gmra.mxu0 %v1563
        %v1618 = vpop.f32.mrf.mxu0
        %v1619 = vadd.f32 %v1596, %v1618
        %1620 = vdwg.mxu0
        %1621 = vmatpush.msra.mxu0 %v1595
        %1622 = vmatpush.msra.mxu0 %v1593
        %1623 = vmatpush.msra.mxu0 %v1591
        %1624 = vmatpush.msra.mxu0 %v1589
        %1625 = vmatpush.msra.mxu0 %v1587
        %1626 = vmatpush.msra.mxu0 %v1585
        %1627 = vmatpush.msra.mxu0 %v1583
        %1628 = vmatpush.msra.mxu0 %v1581
        %1629 = vmatpush.msra.mxu0 %v1579
        %1630 = vmatpush.msra.mxu0 %v1577
        %1631 = vmatpush.msra.mxu0 %v1575
        %1632 = vmatpush.msra.mxu0 %v1573
        %1633 = vmatpush.msra.mxu0 %v1571
        %1634 = vmatpush.msra.mxu0 %v1569
        %1635 = vmatpush.msra.mxu0 %v1567
        %1636 = vmatpush.msra.mxu0 %v1565
        %1637 = vmatmul.f32.gmra.mxu0 %v1562
        %v1638 = vpop.f32.mrf.mxu0
        %v1639 = vadd.f32 %v1597, %v1638
        %1640 = vmatmul.f32.gmra.mxu0 %v1563
        %v1641 = vpop.f32.mrf.mxu0
        %v1642 = vadd.f32 %v1597, %v1641
        %1643 = vdwg.mxu0
        %v1644 = vmul.f32 %v1616, 0.5
        %v1645 = vmul.f32 %v1639, 0.5
        %v1646 = vmul.f32 %v1619, 0.5
        %v1647 = vmul.f32 %v1642, 0.5
        %v1648 = vmul.f32 %v1616, 0.70710677
        %v1649 = vmul.f32 %v1639, 0.70710677
        %v1650 = vmul.f32 %v1619, 0.70710677
        %v1651 = vmul.f32 %v1642, 0.70710677
        %vm1652 = vcmp.ge.f32.partialorder %v1648, 0.0
        %vm1653 = vcmp.ge.f32.partialorder %v1649, 0.0
        %vm1654 = vcmp.ge.f32.partialorder %v1650, 0.0
        %vm1655 = vcmp.ge.f32.partialorder %v1651, 0.0
        %v1656 = vsel %vm1652, 1.0, -1.0
        %v1657 = vsel %vm1653, 1.0, -1.0
        %v1658 = vsel %vm1654, 1.0, -1.0
        %v1659 = vsel %vm1655, 1.0, -1.0
        %v1660 = vand.u32 2147483647, %v1648
        %v1661 = vand.u32 2147483647, %v1649
        %v1662 = vand.u32 2147483647, %v1650
        %v1663 = vand.u32 2147483647, %v1651
        %v1664 = vmul.f32 %v1660, 0.3275911
        %v1665 = vmul.f32 %v1661, 0.3275911
        %v1666 = vmul.f32 %v1662, 0.3275911
        %v1667 = vmul.f32 %v1663, 0.3275911
        %v1668 = vadd.f32 %v1664, 1.0
        %v1669 = vadd.f32 %v1665, 1.0
        %v1670 = vadd.f32 %v1666, 1.0
        %v1671 = vadd.f32 %v1667, 1.0
        %v1672 = vrcp.pop %v1668
        %v1673 = vmul.f32 %v1668, %v1672
        %v1674 = vsub.f32 1.0, %v1673
        %v1675 = vmul.f32 %v1672, %v1674
        %v1676 = vadd.f32 %v1672, %v1675
        %vm1677 = vweird.f32 %v1668
        %vm1678 = vweird.f32 %v1672
        %vm1679 = vmor %vm1677, %vm1678
        %v1680 = vsel %vm1679, %v1672, %v1676
        %v1681 = vand.u32 2147483647, %v1668
        %vm1682 = vcmp.eq.f32.partialorder %v1681, 8.507059e+37
        %v1683 = vand.u32 %v1668, 2147483648
        %v1684 = vor.u32 1.1754944e-38, %v1683
        %v1685 = vsel %vm1682, %v1684, %v1680
        %v1686 = vmul.f32 1.0, %v1685
        %v1687 = vrcp.pop %v1669
        %v1688 = vmul.f32 %v1669, %v1687
        %v1689 = vsub.f32 1.0, %v1688
        %v1690 = vmul.f32 %v1687, %v1689
        %v1691 = vadd.f32 %v1687, %v1690
        %vm1692 = vweird.f32 %v1669
        %vm1693 = vweird.f32 %v1687
        %vm1694 = vmor %vm1692, %vm1693
        %v1695 = vsel %vm1694, %v1687, %v1691
        %v1696 = vand.u32 2147483647, %v1669
        %vm1697 = vcmp.eq.f32.partialorder %v1696, 8.507059e+37
        %v1698 = vand.u32 %v1669, 2147483648
        %v1699 = vor.u32 1.1754944e-38, %v1698
        %v1700 = vsel %vm1697, %v1699, %v1695
        %v1701 = vmul.f32 1.0, %v1700
        %v1702 = vrcp.pop %v1670
        %v1703 = vmul.f32 %v1670, %v1702
        %v1704 = vsub.f32 1.0, %v1703
        %v1705 = vmul.f32 %v1702, %v1704
        %v1706 = vadd.f32 %v1702, %v1705
        %vm1707 = vweird.f32 %v1670
        %vm1708 = vweird.f32 %v1702
        %vm1709 = vmor %vm1707, %vm1708
        %v1710 = vsel %vm1709, %v1702, %v1706
        %v1711 = vand.u32 2147483647, %v1670
        %vm1712 = vcmp.eq.f32.partialorder %v1711, 8.507059e+37
        %v1713 = vand.u32 %v1670, 2147483648
        %v1714 = vor.u32 1.1754944e-38, %v1713
        %v1715 = vsel %vm1712, %v1714, %v1710
        %v1716 = vmul.f32 1.0, %v1715
        %v1717 = vrcp.pop %v1671
        %v1718 = vmul.f32 %v1671, %v1717
        %v1719 = vsub.f32 1.0, %v1718
        %v1720 = vmul.f32 %v1717, %v1719
        %v1721 = vadd.f32 %v1717, %v1720
        %vm1722 = vweird.f32 %v1671
        %vm1723 = vweird.f32 %v1717
        %vm1724 = vmor %vm1722, %vm1723
        %v1725 = vsel %vm1724, %v1717, %v1721
        %v1726 = vand.u32 2147483647, %v1671
        %vm1727 = vcmp.eq.f32.partialorder %v1726, 8.507059e+37
        %v1728 = vand.u32 %v1671, 2147483648
        %v1729 = vor.u32 1.1754944e-38, %v1728
        %v1730 = vsel %vm1727, %v1729, %v1725
        %v1731 = vmul.f32 1.0, %v1730
        %v1732 = vmul.f32 %v1686, 1.0614054
        %v1733 = vmul.f32 %v1701, 1.0614054
        %v1734 = vmul.f32 %v1716, 1.0614054
        %v1735 = vmul.f32 %v1731, 1.0614054
        %v1736 = vadd.f32 %v1732, -1.4531521
        %v1737 = vadd.f32 %v1733, -1.4531521
        %v1738 = vadd.f32 %v1734, -1.4531521
        %v1739 = vadd.f32 %v1735, -1.4531521
        %v1740 = vmul.f32 %v1736, %v1686
        %v1741 = vmul.f32 %v1737, %v1701
        %v1742 = vmul.f32 %v1738, %v1716
        %v1743 = vmul.f32 %v1739, %v1731
        %v1744 = vadd.f32 %v1740, 1.4214138
        %v1745 = vadd.f32 %v1741, 1.4214138
        %v1746 = vadd.f32 %v1742, 1.4214138
        %v1747 = vadd.f32 %v1743, 1.4214138
        %v1748 = vmul.f32 %v1744, %v1686
        %v1749 = vmul.f32 %v1745, %v1701
        %v1750 = vmul.f32 %v1746, %v1716
        %v1751 = vmul.f32 %v1747, %v1731
        %v1752 = vadd.f32 %v1748, -0.28449672
        %v1753 = vadd.f32 %v1749, -0.28449672
        %v1754 = vadd.f32 %v1750, -0.28449672
        %v1755 = vadd.f32 %v1751, -0.28449672
        %v1756 = vmul.f32 %v1752, %v1686
        %v1757 = vmul.f32 %v1753, %v1701
        %v1758 = vmul.f32 %v1754, %v1716
        %v1759 = vmul.f32 %v1755, %v1731
        %v1760 = vadd.f32 %v1756, 0.2548296
        %v1761 = vadd.f32 %v1757, 0.2548296
        %v1762 = vadd.f32 %v1758, 0.2548296
        %v1763 = vadd.f32 %v1759, 0.2548296
        %v1764 = vmul.f32 %v1760, %v1686
        %v1765 = vmul.f32 %v1761, %v1701
        %v1766 = vmul.f32 %v1762, %v1716
        %v1767 = vmul.f32 %v1763, %v1731
        %v1768 = vsub.f32 0.0, %v1660
        %v1769 = vsub.f32 0.0, %v1661
        %v1770 = vsub.f32 0.0, %v1662
        %v1771 = vsub.f32 0.0, %v1663
        %v1772 = vmul.f32 %v1768, %v1660
        %v1773 = vmul.f32 %v1769, %v1661
        %v1774 = vmul.f32 %v1770, %v1662
        %v1775 = vmul.f32 %v1771, %v1663
        %v1776 = vmul.f32 %v1772, 1.442695
        %v1777 = vpow.pop %v1776
        %v1778 = vmul.f32 %v1773, 1.442695
        %v1779 = vpow.pop %v1778
        %v1780 = vmul.f32 %v1774, 1.442695
        %v1781 = vpow.pop %v1780
        %v1782 = vmul.f32 %v1775, 1.442695
        %v1783 = vpow.pop %v1782
        %v1784 = vmul.f32 %v1764, %v1777
        %v1785 = vmul.f32 %v1765, %v1779
        %v1786 = vmul.f32 %v1766, %v1781
        %v1787 = vmul.f32 %v1767, %v1783
        %v1788 = vsub.f32 1.0, %v1784
        %v1789 = vsub.f32 1.0, %v1785
        %v1790 = vsub.f32 1.0, %v1786
        %v1791 = vsub.f32 1.0, %v1787
        %v1792 = vmul.f32 %v1656, %v1788
        %v1793 = vmul.f32 %v1657, %v1789
        %v1794 = vmul.f32 %v1658, %v1790
        %v1795 = vmul.f32 %v1659, %v1791
        %v1796 = vadd.f32 %v1792, 1.0
        %v1797 = vadd.f32 %v1793, 1.0
        %v1798 = vadd.f32 %v1794, 1.0
        %v1799 = vadd.f32 %v1795, 1.0
        %v1800 = vmul.f32 %v1644, %v1796
        %v1801 = vmul.f32 %v1645, %v1797
        %v1802 = vmul.f32 %v1646, %v1798
        %v1803 = vmul.f32 %v1647, %v1799
        %v1804 = vld [vmem:[%s437] sm:$0xff]
        %v1805 = vld [vmem:[%s437 + $0x8] sm:$0xff]
        %v1806 = vld [vmem:[%s437 + $0x10] sm:$0xff]
        %v1807 = vld [vmem:[%s437 + $0x18] sm:$0xff]
        %v1808 = vld [vmem:[%s437 + $0x20] sm:$0xff]
        %v1809 = vld [vmem:[%s437 + $0x28] sm:$0xff]
        %v1810 = vld [vmem:[%s437 + $0x30] sm:$0xff]
        %v1811 = vld [vmem:[%s437 + $0x38] sm:$0xff]
        %v1812 = vld [vmem:[%s437 + $0x40] sm:$0xff]
        %v1813 = vld [vmem:[%s437 + $0x48] sm:$0xff]
        %v1814 = vld [vmem:[%s437 + $0x50] sm:$0xff]
        %v1815 = vld [vmem:[%s437 + $0x58] sm:$0xff]
        %v1816 = vld [vmem:[%s437 + $0x60] sm:$0xff]
        %v1817 = vld [vmem:[%s437 + $0x68] sm:$0xff]
        %v1818 = vld [vmem:[%s437 + $0x70] sm:$0xff]
        %v1819 = vld [vmem:[%s437 + $0x78] sm:$0xff]
        %v1820 = vld [vmem:[%s437 + $0x80] sm:$0xff]
        %v1821 = vld [vmem:[%s437 + $0x88] sm:$0xff]
        %v1822 = vld [vmem:[%s437 + $0x90] sm:$0xff]
        %v1823 = vld [vmem:[%s437 + $0x98] sm:$0xff]
        %v1824 = vld [vmem:[%s437 + $0xa0] sm:$0xff]
        %v1825 = vld [vmem:[%s437 + $0xa8] sm:$0xff]
        %v1826 = vld [vmem:[%s437 + $0xb0] sm:$0xff]
        %v1827 = vld [vmem:[%s437 + $0xb8] sm:$0xff]
        %v1828 = vld [vmem:[%s437 + $0xc0] sm:$0xff]
        %v1829 = vld [vmem:[%s437 + $0xc8] sm:$0xff]
        %v1830 = vld [vmem:[%s437 + $0xd0] sm:$0xff]
        %v1831 = vld [vmem:[%s437 + $0xd8] sm:$0xff]
        %v1832 = vld [vmem:[%s437 + $0xe0] sm:$0xff]
        %v1833 = vld [vmem:[%s437 + $0xe8] sm:$0xff]
        %v1834 = vld [vmem:[%s437 + $0xf0] sm:$0xff]
        %v1835 = vld [vmem:[%s437 + $0xf8] sm:$0xff]
        %v1836 = vperm.slane %v455, 5
        %1837 = vmatpush.msra.mxu0 %v1819
        %1838 = vmatpush.msra.mxu0 %v1818
        %1839 = vmatpush.msra.mxu0 %v1817
        %1840 = vmatpush.msra.mxu0 %v1816
        %1841 = vmatpush.msra.mxu0 %v1815
        %1842 = vmatpush.msra.mxu0 %v1814
        %1843 = vmatpush.msra.mxu0 %v1813
        %1844 = vmatpush.msra.mxu0 %v1812
        %1845 = vmatpush.msra.mxu0 %v1811
        %1846 = vmatpush.msra.mxu0 %v1810
        %1847 = vmatpush.msra.mxu0 %v1809
        %1848 = vmatpush.msra.mxu0 %v1808
        %1849 = vmatpush.msra.mxu0 %v1807
        %1850 = vmatpush.msra.mxu0 %v1806
        %1851 = vmatpush.msra.mxu0 %v1805
        %1852 = vmatpush.msra.mxu0 %v1804
        %1853 = vmatmul.f32.gmra.mxu0 %v1800
        %v1854 = vpop.f32.mrf.mxu0
        %v1855 = vadd.f32 %v1836, %v1854
        %1856 = vmatmul.f32.gmra.mxu0 %v1802
        %v1857 = vpop.f32.mrf.mxu0
        %v1858 = vadd.f32 %v1836, %v1857
        %1859 = vdwg.mxu0
        %1860 = vmatpush.msra.mxu0 %v1835
        %1861 = vmatpush.msra.mxu0 %v1834
        %1862 = vmatpush.msra.mxu0 %v1833
        %1863 = vmatpush.msra.mxu0 %v1832
        %1864 = vmatpush.msra.mxu0 %v1831
        %1865 = vmatpush.msra.mxu0 %v1830
        %1866 = vmatpush.msra.mxu0 %v1829
        %1867 = vmatpush.msra.mxu0 %v1828
        %1868 = vmatpush.msra.mxu0 %v1827
        %1869 = vmatpush.msra.mxu0 %v1826
        %1870 = vmatpush.msra.mxu0 %v1825
        %1871 = vmatpush.msra.mxu0 %v1824
        %1872 = vmatpush.msra.mxu0 %v1823
        %1873 = vmatpush.msra.mxu0 %v1822
        %1874 = vmatpush.msra.mxu0 %v1821
        %1875 = vmatpush.msra.mxu0 %v1820
        %1876 = vmatmul.f32.gmra.mxu0 %v1801
        %v1877 = vpop.f32.mrf.mxu0
        %v1878 = vadd.f32 %v1855, %v1877
        %1879 = vmatmul.f32.gmra.mxu0 %v1803
        %v1880 = vpop.f32.mrf.mxu0
        %v1881 = vadd.f32 %v1858, %v1880
        %1882 = vdwg.mxu0
        %v1883 = vadd.f32 %v1878, %v1516
        %v1884 = vadd.f32 %v1881, %v1517
        %1885 = vst [vmem:[#allocation2] sm:$0xff] %v1883
        %1886 = vst [vmem:[#allocation2 + $0x8] sm:$0xff] %v1884
        %p1887 = scmp.eq.s32.totalorder %s22, 1
        // Predicated region
        $region65: #{vit_forward.3} parent=59 // pred_check
          %p1888 = pneg %p1887
        $region66: #{vit_forward.3} parent=59 // pred_check_branch
          %1890 = sbr.rel (%p1888) target = $region68
        $region67: #{vit_forward.3} parent=59 // pred_region
          %v1891 = vld [vmem:[%s8] sm:$0xff]
          %vm1892 = vcmask 1040384
          %v1893 = vsel %vm1892, %v1883, 0.0
          %1894 = vadd.xlane.f32.xlu0 %v1893
          %v1895 = vpop.xlane.xlu0 %1894
          %v1896 = vmul.f32 %v1895, %v467
          %v1897 = vsub.f32 %v1883, %v1896
          %v1898 = vmul.f32 %v1897, %v1897
          %v1899 = vsel %vm1892, %v1898, 0.0
          %1900 = vadd.xlane.f32.xlu0 %v1899
          %v1901 = vpop.xlane.xlu0 %1900
          %v1902 = vmul.f32 %v1901, %v467
          %v1903 = vadd.f32 %v1902, 1e-06
          %v1904 = vrsqrt.pop %v1903
          %v1905 = vmul.f32 %v1904, %v1903
          %v1906 = vmul.f32 %v1905, %v1904
          %v1907 = vmul.f32 0.5, %v1906
          %v1908 = vsub.f32 1.5, %v1907
          %v1909 = vmul.f32 %v1904, %v1908
          %vm1910 = vweird.f32 %v1903
          %vm1911 = vweird.f32 %v1904
          %vm1912 = vmor %vm1910, %vm1911
          %v1913 = vsel %vm1912, %v1904, %v1909
          %v1914 = vmul.f32 %v1897, %v1913
          %v1915 = vmul.f32 %v1914, %v1891
          %v1917 = vrot.slane %v1891, 1
          %v1919 = vadd.f32 %v1915, %v1917
          %v1920 = vld [vmem:[%s9] sm:$0xff]
          %v1921 = vld [vmem:[%s9 + $0x8] sm:$0xff]
          %v1922 = vld [vmem:[%s9 + $0x10] sm:$0xff]
          %v1923 = vld [vmem:[%s9 + $0x18] sm:$0xff]
          %v1924 = vld [vmem:[%s9 + $0x20] sm:$0xff]
          %v1925 = vld [vmem:[%s9 + $0x28] sm:$0xff]
          %v1926 = vld [vmem:[%s9 + $0x30] sm:$0xff]
          %v1927 = vld [vmem:[%s9 + $0x38] sm:$0xff]
          %v1928 = vld [vmem:[%s9 + $0x40] sm:$0xff]
          %v1929 = vld [vmem:[%s9 + $0x48] sm:$0xff]
          %v1930 = vld [vmem:[%s9 + $0x50] sm:$0xff]
          %v1931 = vld [vmem:[%s9 + $0x58] sm:$0xff]
          %v1932 = vld [vmem:[%s9 + $0x60] sm:$0xff]
          %v1933 = vld [vmem:[%s9 + $0x68] sm:$0xff]
          %v1934 = vld [vmem:[%s9 + $0x70] sm:$0xff]
          %v1935 = vld [vmem:[%s9 + $0x78] sm:$0xff]
          %v1936 = vrot.slane %v1891, 2
          %1938 = vmatpush.msra.mxu0 %v1935
          %1939 = vmatpush.msra.mxu0 %v1934
          %1940 = vmatpush.msra.mxu0 %v1933
          %1941 = vmatpush.msra.mxu0 %v1932
          %1942 = vmatpush.msra.mxu0 %v1931
          %1943 = vmatpush.msra.mxu0 %v1930
          %1944 = vmatpush.msra.mxu0 %v1929
          %1945 = vmatpush.msra.mxu0 %v1928
          %1946 = vmatpush.msra.mxu0 %v1927
          %1947 = vmatpush.msra.mxu0 %v1926
          %1948 = vmatpush.msra.mxu0 %v1925
          %1949 = vmatpush.msra.mxu0 %v1924
          %1950 = vmatpush.msra.mxu0 %v1923
          %1951 = vmatpush.msra.mxu0 %v1922
          %1952 = vmatpush.msra.mxu0 %v1921
          %1953 = vmatpush.msra.mxu0 %v1920
          %1954 = vmatmul.f32.gmra.mxu0 %v1919
          %v1955 = vpop.f32.mrf.mxu0
          %v1956 = vadd.f32 %v1936, %v1955
          %1957 = vdwg.mxu0
          %1958 = vst [vmem:[#allocation3] sm:$0x1] %v1956
          %v1959 = vsel %vm1892, %v1884, 0.0
          %1960 = vadd.xlane.f32.xlu0 %v1959
          %v1961 = vpop.xlane.xlu0 %1960
          %v1962 = vmul.f32 %v1961, %v467
          %v1963 = vsub.f32 %v1884, %v1962
          %v1964 = vmul.f32 %v1963, %v1963
          %v1965 = vsel %vm1892, %v1964, 0.0
          %1966 = vadd.xlane.f32.xlu0 %v1965
          %v1967 = vpop.xlane.xlu0 %1966
          %v1968 = vmul.f32 %v1967, %v467
          %v1969 = vadd.f32 %v1968, 1e-06
          %v1970 = vrsqrt.pop %v1969
          %v1971 = vmul.f32 %v1970, %v1969
          %v1972 = vmul.f32 %v1971, %v1970
          %v1973 = vmul.f32 0.5, %v1972
          %v1974 = vsub.f32 1.5, %v1973
          %v1975 = vmul.f32 %v1970, %v1974
          %vm1976 = vweird.f32 %v1969
          %vm1977 = vweird.f32 %v1970
          %vm1978 = vmor %vm1976, %vm1977
          %v1979 = vsel %vm1978, %v1970, %v1975
          %v1980 = vmul.f32 %v1963, %v1979
          %v1981 = vmul.f32 %v1980, %v1891
          %v1982 = vadd.f32 %v1981, %v1917
          %v1983 = vld [vmem:[%s9] sm:$0xff]
          %v1984 = vld [vmem:[%s9 + $0x8] sm:$0xff]
          %v1985 = vld [vmem:[%s9 + $0x10] sm:$0xff]
          %v1986 = vld [vmem:[%s9 + $0x18] sm:$0xff]
          %v1987 = vld [vmem:[%s9 + $0x20] sm:$0xff]
          %v1988 = vld [vmem:[%s9 + $0x28] sm:$0xff]
          %v1989 = vld [vmem:[%s9 + $0x30] sm:$0xff]
          %v1990 = vld [vmem:[%s9 + $0x38] sm:$0xff]
          %v1991 = vld [vmem:[%s9 + $0x40] sm:$0xff]
          %v1992 = vld [vmem:[%s9 + $0x48] sm:$0xff]
          %v1993 = vld [vmem:[%s9 + $0x50] sm:$0xff]
          %v1994 = vld [vmem:[%s9 + $0x58] sm:$0xff]
          %v1995 = vld [vmem:[%s9 + $0x60] sm:$0xff]
          %v1996 = vld [vmem:[%s9 + $0x68] sm:$0xff]
          %v1997 = vld [vmem:[%s9 + $0x70] sm:$0xff]
          %v1998 = vld [vmem:[%s9 + $0x78] sm:$0xff]
          %1999 = vmatpush.msra.mxu0 %v1998
          %2000 = vmatpush.msra.mxu0 %v1997
          %2001 = vmatpush.msra.mxu0 %v1996
          %2002 = vmatpush.msra.mxu0 %v1995
          %2003 = vmatpush.msra.mxu0 %v1994
          %2004 = vmatpush.msra.mxu0 %v1993
          %2005 = vmatpush.msra.mxu0 %v1992
          %2006 = vmatpush.msra.mxu0 %v1991
          %2007 = vmatpush.msra.mxu0 %v1990
          %2008 = vmatpush.msra.mxu0 %v1989
          %2009 = vmatpush.msra.mxu0 %v1988
          %2010 = vmatpush.msra.mxu0 %v1987
          %2011 = vmatpush.msra.mxu0 %v1986
          %2012 = vmatpush.msra.mxu0 %v1985
          %2013 = vmatpush.msra.mxu0 %v1984
          %2014 = vmatpush.msra.mxu0 %v1983
          %2015 = vmatmul.f32.gmra.mxu0 %v1982
          %v2016 = vpop.f32.mrf.mxu0
          %v2017 = vadd.f32 %v1936, %v2016
          %2018 = vdwg.mxu0
          %2019 = vst [vmem:[#allocation3 + $0x1] sm:$0x1] %v2017
        $region68: #{vit_forward.3} parent=59 // pred_fallthru
          _
        // Predicated region
        $region69: #{vit_forward.3} parent=59 // pred_check
          %p2020 = pneg %p275
        $region70: #{vit_forward.3} parent=59 // pred_check_branch
          %2022 = sbr.rel (%p2020) target = $region72
        $region71: #{vit_forward.3} parent=59 // pred_region
          %2024 = vsyncadd [#allocation4], 0
          %s2026 = sshll.u32 [#allocation3], 4
          %s2027 = int_to_ptr.vmem [resolvable:$true] %s2026
          %s2028 = sshll.u32 %s10, 4
          %s2029 = int_to_ptr.hbm [resolvable:$true] %s2028
          %2031 = dma.vmem_to_hbm [thread:$0]  %s2027, 32, %s2029, [#allocation4]
        $region72: #{vit_forward.3} parent=59 // pred_fallthru
          _
        // Predicated region
        $region73: #{vit_forward.3} parent=59 // pred_check
          %p2032 = pneg %p275
        $region74: #{vit_forward.3} parent=59 // pred_check_branch
          %2034 = sbr.rel (%p2032) target = $region76
        $region75: #{vit_forward.3} parent=59 // pred_region
          %2036 = dma.done [#allocation4], 32
        $region76: #{vit_forward.3} parent=59 // pred_fallthru
          _
      $region60: #{vit_forward.3} parent=5 // pred_fallthru
        _
      %p2037 = scmp.le.s32.totalorder 2, %s17
      // Predicated region
      $region77: #{vit_forward.3} parent=5 // pred_check
        %p2038 = pneg %p2037
      $region78: #{vit_forward.3} parent=5 // pred_check_branch
        %2040 = sbr.rel (%p2038) target = $region80
      $region79: #{vit_forward.3} parent=5 // pred_region
        %s2041 = ssub.s32 %s17, 2
      $region80: #{vit_forward.3} parent=5 // pred_fallthru
        _
    $region6: #{vit_forward.3} parent=1 // loop_footer
      %s21 = sadd.s32 1, %s17
    $region7: #{vit_forward.3} parent=1 // loop_footer_branch
      %16 = sbr.rel target = $region3
    $region8: #{vit_forward.3} parent=1 // loop_exit
      _
    %2042 = vsyncpa [#allocation4], 1
    %s2043 = scalar_lea.sflag [#allocation4], 1
    %2044 = vsyncpa %s2043, 1

</llo_original>
